<compile_context>
chip_gen: v7x
topology: tpu7x:2x2x1
jax: 0.10.0
libtpu: 0.0.40
codegen_flags: <defaults>
</compile_context>

<pallas_src>
import jax
import jax.numpy as jnp
from jax.experimental import pallas as pl
from jax.experimental.pallas import tpu as pltpu

LN_EPS = 1e-5   # torch.nn.LayerNorm default eps
LANE = 128
SUBLANE_BF16 = 16


def _round_up(x, m):
    return ((x + m - 1) // m) * m


def _vmem_cap_bytes():
    """~80% of this generation's physical VMEM; safe fallback if query fails."""
    try:
        phys = int(pltpu.get_tpu_info().vmem_capacity_bytes)
        return (phys * 4) // 5              # v7x: ~51 MiB, v5e/v6e: ~102 MiB
    except Exception:
        return 48 << 20                     # safe on every generation


def _make_mlp_kernel(num_hidden_layers: int, hidden_dim: int, hidden_pad: int):
    """Fused kernel: num_hidden_layers * (Linear + LayerNorm + ReLU) + Linear.

    hidden_dim : true LayerNorm width (torch semantics)
    hidden_pad : lane-padded width seen by the kernel
    """
    need_mask = hidden_pad != hidden_dim
    inv_n = 1.0 / float(hidden_dim)

    def kernel(*refs):
        # refs = x, w_0..w_{L-1}, [ln_vecs], w_out, b_out, out
        x_ref = refs[0]
        out_ref = refs[-1]
        w_out_ref = refs[-3]
        b_out_ref = refs[-2]
        w_refs = refs[1:1 + num_hidden_layers]
        vecs_ref = refs[1 + num_hidden_layers] if num_hidden_layers else None

        # Hoisted once (layer loop is unrolled at trace time; JAX does not CSE
        # the iota, so do NOT re-emit it per layer).
        if need_mask and num_hidden_layers:
            lane = jax.lax.broadcasted_iota(jnp.int32, (1, hidden_pad), 1)
            mask = (lane < hidden_dim).astype(jnp.float32)

        h = x_ref[...]                                      # bf16 (bm, in_pad)
        for layer in range(num_hidden_layers):
            w_ref = w_refs[layer]
            b = vecs_ref[3 * layer + 0: 3 * layer + 1, :]   # (1, hid_pad) f32
            g = vecs_ref[3 * layer + 1: 3 * layer + 2, :]
            beta = vecs_ref[3 * layer + 2: 3 * layer + 3, :]

            # Linear: bf16 x bf16 on the MXU, f32 accumulate, f32 bias add.
            z = jnp.dot(h, w_ref[...], preferred_element_type=jnp.float32) + b

            # LayerNorm over the TRUE hidden_dim. Padded lanes of z are exact
            # zeros (zero-padded weights + zero-padded bias), so the raw sum is
            # already correct; only the centered square needs the lane mask.
            mu = jnp.sum(z, axis=-1, keepdims=True) * inv_n
            d = z - mu
            d_sq = d * mask if need_mask else d
            var = jnp.sum(d_sq * d, axis=-1, keepdims=True) * inv_n
            zn = d * jax.lax.rsqrt(var + LN_EPS)
            # Affine: padded gamma/beta are 0, so padded lanes return to 0.
            zn = zn * g + beta
            # ReLU, back to bf16 for the next MXU op.
            h = jnp.maximum(zn, 0.0).astype(jnp.bfloat16)

        y = (jnp.dot(h, w_out_ref[...], preferred_element_type=jnp.float32)
             + b_out_ref[...])
        out_ref[...] = y.astype(out_ref.dtype)

    return kernel


def prepare_dense_decoder_params(params, *, in_dim, out_dim, hidden_layers):
    """One-time padding + bf16 cast of the parameters (hoisted out of forward).

    params: flat list [w1,b1,g1,be1, ..., w_out, b_out]
            weights as (fan_in, fan_out) (torch weight transposed),
            LN params with their TRUE width (not pre-padded).
    Returns (arrays, meta) to pass to dense_decoder_forward.
    """
    hidden_dim = params[0].shape[1] if hidden_layers > 0 else in_dim
    in_pad = _round_up(in_dim, LANE)
    hid_pad = _round_up(hidden_dim, LANE)
    out_pad = _round_up(out_dim, LANE)

    weights = []
    vec_rows = []
    dim_t, dim_p = in_dim, in_pad
    for layer in range(hidden_layers):
        w, b, g, be = params[4 * layer: 4 * layer + 4]
        assert w.shape == (dim_t, hidden_dim)
        # Zero-pad invariant relies on LN params having the TRUE width.
        assert g.shape[-1] == hidden_dim and be.shape[-1] == hidden_dim
        w_p = jnp.zeros((dim_p, hid_pad), jnp.bfloat16)
        w_p = w_p.at[:dim_t, :hidden_dim].set(w.astype(jnp.bfloat16))
        weights.append(w_p)
        for v in (b, g, be):
            row = jnp.zeros((1, hid_pad), jnp.float32)
            row = row.at[:, :hidden_dim].set(
                jnp.asarray(v, jnp.float32).reshape(1, -1))
            vec_rows.append(row)
        dim_t, dim_p = hidden_dim, hid_pad

    w_out, b_out = params[4 * hidden_layers], params[4 * hidden_layers + 1]
    w_out_p = jnp.zeros((dim_p, out_pad), jnp.bfloat16)
    w_out_p = w_out_p.at[:dim_t, :out_dim].set(w_out.astype(jnp.bfloat16))
    b_out_p = jnp.zeros((1, out_pad), jnp.float32)
    b_out_p = b_out_p.at[:, :out_dim].set(
        jnp.asarray(b_out, jnp.float32).reshape(1, -1))

    if hidden_layers > 0:
        vecs = jnp.concatenate(vec_rows, axis=0)            # (3*L, hid_pad)
        rows_pad = _round_up(vecs.shape[0], 8)
        if rows_pad != vecs.shape[0]:
            vecs = jnp.pad(vecs, ((0, rows_pad - vecs.shape[0]), (0, 0)))
        arrays = tuple(weights) + (vecs, w_out_p, b_out_p)
    else:
        arrays = (w_out_p, b_out_p)

    arrays = tuple(jax.block_until_ready(a) for a in arrays)
    meta = dict(in_dim=in_dim, out_dim=out_dim, hidden_dim=hidden_dim,
                hidden_layers=hidden_layers,
                in_pad=in_pad, hid_pad=hid_pad, out_pad=out_pad)
    return arrays, meta


def dense_decoder_forward(features, prepped, *, bm=256):
    """Pallas forward pass of DenseDecoder.

    features : (B, in_dim) float32
    prepped  : output of prepare_dense_decoder_params (called once at init)
    """
    arrays, meta = prepped
    B, in_dim = features.shape
    assert in_dim == meta["in_dim"]
    in_pad, hid_pad, out_pad = meta["in_pad"], meta["hid_pad"], meta["out_pad"]
    hidden_layers, hidden_dim = meta["hidden_layers"], meta["hidden_dim"]
    out_dim = meta["out_dim"]

    # Row tile: 16-sublane aligned (bf16 input), never larger than the batch,
    # and split into >=2 "parallel" grid steps when possible (v7x megacore;
    # ~0.35us/step overhead is negligible at these tile sizes).
    b_sub = _round_up(B, SUBLANE_BF16)
    bm_eff = min(_round_up(bm, SUBLANE_BF16), b_sub)
    if bm_eff >= b_sub and b_sub >= 2 * SUBLANE_BF16:
        bm_eff = _round_up(b_sub // 2, SUBLANE_BF16)
    B_pad = _round_up(B, bm_eff)
    n_steps = B_pad // bm_eff

    # Only per-call data prep: pad + bf16-cast the activations.
    x = jnp.zeros((B_pad, in_pad), jnp.bfloat16)
    x = x.at[:B, :in_dim].set(features.astype(jnp.bfloat16))

    kernel = _make_mlp_kernel(hidden_layers, hidden_dim, hid_pad)
    out_block = pl.BlockSpec((bm_eff, out_pad), lambda i: (i, 0))

    # VMEM budget: single-buffered resident params + double-buffered I/O tiles
    # + activation headroom, capped below this generation's physical VMEM.
    param_bytes = sum(a.size * a.dtype.itemsize for a in arrays)
    io_bytes = 2 * (bm_eff * in_pad * 2 + bm_eff * out_pad * 4)
    act_bytes = 8 * bm_eff * max(in_pad, hid_pad, out_pad) * 4
    cap = _vmem_cap_bytes()

    def _call(single_buffer_params):
        in_specs = [pl.BlockSpec((bm_eff, in_pad), lambda i: (i, 0))]
        for arr in arrays:
            r, c = arr.shape
            if single_buffer_params:
                # Constant index_map -> no benefit from double buffering.
                in_specs.append(pl.BlockSpec((r, c), lambda i: (0, 0),
                                             pipeline_mode=pl.Buffered(1)))
            else:
                in_specs.append(pl.BlockSpec((r, c), lambda i: (0, 0)))
        pbytes = param_bytes if single_buffer_params else 2 * param_bytes
        vmem_limit = int(min(max(pbytes + io_bytes + act_bytes + (4 << 20),
                                 16 << 20), cap))
        return pl.pallas_call(
            kernel,
            out_shape=jax.ShapeDtypeStruct((B_pad, out_pad), jnp.float32),
            grid_spec=pltpu.PrefetchScalarGridSpec(
                num_scalar_prefetch=0,
                grid=(n_steps,),
                in_specs=in_specs,
                out_specs=out_block,
            ),
            compiler_params=pltpu.CompilerParams(
                dimension_semantics=("parallel",),
                vmem_limit_bytes=vmem_limit),
        )(x, *arrays)

    try:
        y = _call(True)
    except Exception:
        # pipeline_mode=pl.Buffered(1) unsupported on this jax version:
        # fall back to default (double-buffered) parameter blocks.
        y = _call(False)

    # NOTE: out_pad (=128) vs out_dim inflates the output slab; kept f32 and
    # lane-dense to preserve the torch module's output dtype + unmasked vst.
    return y[:B, :out_dim]


def init_dense_decoder_params(key, in_dim, out_dim, hidden_dim, hidden_layers):
    """Deterministic synthetic parameters (shapes match the torch module)."""
    params = []
    dim = in_dim
    for _ in range(hidden_layers):
        key, kw, kb = jax.random.split(key, 3)
        bound = 1.0 / jnp.sqrt(dim)
        w = jax.random.uniform(kw, (dim, hidden_dim), jnp.float32, -bound, bound)
        b = jax.random.uniform(kb, (1, hidden_dim), jnp.float32, -bound, bound)
        ln_g = jnp.ones((1, hidden_dim), jnp.float32)
        ln_b = jnp.zeros((1, hidden_dim), jnp.float32)
        params += [w, b, ln_g, ln_b]
        dim = hidden_dim
    key, kw, kb = jax.random.split(key, 3)
    bound = 1.0 / jnp.sqrt(dim)
    w_out = jax.random.uniform(kw, (dim, out_dim), jnp.float32, -bound, bound)
    b_out = jax.random.uniform(kb, (1, out_dim), jnp.float32, -bound, bound)
    params += [w_out, b_out]
    return params


def reference_forward(features, params, hidden_layers):
    """Pure-JAX reference mirroring the kernel numerics (bf16 matmul operands,
    f32 accumulate / LayerNorm) and torch MLP semantics."""
    h = features.astype(jnp.float32)
    for layer in range(hidden_layers):
        w, b, g, be = params[4 * layer: 4 * layer + 4]
        h = jnp.dot(h.astype(jnp.bfloat16), w.astype(jnp.bfloat16),
                    preferred_element_type=jnp.float32) + b
        mu = jnp.mean(h, axis=-1, keepdims=True)
        var = jnp.mean((h - mu) ** 2, axis=-1, keepdims=True)
        h = (h - mu) * jax.lax.rsqrt(var + LN_EPS)
        h = h * g + be
        h = jnp.maximum(h, 0.0)
    w_out, b_out = params[4 * hidden_layers], params[4 * hidden_layers + 1]
    return jnp.dot(h.astype(jnp.bfloat16), w_out.astype(jnp.bfloat16),
                   preferred_element_type=jnp.float32) + b_out


# TODO(synk): DenseDecoder.loss (SmoothL1Loss) is not part of forward() and is
# not implemented as a kernel.

if __name__ == "__main__":
    B, IN_DIM, OUT_DIM, HIDDEN_DIM, HIDDEN_LAYERS = 256, 32, 16, 64, 2

    key = jax.random.PRNGKey(0)
    key, kx = jax.random.split(key)
    features = jax.random.normal(kx, (B, IN_DIM), jnp.float32)

    params = init_dense_decoder_params(key, IN_DIM, OUT_DIM, HIDDEN_DIM,
                                       HIDDEN_LAYERS)

    # One-time parameter prep (padding + bf16 cast) — NOT in the hot path.
    prepped = prepare_dense_decoder_params(
        params, in_dim=IN_DIM, out_dim=OUT_DIM, hidden_layers=HIDDEN_LAYERS)

    y = dense_decoder_forward(features, prepped, bm=256)
    y = jax.block_until_ready(y)

    y_ref = reference_forward(features, params, HIDDEN_LAYERS)
    assert y.shape == (B, OUT_DIM)
    assert jnp.allclose(y, y_ref, atol=1e-3, rtol=1e-3), "mismatch vs reference"

    print("KERNEL_OK")
</pallas_src>

<mosaic_0001>
module attributes {stable_mosaic.version = 11 : i64} {
  func.func @kernel(%arg0: i32, %arg1: memref<128x128xbf16, #tpu.memory_space<vmem>>, %arg2: memref<128x128xbf16, #tpu.memory_space<vmem>>, %arg3: memref<128x128xbf16, #tpu.memory_space<vmem>>, %arg4: memref<8x128xf32, #tpu.memory_space<vmem>>, %arg5: memref<128x128xbf16, #tpu.memory_space<vmem>>, %arg6: memref<1x128xf32, #tpu.memory_space<vmem>>, %arg7: memref<128x128xf32, #tpu.memory_space<vmem>>) attributes {dimension_semantics = [#tpu.dimension_semantics<parallel>], iteration_bounds = array<i64: 2>, scalar_prefetch = 0 : i64, scratch_operands = 0 : i64, tpu.core_type = #tpu.core_type<tc>, window_params = [{transform_indices = @transform_0, window_bounds = array<i64: 128, 128>}, {pipeline_mode = #tpu.pipeline_mode<synchronous>, transform_indices = @transform_1, window_bounds = array<i64: 128, 128>}, {pipeline_mode = #tpu.pipeline_mode<synchronous>, transform_indices = @transform_2, window_bounds = array<i64: 128, 128>}, {pipeline_mode = #tpu.pipeline_mode<synchronous>, transform_indices = @transform_3, window_bounds = array<i64: 8, 128>}, {pipeline_mode = #tpu.pipeline_mode<synchronous>, transform_indices = @transform_4, window_bounds = array<i64: 128, 128>}, {pipeline_mode = #tpu.pipeline_mode<synchronous>, transform_indices = @transform_5, window_bounds = array<i64: 1, 128>}, {transform_indices = @transform_6, window_bounds = array<i64: 128, 128>}]} {
    %0 = tpu.iota {dimensions = array<i32: 1>} : vector<1x128xi32>
    %c64_i32 = arith.constant 64 : i32
    %1 = vector.broadcast %c64_i32 : i32 to vector<1x128xi32>
    %2 = arith.cmpi slt, %0, %1 : vector<1x128xi32>
    %3 = arith.extui %2 : vector<1x128xi1> to vector<1x128xi32>
    %4 = arith.sitofp %3 : vector<1x128xi32> to vector<1x128xf32>
    %c0 = arith.constant 0 : index
    %c0_0 = arith.constant 0 : index
    %5 = vector.load %arg1[%c0, %c0_0] : memref<128x128xbf16, #tpu.memory_space<vmem>>, vector<128x128xbf16>
    %c0_1 = arith.constant 0 : index
    %c0_2 = arith.constant 0 : index
    %6 = vector.load %arg4[%c0_1, %c0_2] : memref<8x128xf32, #tpu.memory_space<vmem>>, vector<1x128xf32>
    %c1 = arith.constant 1 : index
    %c0_3 = arith.constant 0 : index
    %7 = vector.load %arg4[%c1, %c0_3] : memref<8x128xf32, #tpu.memory_space<vmem>>, vector<1x128xf32>
    %c2 = arith.constant 2 : index
    %c0_4 = arith.constant 0 : index
    %8 = vector.load %arg4[%c2, %c0_4] : memref<8x128xf32, #tpu.memory_space<vmem>>, vector<1x128xf32>
    %c0_5 = arith.constant 0 : index
    %c0_6 = arith.constant 0 : index
    %9 = vector.load %arg2[%c0_5, %c0_6] : memref<128x128xbf16, #tpu.memory_space<vmem>>, vector<128x128xbf16>
    %cst = arith.constant dense<0.000000e+00> : vector<128x128xf32>
    %10 = tpu.matmul %5, %9, %cst {dimension_numbers = #tpu.dot_dimension_numbers<[1], [0], [0], [1], [0, 0, 1, 1], [], []>} : vector<128x128xbf16>, vector<128x128xbf16>, vector<128x128xf32> -> vector<128x128xf32>
    %11 = vector.broadcast %6 : vector<1x128xf32> to vector<128x128xf32>
    %12 = arith.addf %10, %11 : vector<128x128xf32>
    %cst_7 = arith.constant dense<0.000000e+00> : vector<128xf32>
    %13 = vector.multi_reduction <add>, %12, %cst_7 [1] : vector<128x128xf32> to vector<128xf32>
    %14 = vector.shape_cast %13 : vector<128xf32> to vector<128x1xf32>
    %cst_8 = arith.constant 1.562500e-02 : f32
    %15 = vector.broadcast %cst_8 : f32 to vector<128x1xf32>
    %16 = arith.mulf %14, %15 : vector<128x1xf32>
    %17 = vector.broadcast %16 : vector<128x1xf32> to vector<128x128xf32>
    %18 = arith.subf %12, %17 : vector<128x128xf32>
    %19 = vector.broadcast %4 : vector<1x128xf32> to vector<128x128xf32>
    %20 = arith.mulf %18, %19 : vector<128x128xf32>
    %21 = arith.mulf %20, %18 : vector<128x128xf32>
    %cst_9 = arith.constant dense<0.000000e+00> : vector<128xf32>
    %22 = vector.multi_reduction <add>, %21, %cst_9 [1] : vector<128x128xf32> to vector<128xf32>
    %23 = vector.shape_cast %22 : vector<128xf32> to vector<128x1xf32>
    %cst_10 = arith.constant 1.562500e-02 : f32
    %24 = vector.broadcast %cst_10 : f32 to vector<128x1xf32>
    %25 = arith.mulf %23, %24 : vector<128x1xf32>
    %cst_11 = arith.constant 9.99999974E-6 : f32
    %26 = vector.broadcast %cst_11 : f32 to vector<128x1xf32>
    %27 = arith.addf %25, %26 : vector<128x1xf32>
    %28 = math.rsqrt %27 : vector<128x1xf32>
    %29 = vector.broadcast %28 : vector<128x1xf32> to vector<128x128xf32>
    %30 = arith.mulf %18, %29 : vector<128x128xf32>
    %31 = vector.broadcast %7 : vector<1x128xf32> to vector<128x128xf32>
    %32 = arith.mulf %30, %31 : vector<128x128xf32>
    %33 = vector.broadcast %8 : vector<1x128xf32> to vector<128x128xf32>
    %34 = arith.addf %32, %33 : vector<128x128xf32>
    %cst_12 = arith.constant 0.000000e+00 : f32
    %35 = vector.broadcast %cst_12 : f32 to vector<128x128xf32>
    %36 = arith.maximumf %34, %35 : vector<128x128xf32>
    %37 = arith.truncf %36 : vector<128x128xf32> to vector<128x128xbf16>
    %c3 = arith.constant 3 : index
    %c0_13 = arith.constant 0 : index
    %38 = vector.load %arg4[%c3, %c0_13] : memref<8x128xf32, #tpu.memory_space<vmem>>, vector<1x128xf32>
    %c4 = arith.constant 4 : index
    %c0_14 = arith.constant 0 : index
    %39 = vector.load %arg4[%c4, %c0_14] : memref<8x128xf32, #tpu.memory_space<vmem>>, vector<1x128xf32>
    %c5 = arith.constant 5 : index
    %c0_15 = arith.constant 0 : index
    %40 = vector.load %arg4[%c5, %c0_15] : memref<8x128xf32, #tpu.memory_space<vmem>>, vector<1x128xf32>
    %c0_16 = arith.constant 0 : index
    %c0_17 = arith.constant 0 : index
    %41 = vector.load %arg3[%c0_16, %c0_17] : memref<128x128xbf16, #tpu.memory_space<vmem>>, vector<128x128xbf16>
    %cst_18 = arith.constant dense<0.000000e+00> : vector<128x128xf32>
    %42 = tpu.matmul %37, %41, %cst_18 {dimension_numbers = #tpu.dot_dimension_numbers<[1], [0], [0], [1], [0, 0, 1, 1], [], []>} : vector<128x128xbf16>, vector<128x128xbf16>, vector<128x128xf32> -> vector<128x128xf32>
    %43 = vector.broadcast %38 : vector<1x128xf32> to vector<128x128xf32>
    %44 = arith.addf %42, %43 : vector<128x128xf32>
    %cst_19 = arith.constant dense<0.000000e+00> : vector<128xf32>
    %45 = vector.multi_reduction <add>, %44, %cst_19 [1] : vector<128x128xf32> to vector<128xf32>
    %46 = vector.shape_cast %45 : vector<128xf32> to vector<128x1xf32>
    %cst_20 = arith.constant 1.562500e-02 : f32
    %47 = vector.broadcast %cst_20 : f32 to vector<128x1xf32>
    %48 = arith.mulf %46, %47 : vector<128x1xf32>
    %49 = vector.broadcast %48 : vector<128x1xf32> to vector<128x128xf32>
    %50 = arith.subf %44, %49 : vector<128x128xf32>
    %51 = vector.broadcast %4 : vector<1x128xf32> to vector<128x128xf32>
    %52 = arith.mulf %50, %51 : vector<128x128xf32>
    %53 = arith.mulf %52, %50 : vector<128x128xf32>
    %cst_21 = arith.constant dense<0.000000e+00> : vector<128xf32>
    %54 = vector.multi_reduction <add>, %53, %cst_21 [1] : vector<128x128xf32> to vector<128xf32>
    %55 = vector.shape_cast %54 : vector<128xf32> to vector<128x1xf32>
    %cst_22 = arith.constant 1.562500e-02 : f32
    %56 = vector.broadcast %cst_22 : f32 to vector<128x1xf32>
    %57 = arith.mulf %55, %56 : vector<128x1xf32>
    %cst_23 = arith.constant 9.99999974E-6 : f32
    %58 = vector.broadcast %cst_23 : f32 to vector<128x1xf32>
    %59 = arith.addf %57, %58 : vector<128x1xf32>
    %60 = math.rsqrt %59 : vector<128x1xf32>
    %61 = vector.broadcast %60 : vector<128x1xf32> to vector<128x128xf32>
    %62 = arith.mulf %50, %61 : vector<128x128xf32>
    %63 = vector.broadcast %39 : vector<1x128xf32> to vector<128x128xf32>
    %64 = arith.mulf %62, %63 : vector<128x128xf32>
    %65 = vector.broadcast %40 : vector<1x128xf32> to vector<128x128xf32>
    %66 = arith.addf %64, %65 : vector<128x128xf32>
    %cst_24 = arith.constant 0.000000e+00 : f32
    %67 = vector.broadcast %cst_24 : f32 to vector<128x128xf32>
    %68 = arith.maximumf %66, %67 : vector<128x128xf32>
    %69 = arith.truncf %68 : vector<128x128xf32> to vector<128x128xbf16>
    %c0_25 = arith.constant 0 : index
    %c0_26 = arith.constant 0 : index
    %70 = vector.load %arg5[%c0_25, %c0_26] : memref<128x128xbf16, #tpu.memory_space<vmem>>, vector<128x128xbf16>
    %cst_27 = arith.constant dense<0.000000e+00> : vector<128x128xf32>
    %71 = tpu.matmul %69, %70, %cst_27 {dimension_numbers = #tpu.dot_dimension_numbers<[1], [0], [0], [1], [0, 0, 1, 1], [], []>} : vector<128x128xbf16>, vector<128x128xbf16>, vector<128x128xf32> -> vector<128x128xf32>
    %c0_28 = arith.constant 0 : index
    %c0_29 = arith.constant 0 : index
    %72 = vector.load %arg6[%c0_28, %c0_29] : memref<1x128xf32, #tpu.memory_space<vmem>>, vector<1x128xf32>
    %73 = vector.broadcast %72 : vector<1x128xf32> to vector<128x128xf32>
    %74 = arith.addf %71, %73 : vector<128x128xf32>
    %c0_30 = arith.constant 0 : index
    %c0_31 = arith.constant 0 : index
    %75 = vector.load %arg7[%c0_30, %c0_31] : memref<128x128xf32, #tpu.memory_space<vmem>>, vector<128x128xf32>
    tpu.vector_store %arg7[%c0_30, %c0_31], %74 {strides = array<i32>} : memref<128x128xf32, #tpu.memory_space<vmem>>, vector<128x128xf32>,
    return
  }
  func.func @transform_0(%arg0: i32) -> (i32, i32) {
    %c0_i32 = arith.constant 0 : i32
    %c0_i32_0 = arith.constant 0 : i32
    return %arg0, %c0_i32 : i32, i32
  }
  func.func @transform_1(%arg0: i32) -> (i32, i32) {
    %c0_i32 = arith.constant 0 : i32
    %c0_i32_0 = arith.constant 0 : i32
    %c0_i32_1 = arith.constant 0 : i32
    return %c0_i32, %c0_i32_0 : i32, i32
  }
  func.func @transform_2(%arg0: i32) -> (i32, i32) {
    %c0_i32 = arith.constant 0 : i32
    %c0_i32_0 = arith.constant 0 : i32
    %c0_i32_1 = arith.constant 0 : i32
    return %c0_i32, %c0_i32_0 : i32, i32
  }
  func.func @transform_3(%arg0: i32) -> (i32, i32) {
    %c0_i32 = arith.constant 0 : i32
    %c0_i32_0 = arith.constant 0 : i32
    %c0_i32_1 = arith.constant 0 : i32
    return %c0_i32, %c0_i32_0 : i32, i32
  }
  func.func @transform_4(%arg0: i32) -> (i32, i32) {
    %c0_i32 = arith.constant 0 : i32
    %c0_i32_0 = arith.constant 0 : i32
    %c0_i32_1 = arith.constant 0 : i32
    return %c0_i32, %c0_i32_0 : i32, i32
  }
  func.func @transform_5(%arg0: i32) -> (i32, i32) {
    %c0_i32 = arith.constant 0 : i32
    %c0_i32_0 = arith.constant 0 : i32
    %c0_i32_1 = arith.constant 0 : i32
    return %c0_i32, %c0_i32_0 : i32, i32
  }
  func.func @transform_6(%arg0: i32) -> (i32, i32) {
    %c0_i32 = arith.constant 0 : i32
    %c0_i32_0 = arith.constant 0 : i32
    return %arg0, %c0_i32 : i32, i32
  }
}

module attributes {stable_mosaic.version = 11 : i64} {
  func.func @kernel(%arg0: i32, %arg1: memref<128x128xbf16, #tpu.memory_space<vmem>>, %arg2: memref<128x128xbf16, #tpu.memory_space<vmem>>, %arg3: memref<128x128xbf16, #tpu.memory_space<vmem>>, %arg4: memref<8x128xf32, #tpu.memory_space<vmem>>, %arg5: memref<128x128xbf16, #tpu.memory_space<vmem>>, %arg6: memref<1x128xf32, #tpu.memory_space<vmem>>, %arg7: memref<128x128xf32, #tpu.memory_space<vmem>>) attributes {dimension_semantics = [#tpu.dimension_semantics<parallel>], iteration_bounds = array<i64: 2>, scalar_prefetch = 0 : i64, scratch_operands = 0 : i64, tpu.core_type = #tpu.core_type<tc>, window_params = [{transform_indices = @transform_0, window_bounds = array<i64: 128, 128>}, {pipeline_mode = #tpu.pipeline_mode<synchronous>, transform_indices = @transform_1, window_bounds = array<i64: 128, 128>}, {pipeline_mode = #tpu.pipeline_mode<synchronous>, transform_indices = @transform_2, window_bounds = array<i64: 128, 128>}, {pipeline_mode = #tpu.pipeline_mode<synchronous>, transform_indices = @transform_3, window_bounds = array<i64: 8, 128>}, {pipeline_mode = #tpu.pipeline_mode<synchronous>, transform_indices = @transform_4, window_bounds = array<i64: 128, 128>}, {pipeline_mode = #tpu.pipeline_mode<synchronous>, transform_indices = @transform_5, window_bounds = array<i64: 1, 128>}, {transform_indices = @transform_6, window_bounds = array<i64: 128, 128>}]} {
    %0 = tpu.iota {dimensions = array<i32: 1>} : vector<1x128xi32>
    %c64_i32 = arith.constant 64 : i32
    %1 = vector.broadcast %c64_i32 : i32 to vector<1x128xi32>
    %2 = arith.cmpi slt, %0, %1 : vector<1x128xi32>
    %3 = arith.extui %2 : vector<1x128xi1> to vector<1x128xi32>
    %4 = arith.sitofp %3 : vector<1x128xi32> to vector<1x128xf32>
    %c0 = arith.constant 0 : index
    %c0_0 = arith.constant 0 : index
    %5 = vector.load %arg1[%c0, %c0_0] : memref<128x128xbf16, #tpu.memory_space<vmem>>, vector<128x128xbf16>
    %c0_1 = arith.constant 0 : index
    %c0_2 = arith.constant 0 : index
    %6 = vector.load %arg4[%c0_1, %c0_2] : memref<8x128xf32, #tpu.memory_space<vmem>>, vector<1x128xf32>
    %c1 = arith.constant 1 : index
    %c0_3 = arith.constant 0 : index
    %7 = vector.load %arg4[%c1, %c0_3] : memref<8x128xf32, #tpu.memory_space<vmem>>, vector<1x128xf32>
    %c2 = arith.constant 2 : index
    %c0_4 = arith.constant 0 : index
    %8 = vector.load %arg4[%c2, %c0_4] : memref<8x128xf32, #tpu.memory_space<vmem>>, vector<1x128xf32>
    %c0_5 = arith.constant 0 : index
    %c0_6 = arith.constant 0 : index
    %9 = vector.load %arg2[%c0_5, %c0_6] : memref<128x128xbf16, #tpu.memory_space<vmem>>, vector<128x128xbf16>
    %cst = arith.constant dense<0.000000e+00> : vector<128x128xf32>
    %10 = tpu.matmul %5, %9, %cst {dimension_numbers = #tpu.dot_dimension_numbers<[1], [0], [0], [1], [0, 0, 1, 1], [], []>} : vector<128x128xbf16>, vector<128x128xbf16>, vector<128x128xf32> -> vector<128x128xf32>
    %11 = vector.broadcast %6 : vector<1x128xf32> to vector<128x128xf32>
    %12 = arith.addf %10, %11 : vector<128x128xf32>
    %cst_7 = arith.constant dense<0.000000e+00> : vector<128xf32>
    %13 = vector.multi_reduction <add>, %12, %cst_7 [1] : vector<128x128xf32> to vector<128xf32>
    %14 = vector.shape_cast %13 : vector<128xf32> to vector<128x1xf32>
    %cst_8 = arith.constant 1.562500e-02 : f32
    %15 = vector.broadcast %cst_8 : f32 to vector<128x1xf32>
    %16 = arith.mulf %14, %15 : vector<128x1xf32>
    %17 = vector.broadcast %16 : vector<128x1xf32> to vector<128x128xf32>
    %18 = arith.subf %12, %17 : vector<128x128xf32>
    %19 = vector.broadcast %4 : vector<1x128xf32> to vector<128x128xf32>
    %20 = arith.mulf %18, %19 : vector<128x128xf32>
    %21 = arith.mulf %20, %18 : vector<128x128xf32>
    %cst_9 = arith.constant dense<0.000000e+00> : vector<128xf32>
    %22 = vector.multi_reduction <add>, %21, %cst_9 [1] : vector<128x128xf32> to vector<128xf32>
    %23 = vector.shape_cast %22 : vector<128xf32> to vector<128x1xf32>
    %cst_10 = arith.constant 1.562500e-02 : f32
    %24 = vector.broadcast %cst_10 : f32 to vector<128x1xf32>
    %25 = arith.mulf %23, %24 : vector<128x1xf32>
    %cst_11 = arith.constant 9.99999974E-6 : f32
    %26 = vector.broadcast %cst_11 : f32 to vector<128x1xf32>
    %27 = arith.addf %25, %26 : vector<128x1xf32>
    %28 = math.rsqrt %27 : vector<128x1xf32>
    %29 = vector.broadcast %28 : vector<128x1xf32> to vector<128x128xf32>
    %30 = arith.mulf %18, %29 : vector<128x128xf32>
    %31 = vector.broadcast %7 : vector<1x128xf32> to vector<128x128xf32>
    %32 = arith.mulf %30, %31 : vector<128x128xf32>
    %33 = vector.broadcast %8 : vector<1x128xf32> to vector<128x128xf32>
    %34 = arith.addf %32, %33 : vector<128x128xf32>
    %cst_12 = arith.constant 0.000000e+00 : f32
    %35 = vector.broadcast %cst_12 : f32 to vector<128x128xf32>
    %36 = arith.maximumf %34, %35 : vector<128x128xf32>
    %37 = arith.truncf %36 : vector<128x128xf32> to vector<128x128xbf16>
    %c3 = arith.constant 3 : index
    %c0_13 = arith.constant 0 : index
    %38 = vector.load %arg4[%c3, %c0_13] : memref<8x128xf32, #tpu.memory_space<vmem>>, vector<1x128xf32>
    %c4 = arith.constant 4 : index
    %c0_14 = arith.constant 0 : index
    %39 = vector.load %arg4[%c4, %c0_14] : memref<8x128xf32, #tpu.memory_space<vmem>>, vector<1x128xf32>
    %c5 = arith.constant 5 : index
    %c0_15 = arith.constant 0 : index
    %40 = vector.load %arg4[%c5, %c0_15] : memref<8x128xf32, #tpu.memory_space<vmem>>, vector<1x128xf32>
    %c0_16 = arith.constant 0 : index
    %c0_17 = arith.constant 0 : index
    %41 = vector.load %arg3[%c0_16, %c0_17] : memref<128x128xbf16, #tpu.memory_space<vmem>>, vector<128x128xbf16>
    %cst_18 = arith.constant dense<0.000000e+00> : vector<128x128xf32>
    %42 = tpu.matmul %37, %41, %cst_18 {dimension_numbers = #tpu.dot_dimension_numbers<[1], [0], [0], [1], [0, 0, 1, 1], [], []>} : vector<128x128xbf16>, vector<128x128xbf16>, vector<128x128xf32> -> vector<128x128xf32>
    %43 = vector.broadcast %38 : vector<1x128xf32> to vector<128x128xf32>
    %44 = arith.addf %42, %43 : vector<128x128xf32>
    %cst_19 = arith.constant dense<0.000000e+00> : vector<128xf32>
    %45 = vector.multi_reduction <add>, %44, %cst_19 [1] : vector<128x128xf32> to vector<128xf32>
    %46 = vector.shape_cast %45 : vector<128xf32> to vector<128x1xf32>
    %cst_20 = arith.constant 1.562500e-02 : f32
    %47 = vector.broadcast %cst_20 : f32 to vector<128x1xf32>
    %48 = arith.mulf %46, %47 : vector<128x1xf32>
    %49 = vector.broadcast %48 : vector<128x1xf32> to vector<128x128xf32>
    %50 = arith.subf %44, %49 : vector<128x128xf32>
    %51 = vector.broadcast %4 : vector<1x128xf32> to vector<128x128xf32>
    %52 = arith.mulf %50, %51 : vector<128x128xf32>
    %53 = arith.mulf %52, %50 : vector<128x128xf32>
    %cst_21 = arith.constant dense<0.000000e+00> : vector<128xf32>
    %54 = vector.multi_reduction <add>, %53, %cst_21 [1] : vector<128x128xf32> to vector<128xf32>
    %55 = vector.shape_cast %54 : vector<128xf32> to vector<128x1xf32>
    %cst_22 = arith.constant 1.562500e-02 : f32
    %56 = vector.broadcast %cst_22 : f32 to vector<128x1xf32>
    %57 = arith.mulf %55, %56 : vector<128x1xf32>
    %cst_23 = arith.constant 9.99999974E-6 : f32
    %58 = vector.broadcast %cst_23 : f32 to vector<128x1xf32>
    %59 = arith.addf %57, %58 : vector<128x1xf32>
    %60 = math.rsqrt %59 : vector<128x1xf32>
    %61 = vector.broadcast %60 : vector<128x1xf32> to vector<128x128xf32>
    %62 = arith.mulf %50, %61 : vector<128x128xf32>
    %63 = vector.broadcast %39 : vector<1x128xf32> to vector<128x128xf32>
    %64 = arith.mulf %62, %63 : vector<128x128xf32>
    %65 = vector.broadcast %40 : vector<1x128xf32> to vector<128x128xf32>
    %66 = arith.addf %64, %65 : vector<128x128xf32>
    %cst_24 = arith.constant 0.000000e+00 : f32
    %67 = vector.broadcast %cst_24 : f32 to vector<128x128xf32>
    %68 = arith.maximumf %66, %67 : vector<128x128xf32>
    %69 = arith.truncf %68 : vector<128x128xf32> to vector<128x128xbf16>
    %c0_25 = arith.constant 0 : index
    %c0_26 = arith.constant 0 : index
    %70 = vector.load %arg5[%c0_25, %c0_26] : memref<128x128xbf16, #tpu.memory_space<vmem>>, vector<128x128xbf16>
    %cst_27 = arith.constant dense<0.000000e+00> : vector<128x128xf32>
    %71 = tpu.matmul %69, %70, %cst_27 {dimension_numbers = #tpu.dot_dimension_numbers<[1], [0], [0], [1], [0, 0, 1, 1], [], []>} : vector<128x128xbf16>, vector<128x128xbf16>, vector<128x128xf32> -> vector<128x128xf32>
    %c0_28 = arith.constant 0 : index
    %c0_29 = arith.constant 0 : index
    %72 = vector.load %arg6[%c0_28, %c0_29] : memref<1x128xf32, #tpu.memory_space<vmem>>, vector<1x128xf32>
    %73 = vector.broadcast %72 : vector<1x128xf32> to vector<128x128xf32>
    %74 = arith.addf %71, %73 : vector<128x128xf32>
    %c0_30 = arith.constant 0 : index
    %c0_31 = arith.constant 0 : index
    %75 = vector.load %arg7[%c0_30, %c0_31] : memref<128x128xf32, #tpu.memory_space<vmem>>, vector<128x128xf32>
    tpu.vector_store %arg7[%c0_30, %c0_31], %74 {strides = array<i32>} : memref<128x128xf32, #tpu.memory_space<vmem>>, vector<128x128xf32>,
    return
  }
  func.func @transform_0(%arg0: i32) -> (i32, i32) {
    %c0_i32 = arith.constant 0 : i32
    %c0_i32_0 = arith.constant 0 : i32
    return %arg0, %c0_i32 : i32, i32
  }
  func.func @transform_1(%arg0: i32) -> (i32, i32) {
    %c0_i32 = arith.constant 0 : i32
    %c0_i32_0 = arith.constant 0 : i32
    %c0_i32_1 = arith.constant 0 : i32
    return %c0_i32, %c0_i32_0 : i32, i32
  }
  func.func @transform_2(%arg0: i32) -> (i32, i32) {
    %c0_i32 = arith.constant 0 : i32
    %c0_i32_0 = arith.constant 0 : i32
    %c0_i32_1 = arith.constant 0 : i32
    return %c0_i32, %c0_i32_0 : i32, i32
  }
  func.func @transform_3(%arg0: i32) -> (i32, i32) {
    %c0_i32 = arith.constant 0 : i32
    %c0_i32_0 = arith.constant 0 : i32
    %c0_i32_1 = arith.constant 0 : i32
    return %c0_i32, %c0_i32_0 : i32, i32
  }
  func.func @transform_4(%arg0: i32) -> (i32, i32) {
    %c0_i32 = arith.constant 0 : i32
    %c0_i32_0 = arith.constant 0 : i32
    %c0_i32_1 = arith.constant 0 : i32
    return %c0_i32, %c0_i32_0 : i32, i32
  }
  func.func @transform_5(%arg0: i32) -> (i32, i32) {
    %c0_i32 = arith.constant 0 : i32
    %c0_i32_0 = arith.constant 0 : i32
    %c0_i32_1 = arith.constant 0 : i32
    return %c0_i32, %c0_i32_0 : i32, i32
  }
  func.func @transform_6(%arg0: i32) -> (i32, i32) {
    %c0_i32 = arith.constant 0 : i32
    %c0_i32_0 = arith.constant 0 : i32
    return %arg0, %c0_i32 : i32, i32
  }
}

</mosaic_0001>

<llo_original>
// kernel: tpu_custom_call.1
$region0: #{tpu_custom_call.1}
  #allocation0 [shape = 'u32[]', space=smem, size = 0x4, offset = 0x4, fixed_abs, tag = 'smem constant byte address 0x4 - core index']
  #allocation1 [shape = 'u32[144,128]{1,0:T(1,128)}', space=vmem, size = 0x12000, scoped, tag = 'internal scratch']
  %s0 = inlined_call_operand.hbm [shape: bf16[256,128], index: 0, kind: input, shape index: {}]
  %s1 = inlined_call_operand.hbm [shape: bf16[128,128], index: 1, kind: input, shape index: {}]
  %s2 = inlined_call_operand.hbm [shape: bf16[128,128], index: 2, kind: input, shape index: {}]
  %s3 = inlined_call_operand.vmem [shape: f32[8,128], index: 3, kind: input, shape index: {}]
  %s4 = inlined_call_operand.hbm [shape: bf16[128,128], index: 4, kind: input, shape index: {}]
  %s5 = inlined_call_operand.vmem [shape: f32[1,128], index: 5, kind: input, shape index: {}]
  %s6 = inlined_call_operand.hbm [shape: f32[256,128], index: 6, kind: output, shape index: {}]
  %s7 = sld [smem:[#allocation0]]
  $region73: #{tpu_custom_call.1} parent=0
    _
  %s9 = ssub.s32 1, %s7
  %s10 = scalar_select 0, %s9, %s7
  $region1: #{tpu_custom_call.1} parent=0
    #allocation2 [shape = 'u8[65536]{0}', space=vmem, size = 0x10000, scoped, tag = 'input window, operand 0']
    #allocation3 [shape = 's32[2]{0}', space=sflag, size = 0x8, scoped, tag = 'scoped memory for tpu_custom_call.1']
    #allocation4 [shape = 's32[2]{0}', space=sflag, size = 0x8, scoped, tag = 'scoped memory for tpu_custom_call.1']
    #allocation5 [shape = 'u8[32768]{0}', space=vmem, size = 0x8000, scoped, tag = 'input window, operand 1, single buffered']
    #allocation6 [shape = 's32[1]{0}', space=sflag, size = 0x4, scoped, tag = 'scoped memory for tpu_custom_call.1']
    #allocation7 [shape = 'u8[32768]{0}', space=vmem, size = 0x8000, scoped, tag = 'input window, operand 2, single buffered']
    #allocation8 [shape = 'u8[32768]{0}', space=vmem, size = 0x8000, scoped, tag = 'input window, operand 4, single buffered']
    #allocation9 [shape = 's32[1]{0}', space=sflag, size = 0x4, scoped, tag = 'scoped memory for tpu_custom_call.1']
    #allocation10 [shape = 'u8[131072]{0}', space=vmem, size = 0x20000, scoped, tag = 'output window, operand 0']
    %11 = vsyncpa [#allocation3], 0
    %s12 = scalar_lea.sflag [#allocation3], 1
    %13 = vsyncpa %s12, 0
    %14 = vsyncpa [#allocation6], 0
    %15 = vsyncpa [#allocation9], 0
    %16 = vsyncpa [#allocation4], 0
    %s17 = scalar_lea.sflag [#allocation4], 1
    %18 = vsyncpa %s17, 0
    loop: start=0, step=1, limit=4
    $region2: #{tpu_custom_call.1} parent=1 // loop_pre_header
      _
    $region3: #{tpu_custom_call.1} parent=1 // loop_header
      %s20 = sphi 0, %s24
      %p21 = scmp.ge.s32.totalorder %s20, 4
      %s30 = sphi 0, %s32
      %s33 = sphi 0, %s30
      %s34 = sphi 0, %s33
      %s50 = sphi 0, %s34
      %s54 = sphi 0, %s54
      %s56 = sphi 0, %s54
      %s57 = sphi 0, %s56
      %s71 = sphi 0, %s57
      %s75 = sphi 0, %s75
      %s77 = sphi 0, %s75
      %s78 = sphi 0, %s77
      %s92 = sphi 0, %s78
      %s96 = sphi 0, %s96
      %s98 = sphi 0, %s96
      %s99 = sphi 0, %s98
      %s113 = sphi 0, %s99
      %s117 = sphi 0, %s117
      %s119 = sphi 0, %s117
      %s120 = sphi 0, %s119
      %s134 = sphi 0, %s120
      %s138 = sphi 0, %s138
      %s140 = sphi 0, %s138
      %s141 = sphi 0, %s140
      %s155 = sphi 0, %s141
      %s161 = sphi 0, %s163
      %s164 = sphi 0, %s161
      %s165 = sphi 0, %s164
      %s181 = sphi 0, %s165
    $region4: #{tpu_custom_call.1} parent=1 // loop_header_branch
      %23 = sbr.rel (%p21) target = $region8
    $region5: #{tpu_custom_call.1} parent=1 // loop_body
      %s25 = ssub.s32 %s20, 1
      %s26 = ssub.s32 %s20, 2
      %s27 = sadd.s32 %s20, 1
      %s28 = ssub.s32 %s20, %s27
      %p29 = scmp.eq.s32.totalorder %s28, 0
      %s31 = sadd.s32 %s30, 1
      %s32 = scalar_select %p29, %s30, %s31
      %p35 = pneg %p29
      %p36 = scmp.eq.s32.totalorder %s20, 1
      %p37 = por %p35, %p36
      %p38 = scmp.ne.s32.totalorder %s30, %s33
      %p39 = scmp.eq.s32.totalorder %s20, 0
      %p40 = por %p38, %p39
      %p41 = scmp.ne.s32.totalorder %s30, %s33
      %p42 = scmp.eq.s32.totalorder %s25, 1
      %p43 = por %p41, %p42
      %p44 = scmp.ne.s32.totalorder %s33, %s34
      %p45 = scmp.eq.s32.totalorder %s25, 0
      %p46 = por %p44, %p45
      %p47 = scmp.ne.s32.totalorder %s33, %s34
      %p48 = scmp.eq.s32.totalorder %s26, 1
      %p49 = por %p47, %p48
      %p51 = scmp.ne.s32.totalorder %s34, %s50
      %p52 = scmp.eq.s32.totalorder %s26, 0
      %p53 = por %p51, %p52
      %s55 = sadd.s32 %s54, 1
      %p58 = scmp.eq.s32.totalorder %s20, 1
      %p59 = scmp.ne.s32.totalorder %s54, %s56
      %p60 = scmp.eq.s32.totalorder %s20, 0
      %p61 = por %p59, %p60
      %p62 = scmp.ne.s32.totalorder %s54, %s56
      %p63 = scmp.eq.s32.totalorder %s25, 1
      %p64 = por %p62, %p63
      %p65 = scmp.ne.s32.totalorder %s56, %s57
      %p66 = scmp.eq.s32.totalorder %s25, 0
      %p67 = por %p65, %p66
      %p68 = scmp.ne.s32.totalorder %s56, %s57
      %p69 = scmp.eq.s32.totalorder %s26, 1
      %p70 = por %p68, %p69
      %p72 = scmp.ne.s32.totalorder %s57, %s71
      %p73 = scmp.eq.s32.totalorder %s26, 0
      %p74 = por %p72, %p73
      %s76 = sadd.s32 %s75, 1
      %p79 = scmp.eq.s32.totalorder %s20, 1
      %p80 = scmp.ne.s32.totalorder %s75, %s77
      %p81 = scmp.eq.s32.totalorder %s20, 0
      %p82 = por %p80, %p81
      %p83 = scmp.ne.s32.totalorder %s75, %s77
      %p84 = scmp.eq.s32.totalorder %s25, 1
      %p85 = por %p83, %p84
      %p86 = scmp.ne.s32.totalorder %s77, %s78
      %p87 = scmp.eq.s32.totalorder %s25, 0
      %p88 = por %p86, %p87
      %p89 = scmp.ne.s32.totalorder %s77, %s78
      %p90 = scmp.eq.s32.totalorder %s26, 1
      %p91 = por %p89, %p90
      %p93 = scmp.ne.s32.totalorder %s78, %s92
      %p94 = scmp.eq.s32.totalorder %s26, 0
      %p95 = por %p93, %p94
      %s97 = sadd.s32 %s96, 1
      %p100 = scmp.eq.s32.totalorder %s20, 1
      %p101 = scmp.ne.s32.totalorder %s96, %s98
      %p102 = scmp.eq.s32.totalorder %s20, 0
      %p103 = por %p101, %p102
      %p104 = scmp.ne.s32.totalorder %s96, %s98
      %p105 = scmp.eq.s32.totalorder %s25, 1
      %p106 = por %p104, %p105
      %p107 = scmp.ne.s32.totalorder %s98, %s99
      %p108 = scmp.eq.s32.totalorder %s25, 0
      %p109 = por %p107, %p108
      %p110 = scmp.ne.s32.totalorder %s98, %s99
      %p111 = scmp.eq.s32.totalorder %s26, 1
      %p112 = por %p110, %p111
      %p114 = scmp.ne.s32.totalorder %s99, %s113
      %p115 = scmp.eq.s32.totalorder %s26, 0
      %p116 = por %p114, %p115
      %s118 = sadd.s32 %s117, 1
      %p121 = scmp.eq.s32.totalorder %s20, 1
      %p122 = scmp.ne.s32.totalorder %s117, %s119
      %p123 = scmp.eq.s32.totalorder %s20, 0
      %p124 = por %p122, %p123
      %p125 = scmp.ne.s32.totalorder %s117, %s119
      %p126 = scmp.eq.s32.totalorder %s25, 1
      %p127 = por %p125, %p126
      %p128 = scmp.ne.s32.totalorder %s119, %s120
      %p129 = scmp.eq.s32.totalorder %s25, 0
      %p130 = por %p128, %p129
      %p131 = scmp.ne.s32.totalorder %s119, %s120
      %p132 = scmp.eq.s32.totalorder %s26, 1
      %p133 = por %p131, %p132
      %p135 = scmp.ne.s32.totalorder %s120, %s134
      %p136 = scmp.eq.s32.totalorder %s26, 0
      %p137 = por %p135, %p136
      %s139 = sadd.s32 %s138, 1
      %p142 = scmp.eq.s32.totalorder %s20, 1
      %p143 = scmp.ne.s32.totalorder %s138, %s140
      %p144 = scmp.eq.s32.totalorder %s20, 0
      %p145 = por %p143, %p144
      %p146 = scmp.ne.s32.totalorder %s138, %s140
      %p147 = scmp.eq.s32.totalorder %s25, 1
      %p148 = por %p146, %p147
      %p149 = scmp.ne.s32.totalorder %s140, %s141
      %p150 = scmp.eq.s32.totalorder %s25, 0
      %p151 = por %p149, %p150
      %p152 = scmp.ne.s32.totalorder %s140, %s141
      %p153 = scmp.eq.s32.totalorder %s26, 1
      %p154 = por %p152, %p153
      %p156 = scmp.ne.s32.totalorder %s141, %s155
      %p157 = scmp.eq.s32.totalorder %s26, 0
      %p158 = por %p156, %p157
      %s159 = ssub.s32 %s20, %s27
      %p160 = scmp.eq.s32.totalorder %s159, 0
      %s162 = sadd.s32 %s161, 1
      %s163 = scalar_select %p160, %s161, %s162
      %p166 = pneg %p160
      %p167 = scmp.eq.s32.totalorder %s20, 1
      %p168 = por %p166, %p167
      %p169 = scmp.ne.s32.totalorder %s161, %s164
      %p170 = scmp.eq.s32.totalorder %s20, 0
      %p171 = por %p169, %p170
      %p172 = scmp.ne.s32.totalorder %s161, %s164
      %p173 = scmp.eq.s32.totalorder %s25, 1
      %p174 = por %p172, %p173
      %p175 = scmp.ne.s32.totalorder %s164, %s165
      %p176 = scmp.eq.s32.totalorder %s25, 0
      %p177 = por %p175, %p176
      %p178 = scmp.ne.s32.totalorder %s164, %s165
      %p179 = scmp.eq.s32.totalorder %s26, 1
      %p180 = por %p178, %p179
      %p182 = scmp.ne.s32.totalorder %s165, %s181
      %p183 = scmp.eq.s32.totalorder %s26, 0
      %p184 = por %p182, %p183
      %p185 = scmp.le.s32.totalorder 1, %s20
      %p186 = scmp.lt.s32.totalorder %s20, 3
      %p187 = pnand %p185, %p186
      %p188 = pneg %p187
      // Predicated region
      $region9: #{tpu_custom_call.1} parent=5 // pred_check
        _
      $region10: #{tpu_custom_call.1} parent=5 // pred_check_branch
        %190 = sbr.rel (%p187) target = $region12
      $region11: #{tpu_custom_call.1} parent=5 // pred_region
        %s191 = ssub.s32 %s20, 1
        // Predicated region
        $region13: #{tpu_custom_call.1} parent=11 // pred_check
          %p192 = pneg %p67
        $region14: #{tpu_custom_call.1} parent=11 // pred_check_branch
          %194 = sbr.rel (%p192) target = $region16
        $region15: #{tpu_custom_call.1} parent=11 // pred_region
          %s196 = ssub.s32 1024, 1024
          %197 = vsyncadd [#allocation6], %s196
          %s198 = sshll.u32 [#allocation5], 4
          %s199 = int_to_ptr.vmem [resolvable:$true] %s198
          %204 = dma.hbm_to_vmem [thread:$0]  %s1, 1024, %s199, [#allocation6], 64, 64, 4
        $region16: #{tpu_custom_call.1} parent=11 // pred_fallthru
          _
        // Predicated region
        $region17: #{tpu_custom_call.1} parent=11 // pred_check
          %p205 = pneg %p88
        $region18: #{tpu_custom_call.1} parent=11 // pred_check_branch
          %207 = sbr.rel (%p205) target = $region20
        $region19: #{tpu_custom_call.1} parent=11 // pred_region
          %s209 = ssub.s32 1024, 1024
          %210 = vsyncadd [#allocation6], %s209
          %s211 = sshll.u32 [#allocation7], 4
          %s212 = int_to_ptr.vmem [resolvable:$true] %s211
          %217 = dma.hbm_to_vmem [thread:$0]  %s2, 1024, %s212, [#allocation6], 64, 64, 4
        $region20: #{tpu_custom_call.1} parent=11 // pred_fallthru
          _
        // Predicated region
        $region21: #{tpu_custom_call.1} parent=11 // pred_check
          %p218 = pneg %p109
        $region22: #{tpu_custom_call.1} parent=11 // pred_check_branch
          %220 = sbr.rel (%p218) target = $region24
        $region23: #{tpu_custom_call.1} parent=11 // pred_region
          _
        $region24: #{tpu_custom_call.1} parent=11 // pred_fallthru
          _
        // Predicated region
        $region25: #{tpu_custom_call.1} parent=11 // pred_check
          %p221 = pneg %p130
        $region26: #{tpu_custom_call.1} parent=11 // pred_check_branch
          %223 = sbr.rel (%p221) target = $region28
        $region27: #{tpu_custom_call.1} parent=11 // pred_region
          %s225 = ssub.s32 1024, 1024
          %226 = vsyncadd [#allocation9], %s225
          %s227 = sshll.u32 [#allocation8], 4
          %s228 = int_to_ptr.vmem [resolvable:$true] %s227
          %233 = dma.hbm_to_vmem [thread:$0]  %s4, 1024, %s228, [#allocation9], 64, 64, 4
        $region28: #{tpu_custom_call.1} parent=11 // pred_fallthru
          _
        // Predicated region
        $region29: #{tpu_custom_call.1} parent=11 // pred_check
          %p234 = pneg %p151
        $region30: #{tpu_custom_call.1} parent=11 // pred_check_branch
          %236 = sbr.rel (%p234) target = $region32
        $region31: #{tpu_custom_call.1} parent=11 // pred_region
          _
        $region32: #{tpu_custom_call.1} parent=11 // pred_fallthru
          _
      $region12: #{tpu_custom_call.1} parent=5 // pred_fallthru
        _
      %p237 = scmp.lt.s32.totalorder %s20, 2
      // Predicated region
      $region33: #{tpu_custom_call.1} parent=5 // pred_check
        %p238 = pneg %p237
      $region34: #{tpu_custom_call.1} parent=5 // pred_check_branch
        %240 = sbr.rel (%p238) target = $region36
      $region35: #{tpu_custom_call.1} parent=5 // pred_region
        // Predicated region
        $region37: #{tpu_custom_call.1} parent=35 // pred_check
          %p241 = pneg %p40
        $region38: #{tpu_custom_call.1} parent=35 // pred_check_branch
          %243 = sbr.rel (%p241) target = $region40
        $region39: #{tpu_custom_call.1} parent=35 // pred_region
          %s244 = sand.u32 %s30, 1
          %s245 = scalar_lea.sflag [#allocation3], %s244
          %s246 = sand.u32 %s30, 1
          %s247 = smul.addr %s246, 64
          %s248 = scalar_lea.vmem [#allocation2], %s247
          %s249 = smul.u32 16, %s20
          %s251 = ssub.s32 1024, 1024
          %252 = vsyncadd %s245, %s251
          %s253 = smul.addr %s249, 64
          %s254 = scalar_lea.hbm %s0, %s253
          %s255 = sshll.u32 %s248, 4
          %s256 = int_to_ptr.vmem [resolvable:$true] %s255
          %261 = dma.hbm_to_vmem [thread:$0]  %s254, 1024, %s256, %s245, 64, 64, 4
        $region40: #{tpu_custom_call.1} parent=35 // pred_fallthru
          _
      $region36: #{tpu_custom_call.1} parent=5 // pred_fallthru
        _
      %p262 = scmp.le.s32.totalorder 1, %s20
      %p263 = scmp.lt.s32.totalorder %s20, 3
      %p264 = pnand %p262, %p263
      %p265 = pneg %p264
      // Predicated region
      $region41: #{tpu_custom_call.1} parent=5 // pred_check
        _
      $region42: #{tpu_custom_call.1} parent=5 // pred_check_branch
        %267 = sbr.rel (%p264) target = $region44
      $region43: #{tpu_custom_call.1} parent=5 // pred_region
        %s268 = ssub.s32 %s20, 1
        %s269 = sand.u32 %s33, 1
        %s270 = scalar_lea.sflag [#allocation3], %s269
        %s271 = sand.u32 %s33, 1
        %s272 = smul.addr %s271, 64
        %s273 = scalar_lea.vmem [#allocation2], %s272
        // Predicated region
        $region45: #{tpu_custom_call.1} parent=43 // pred_check
          %p274 = pneg %p46
        $region46: #{tpu_custom_call.1} parent=43 // pred_check_branch
          %276 = sbr.rel (%p274) target = $region48
        $region47: #{tpu_custom_call.1} parent=43 // pred_region
          %277 = dma.done %s270, 1024
        $region48: #{tpu_custom_call.1} parent=43 // pred_fallthru
          _
        // Predicated region
        $region49: #{tpu_custom_call.1} parent=43 // pred_check
          %p278 = pneg %p67
        $region50: #{tpu_custom_call.1} parent=43 // pred_check_branch
          %280 = sbr.rel (%p278) target = $region52
        $region51: #{tpu_custom_call.1} parent=43 // pred_region
          %281 = dma.done [#allocation6], 1024
        $region52: #{tpu_custom_call.1} parent=43 // pred_fallthru
          _
        // Predicated region
        $region53: #{tpu_custom_call.1} parent=43 // pred_check
          %p282 = pneg %p88
        $region54: #{tpu_custom_call.1} parent=43 // pred_check_branch
          %284 = sbr.rel (%p282) target = $region56
        $region55: #{tpu_custom_call.1} parent=43 // pred_region
          %285 = dma.done [#allocation6], 1024
        $region56: #{tpu_custom_call.1} parent=43 // pred_fallthru
          _
        // Predicated region
        $region57: #{tpu_custom_call.1} parent=43 // pred_check
          %p286 = pneg %p130
        $region58: #{tpu_custom_call.1} parent=43 // pred_check_branch
          %288 = sbr.rel (%p286) target = $region60
        $region59: #{tpu_custom_call.1} parent=43 // pred_region
          %289 = dma.done [#allocation9], 1024
        $region60: #{tpu_custom_call.1} parent=43 // pred_fallthru
          _
        %s290 = sand.u32 %s33, 1
        %s291 = scalar_lea.sflag [#allocation3], %s290
        %s292 = sand.u32 %s33, 1
        %s293 = smul.addr %s292, 64
        %s294 = scalar_lea.vmem [#allocation2], %s293
        %p295 = pneg %p46
        %p296 = pneg %p43
        %p297 = pneg %p67
        %p298 = pneg %p64
        %p299 = pneg %p88
        %p300 = pneg %p85
        %p301 = pneg %p109
        %p302 = pneg %p106
        %p303 = pneg %p130
        %p304 = pneg %p127
        %p305 = pneg %p151
        %p306 = pneg %p148
        %p307 = pneg %p177
        %p308 = pneg %p174
        %s309 = sand.u32 %s164, 1
        %s310 = scalar_lea.sflag [#allocation4], %s309
        %s311 = sand.u32 %s164, 1
        %s312 = smul.addr %s311, 128
        %s313 = scalar_lea.vmem [#allocation10], %s312
        %s314 = smul.u32 16, %s25
        %s315 = smul.u32 16, %s25
        %v317 = vlaneseq
        %v318 = vand.u32 %v317, 127
        %vm319 = vcmp.lt.s32.totalorder %v318, 64
        %v320 = vsel %vm319, 1, 0
        %v321 = vcvt.s32.f32 %v320
        %v322 = vld [vmem:[%s273] sm:$0xf]
        %v323 = vld [vmem:[%s273 + $0x4] sm:$0xf]
        %v324 = vld [vmem:[%s273 + $0x8] sm:$0xf]
        %v325 = vld [vmem:[%s273 + $0xc] sm:$0xf]
        %v326 = vld [vmem:[%s273 + $0x10] sm:$0xf]
        %v327 = vld [vmem:[%s273 + $0x14] sm:$0xf]
        %v328 = vld [vmem:[%s273 + $0x18] sm:$0xf]
        %v329 = vld [vmem:[%s273 + $0x1c] sm:$0xf]
        %v330 = vld [vmem:[%s273 + $0x20] sm:$0xf]
        %v331 = vld [vmem:[%s273 + $0x24] sm:$0xf]
        %v332 = vld [vmem:[%s273 + $0x28] sm:$0xf]
        %v333 = vld [vmem:[%s273 + $0x2c] sm:$0xf]
        %v334 = vld [vmem:[%s273 + $0x30] sm:$0xf]
        %v335 = vld [vmem:[%s273 + $0x34] sm:$0xf]
        %v336 = vld [vmem:[%s273 + $0x38] sm:$0xf]
        %v337 = vld [vmem:[%s273 + $0x3c] sm:$0xf]
        %v338 = vld [vmem:[%s3] sm:$0x1]
        %v339 = vld [vmem:[%s3 + $0x1] sm:$0x1]
        %v340 = vld [vmem:[%s3 + $0x2] sm:$0x1]
        %v341 = vld [vmem:[#allocation5] sm:$0xf]
        %v342 = vld [vmem:[#allocation5 + $0x4] sm:$0xf]
        %v343 = vld [vmem:[#allocation5 + $0x8] sm:$0xf]
        %v344 = vld [vmem:[#allocation5 + $0xc] sm:$0xf]
        %v345 = vld [vmem:[#allocation5 + $0x10] sm:$0xf]
        %v346 = vld [vmem:[#allocation5 + $0x14] sm:$0xf]
        %v347 = vld [vmem:[#allocation5 + $0x18] sm:$0xf]
        %v348 = vld [vmem:[#allocation5 + $0x1c] sm:$0xf]
        %v349 = vld [vmem:[#allocation5 + $0x20] sm:$0xf]
        %v350 = vld [vmem:[#allocation5 + $0x24] sm:$0xf]
        %v351 = vld [vmem:[#allocation5 + $0x28] sm:$0xf]
        %v352 = vld [vmem:[#allocation5 + $0x2c] sm:$0xf]
        %v353 = vld [vmem:[#allocation5 + $0x30] sm:$0xf]
        %v354 = vld [vmem:[#allocation5 + $0x34] sm:$0xf]
        %v355 = vld [vmem:[#allocation5 + $0x38] sm:$0xf]
        %v356 = vld [vmem:[#allocation5 + $0x3c] sm:$0xf]
        %v357 = vlaneseq
        %v358 = vshrl.u32 %v357, 7
        %v359 = vsub.s32 0, %v358
        %v360 = vrot.slane %v338, %v359
        %v377 = vunpack.c.l.b16 %v322
        %v378 = vunpack.c.l.b16 %v323
        %v379 = vunpack.c.l.b16 %v324
        %v380 = vunpack.c.l.b16 %v325
        %v381 = vunpack.c.l.b16 %v326
        %v382 = vunpack.c.l.b16 %v327
        %v383 = vunpack.c.l.b16 %v328
        %v384 = vunpack.c.l.b16 %v329
        %v385 = vunpack.c.l.b16 %v330
        %v386 = vunpack.c.l.b16 %v331
        %v387 = vunpack.c.l.b16 %v332
        %v388 = vunpack.c.l.b16 %v333
        %v389 = vunpack.c.l.b16 %v334
        %v390 = vunpack.c.l.b16 %v335
        %v391 = vunpack.c.l.b16 %v336
        %v392 = vunpack.c.l.b16 %v337
        %v393 = vpack.c.b16 %v378, %v377
        %v394 = vpack.c.b16 %v380, %v379
        %v395 = vpack.c.b16 %v382, %v381
        %v396 = vpack.c.b16 %v384, %v383
        %v397 = vpack.c.b16 %v386, %v385
        %v398 = vpack.c.b16 %v388, %v387
        %v399 = vpack.c.b16 %v390, %v389
        %v400 = vpack.c.b16 %v392, %v391
        %v425 = vunpack.c.l.b16 %v341
        %v426 = vunpack.c.l.b16 %v342
        %v427 = vunpack.c.l.b16 %v343
        %v428 = vunpack.c.l.b16 %v344
        %v429 = vunpack.c.l.b16 %v345
        %v430 = vunpack.c.l.b16 %v346
        %v431 = vunpack.c.l.b16 %v347
        %v432 = vunpack.c.l.b16 %v348
        %v433 = vunpack.c.l.b16 %v349
        %v434 = vunpack.c.l.b16 %v350
        %v435 = vunpack.c.l.b16 %v351
        %v436 = vunpack.c.l.b16 %v352
        %v437 = vunpack.c.l.b16 %v353
        %v438 = vunpack.c.l.b16 %v354
        %v439 = vunpack.c.l.b16 %v355
        %v440 = vunpack.c.l.b16 %v356
        %v441 = vpack.c.b16 %v426, %v425
        %v442 = vpack.c.b16 %v428, %v427
        %v443 = vpack.c.b16 %v430, %v429
        %v444 = vpack.c.b16 %v432, %v431
        %v445 = vpack.c.b16 %v434, %v433
        %v446 = vpack.c.b16 %v436, %v435
        %v447 = vpack.c.b16 %v438, %v437
        %v448 = vpack.c.b16 %v440, %v439
        %457 = vmatprep.subr.bf16.mxu0 0
        %458 = vmatpush1.bf16.msra.mxu0 %v441
        %459 = vmatprep.subr.bf16.mxu0 0
        %460 = vmatpush1.bf16.msra.mxu0 %v442
        %461 = vmatprep.subr.bf16.mxu0 0
        %462 = vmatpush1.bf16.msra.mxu0 %v443
        %463 = vmatprep.subr.bf16.mxu0 0
        %464 = vmatpush1.bf16.msra.mxu0 %v444
        %465 = vmatprep.subr.bf16.mxu0 0
        %466 = vmatpush1.bf16.msra.mxu0 %v445
        %467 = vmatprep.subr.bf16.mxu0 0
        %468 = vmatpush1.bf16.msra.mxu0 %v446
        %469 = vmatprep.subr.bf16.mxu0 0
        %470 = vmatpush1.bf16.msra.mxu0 %v447
        %471 = vmatprep.subr.bf16.mxu0 0
        %472 = vmatpush1.bf16.msra.mxu0 %v448
        %473 = vmatprep.subr.bf16.mxu0 0
        %474 = vmatpush1.bf16.msra.mxu0 0
        %475 = vmatprep.subr.bf16.mxu0 0
        %476 = vmatpush1.bf16.msra.mxu0 0
        %477 = vmatprep.subr.bf16.mxu0 0
        %478 = vmatpush1.bf16.msra.mxu0 0
        %479 = vmatprep.subr.bf16.mxu0 0
        %480 = vmatpush1.bf16.msra.mxu0 0
        %481 = vmatprep.subr.bf16.mxu0 0
        %482 = vmatpush1.bf16.msra.mxu0 0
        %483 = vmatprep.subr.bf16.mxu0 0
        %484 = vmatpush1.bf16.msra.mxu0 0
        %485 = vmatprep.subr.bf16.mxu0 0
        %486 = vmatpush1.bf16.msra.mxu0 0
        %487 = vmatprep.subr.bf16.mxu0 0
        %488 = vmatpush1.bf16.msra.mxu0 0
        %489 = vmatprep.mubr.bf16.mxu0 0
        %490 = vmatmul.mubr.bf16.gmra.mrb[0].mxu0 %v393
        %v491 = vpop.f32.mrb[0].mxu0
        %v492 = vadd.f32 %v360, %v491
        %v493 = vpop.f32.mrb[0].mxu0
        %v494 = vpop.f32.mrb[0].mxu0
        %v495 = vadd.f32 %v360, %v494
        %v496 = vpop.f32.mrb[0].mxu0
        %497 = vmatprep.mubr.bf16.mxu0 0
        %498 = vmatmul.mubr.bf16.gmra.mrb[0].mxu0 %v394
        %v499 = vpop.f32.mrb[0].mxu0
        %v500 = vadd.f32 %v360, %v499
        %v501 = vpop.f32.mrb[0].mxu0
        %v502 = vpop.f32.mrb[0].mxu0
        %v503 = vadd.f32 %v360, %v502
        %v504 = vpop.f32.mrb[0].mxu0
        %505 = vmatprep.mubr.bf16.mxu0 0
        %506 = vmatmul.mubr.bf16.gmra.mrb[0].mxu0 %v395
        %v507 = vpop.f32.mrb[0].mxu0
        %v508 = vadd.f32 %v360, %v507
        %v509 = vpop.f32.mrb[0].mxu0
        %v510 = vpop.f32.mrb[0].mxu0
        %v511 = vadd.f32 %v360, %v510
        %v512 = vpop.f32.mrb[0].mxu0
        %513 = vmatprep.mubr.bf16.mxu0 0
        %514 = vmatmul.mubr.bf16.gmra.mrb[0].mxu0 %v396
        %v515 = vpop.f32.mrb[0].mxu0
        %v516 = vadd.f32 %v360, %v515
        %v517 = vpop.f32.mrb[0].mxu0
        %v518 = vpop.f32.mrb[0].mxu0
        %v519 = vadd.f32 %v360, %v518
        %v520 = vpop.f32.mrb[0].mxu0
        %521 = vmatprep.mubr.bf16.mxu0 0
        %522 = vmatmul.mubr.bf16.gmra.mrb[0].mxu0 %v397
        %v523 = vpop.f32.mrb[0].mxu0
        %v524 = vadd.f32 %v360, %v523
        %v525 = vpop.f32.mrb[0].mxu0
        %v526 = vpop.f32.mrb[0].mxu0
        %v527 = vadd.f32 %v360, %v526
        %v528 = vpop.f32.mrb[0].mxu0
        %529 = vmatprep.mubr.bf16.mxu0 0
        %530 = vmatmul.mubr.bf16.gmra.mrb[0].mxu0 %v398
        %v531 = vpop.f32.mrb[0].mxu0
        %v532 = vadd.f32 %v360, %v531
        %v533 = vpop.f32.mrb[0].mxu0
        %v534 = vpop.f32.mrb[0].mxu0
        %v535 = vadd.f32 %v360, %v534
        %v536 = vpop.f32.mrb[0].mxu0
        %537 = vmatprep.mubr.bf16.mxu0 0
        %538 = vmatmul.mubr.bf16.gmra.mrb[0].mxu0 %v399
        %v539 = vpop.f32.mrb[0].mxu0
        %v540 = vadd.f32 %v360, %v539
        %v541 = vpop.f32.mrb[0].mxu0
        %v542 = vpop.f32.mrb[0].mxu0
        %v543 = vadd.f32 %v360, %v542
        %v544 = vpop.f32.mrb[0].mxu0
        %545 = vmatprep.mubr.bf16.mxu0 0
        %546 = vmatmul.mubr.bf16.gmra.mrb[0].mxu0 %v400
        %v547 = vpop.f32.mrb[0].mxu0
        %v548 = vadd.f32 %v360, %v547
        %v549 = vpop.f32.mrb[0].mxu0
        %v550 = vpop.f32.mrb[0].mxu0
        %v551 = vadd.f32 %v360, %v550
        %v552 = vpop.f32.mrb[0].mxu0
        %553 = vdwg.mxu0
        %554 = vadd.xlane.f32.xlu0 %v492
        %v555 = vpop.xlane.xlu0 %554
        %556 = vadd.xlane.f32.xlu0 %v495
        %v557 = vpop.xlane.xlu0 %556
        %558 = vadd.xlane.f32.xlu0 %v500
        %v559 = vpop.xlane.xlu0 %558
        %560 = vadd.xlane.f32.xlu0 %v503
        %v561 = vpop.xlane.xlu0 %560
        %562 = vadd.xlane.f32.xlu0 %v508
        %v563 = vpop.xlane.xlu0 %562
        %564 = vadd.xlane.f32.xlu0 %v511
        %v565 = vpop.xlane.xlu0 %564
        %566 = vadd.xlane.f32.xlu0 %v516
        %v567 = vpop.xlane.xlu0 %566
        %568 = vadd.xlane.f32.xlu0 %v519
        %v569 = vpop.xlane.xlu0 %568
        %570 = vadd.xlane.f32.xlu0 %v524
        %v571 = vpop.xlane.xlu0 %570
        %572 = vadd.xlane.f32.xlu0 %v527
        %v573 = vpop.xlane.xlu0 %572
        %574 = vadd.xlane.f32.xlu0 %v532
        %v575 = vpop.xlane.xlu0 %574
        %576 = vadd.xlane.f32.xlu0 %v535
        %v577 = vpop.xlane.xlu0 %576
        %578 = vadd.xlane.f32.xlu0 %v540
        %v579 = vpop.xlane.xlu0 %578
        %580 = vadd.xlane.f32.xlu0 %v543
        %v581 = vpop.xlane.xlu0 %580
        %582 = vadd.xlane.f32.xlu0 %v548
        %v583 = vpop.xlane.xlu0 %582
        %584 = vadd.xlane.f32.xlu0 %v551
        %v585 = vpop.xlane.xlu0 %584
        %v586 = vmul.f32 %v555, 0.015625
        %v587 = vmul.f32 %v557, 0.015625
        %v588 = vmul.f32 %v559, 0.015625
        %v589 = vmul.f32 %v561, 0.015625
        %v590 = vmul.f32 %v563, 0.015625
        %v591 = vmul.f32 %v565, 0.015625
        %v592 = vmul.f32 %v567, 0.015625
        %v593 = vmul.f32 %v569, 0.015625
        %v594 = vmul.f32 %v571, 0.015625
        %v595 = vmul.f32 %v573, 0.015625
        %v596 = vmul.f32 %v575, 0.015625
        %v597 = vmul.f32 %v577, 0.015625
        %v598 = vmul.f32 %v579, 0.015625
        %v599 = vmul.f32 %v581, 0.015625
        %v600 = vmul.f32 %v583, 0.015625
        %v601 = vmul.f32 %v585, 0.015625
        %v602 = vsub.f32 %v492, %v586
        %v603 = vsub.f32 %v495, %v587
        %v604 = vsub.f32 %v500, %v588
        %v605 = vsub.f32 %v503, %v589
        %v606 = vsub.f32 %v508, %v590
        %v607 = vsub.f32 %v511, %v591
        %v608 = vsub.f32 %v516, %v592
        %v609 = vsub.f32 %v519, %v593
        %v610 = vsub.f32 %v524, %v594
        %v611 = vsub.f32 %v527, %v595
        %v612 = vsub.f32 %v532, %v596
        %v613 = vsub.f32 %v535, %v597
        %v614 = vsub.f32 %v540, %v598
        %v615 = vsub.f32 %v543, %v599
        %v616 = vsub.f32 %v548, %v600
        %v617 = vsub.f32 %v551, %v601
        %v618 = vmul.f32 %v602, %v321
        %v619 = vmul.f32 %v603, %v321
        %v620 = vmul.f32 %v604, %v321
        %v621 = vmul.f32 %v605, %v321
        %v622 = vmul.f32 %v606, %v321
        %v623 = vmul.f32 %v607, %v321
        %v624 = vmul.f32 %v608, %v321
        %v625 = vmul.f32 %v609, %v321
        %v626 = vmul.f32 %v610, %v321
        %v627 = vmul.f32 %v611, %v321
        %v628 = vmul.f32 %v612, %v321
        %v629 = vmul.f32 %v613, %v321
        %v630 = vmul.f32 %v614, %v321
        %v631 = vmul.f32 %v615, %v321
        %v632 = vmul.f32 %v616, %v321
        %v633 = vmul.f32 %v617, %v321
        %v634 = vmul.f32 %v618, %v602
        %v635 = vmul.f32 %v619, %v603
        %v636 = vmul.f32 %v620, %v604
        %v637 = vmul.f32 %v621, %v605
        %v638 = vmul.f32 %v622, %v606
        %v639 = vmul.f32 %v623, %v607
        %v640 = vmul.f32 %v624, %v608
        %v641 = vmul.f32 %v625, %v609
        %v642 = vmul.f32 %v626, %v610
        %v643 = vmul.f32 %v627, %v611
        %v644 = vmul.f32 %v628, %v612
        %v645 = vmul.f32 %v629, %v613
        %v646 = vmul.f32 %v630, %v614
        %v647 = vmul.f32 %v631, %v615
        %v648 = vmul.f32 %v632, %v616
        %v649 = vmul.f32 %v633, %v617
        %650 = vadd.xlane.f32.xlu0 %v634
        %v651 = vpop.xlane.xlu0 %650
        %652 = vadd.xlane.f32.xlu0 %v635
        %v653 = vpop.xlane.xlu0 %652
        %654 = vadd.xlane.f32.xlu0 %v636
        %v655 = vpop.xlane.xlu0 %654
        %656 = vadd.xlane.f32.xlu0 %v637
        %v657 = vpop.xlane.xlu0 %656
        %658 = vadd.xlane.f32.xlu0 %v638
        %v659 = vpop.xlane.xlu0 %658
        %660 = vadd.xlane.f32.xlu0 %v639
        %v661 = vpop.xlane.xlu0 %660
        %662 = vadd.xlane.f32.xlu0 %v640
        %v663 = vpop.xlane.xlu0 %662
        %664 = vadd.xlane.f32.xlu0 %v641
        %v665 = vpop.xlane.xlu0 %664
        %666 = vadd.xlane.f32.xlu0 %v642
        %v667 = vpop.xlane.xlu0 %666
        %668 = vadd.xlane.f32.xlu0 %v643
        %v669 = vpop.xlane.xlu0 %668
        %670 = vadd.xlane.f32.xlu0 %v644
        %v671 = vpop.xlane.xlu0 %670
        %672 = vadd.xlane.f32.xlu0 %v645
        %v673 = vpop.xlane.xlu0 %672
        %674 = vadd.xlane.f32.xlu0 %v646
        %v675 = vpop.xlane.xlu0 %674
        %676 = vadd.xlane.f32.xlu0 %v647
        %v677 = vpop.xlane.xlu0 %676
        %678 = vadd.xlane.f32.xlu0 %v648
        %v679 = vpop.xlane.xlu0 %678
        %680 = vadd.xlane.f32.xlu0 %v649
        %v681 = vpop.xlane.xlu0 %680
        %v682 = vmul.f32 %v651, 0.015625
        %v683 = vmul.f32 %v653, 0.015625
        %v684 = vmul.f32 %v655, 0.015625
        %v685 = vmul.f32 %v657, 0.015625
        %v686 = vmul.f32 %v659, 0.015625
        %v687 = vmul.f32 %v661, 0.015625
        %v688 = vmul.f32 %v663, 0.015625
        %v689 = vmul.f32 %v665, 0.015625
        %v690 = vmul.f32 %v667, 0.015625
        %v691 = vmul.f32 %v669, 0.015625
        %v692 = vmul.f32 %v671, 0.015625
        %v693 = vmul.f32 %v673, 0.015625
        %v694 = vmul.f32 %v675, 0.015625
        %v695 = vmul.f32 %v677, 0.015625
        %v696 = vmul.f32 %v679, 0.015625
        %v697 = vmul.f32 %v681, 0.015625
        %v698 = vadd.f32 %v682, 1e-05
        %v699 = vadd.f32 %v683, 1e-05
        %v700 = vadd.f32 %v684, 1e-05
        %v701 = vadd.f32 %v685, 1e-05
        %v702 = vadd.f32 %v686, 1e-05
        %v703 = vadd.f32 %v687, 1e-05
        %v704 = vadd.f32 %v688, 1e-05
        %v705 = vadd.f32 %v689, 1e-05
        %v706 = vadd.f32 %v690, 1e-05
        %v707 = vadd.f32 %v691, 1e-05
        %v708 = vadd.f32 %v692, 1e-05
        %v709 = vadd.f32 %v693, 1e-05
        %v710 = vadd.f32 %v694, 1e-05
        %v711 = vadd.f32 %v695, 1e-05
        %v712 = vadd.f32 %v696, 1e-05
        %v713 = vadd.f32 %v697, 1e-05
        %v714 = vrsqrt.pop %v698
        %v715 = vrsqrt.pop %v699
        %v716 = vrsqrt.pop %v700
        %v717 = vrsqrt.pop %v701
        %v718 = vrsqrt.pop %v702
        %v719 = vrsqrt.pop %v703
        %v720 = vrsqrt.pop %v704
        %v721 = vrsqrt.pop %v705
        %v722 = vrsqrt.pop %v706
        %v723 = vrsqrt.pop %v707
        %v724 = vrsqrt.pop %v708
        %v725 = vrsqrt.pop %v709
        %v726 = vrsqrt.pop %v710
        %v727 = vrsqrt.pop %v711
        %v728 = vrsqrt.pop %v712
        %v729 = vrsqrt.pop %v713
        %v730 = vmul.f32 %v602, %v714
        %v731 = vmul.f32 %v603, %v715
        %v732 = vmul.f32 %v604, %v716
        %v733 = vmul.f32 %v605, %v717
        %v734 = vmul.f32 %v606, %v718
        %v735 = vmul.f32 %v607, %v719
        %v736 = vmul.f32 %v608, %v720
        %v737 = vmul.f32 %v609, %v721
        %v738 = vmul.f32 %v610, %v722
        %v739 = vmul.f32 %v611, %v723
        %v740 = vmul.f32 %v612, %v724
        %v741 = vmul.f32 %v613, %v725
        %v742 = vmul.f32 %v614, %v726
        %v743 = vmul.f32 %v615, %v727
        %v744 = vmul.f32 %v616, %v728
        %v745 = vmul.f32 %v617, %v729
        %v746 = vlaneseq
        %v747 = vshrl.u32 %v746, 7
        %v748 = vsub.s32 0, %v747
        %v749 = vrot.slane %v339, %v748
        %v750 = vmul.f32 %v730, %v749
        %v751 = vmul.f32 %v731, %v749
        %v752 = vmul.f32 %v732, %v749
        %v753 = vmul.f32 %v733, %v749
        %v754 = vmul.f32 %v734, %v749
        %v755 = vmul.f32 %v735, %v749
        %v756 = vmul.f32 %v736, %v749
        %v757 = vmul.f32 %v737, %v749
        %v758 = vmul.f32 %v738, %v749
        %v759 = vmul.f32 %v739, %v749
        %v760 = vmul.f32 %v740, %v749
        %v761 = vmul.f32 %v741, %v749
        %v762 = vmul.f32 %v742, %v749
        %v763 = vmul.f32 %v743, %v749
        %v764 = vmul.f32 %v744, %v749
        %v765 = vmul.f32 %v745, %v749
        %v766 = vlaneseq
        %v767 = vshrl.u32 %v766, 7
        %v768 = vsub.s32 0, %v767
        %v769 = vrot.slane %v340, %v768
        %v770 = vadd.f32 %v750, %v769
        %v771 = vadd.f32 %v751, %v769
        %v772 = vadd.f32 %v752, %v769
        %v773 = vadd.f32 %v753, %v769
        %v774 = vadd.f32 %v754, %v769
        %v775 = vadd.f32 %v755, %v769
        %v776 = vadd.f32 %v756, %v769
        %v777 = vadd.f32 %v757, %v769
        %v778 = vadd.f32 %v758, %v769
        %v779 = vadd.f32 %v759, %v769
        %v780 = vadd.f32 %v760, %v769
        %v781 = vadd.f32 %v761, %v769
        %v782 = vadd.f32 %v762, %v769
        %v783 = vadd.f32 %v763, %v769
        %v784 = vadd.f32 %v764, %v769
        %v785 = vadd.f32 %v765, %v769
        %v786 = vmax.f32 %v770, 0.0
        %v787 = vmax.f32 %v771, 0.0
        %v788 = vmax.f32 %v772, 0.0
        %v789 = vmax.f32 %v773, 0.0
        %v790 = vmax.f32 %v774, 0.0
        %v791 = vmax.f32 %v775, 0.0
        %v792 = vmax.f32 %v776, 0.0
        %v793 = vmax.f32 %v777, 0.0
        %v794 = vmax.f32 %v778, 0.0
        %v795 = vmax.f32 %v779, 0.0
        %v796 = vmax.f32 %v780, 0.0
        %v797 = vmax.f32 %v781, 0.0
        %v798 = vmax.f32 %v782, 0.0
        %v799 = vmax.f32 %v783, 0.0
        %v800 = vmax.f32 %v784, 0.0
        %v801 = vmax.f32 %v785, 0.0
        %v802 = vpack.c.bf16 %v787, %v786
        %v803 = vpack.c.bf16 %v789, %v788
        %v804 = vpack.c.bf16 %v791, %v790
        %v805 = vpack.c.bf16 %v793, %v792
        %v806 = vpack.c.bf16 %v795, %v794
        %v807 = vpack.c.bf16 %v797, %v796
        %v808 = vpack.c.bf16 %v799, %v798
        %v809 = vpack.c.bf16 %v801, %v800
        %v810 = vld [vmem:[%s3 + $0x3] sm:$0x1]
        %v811 = vld [vmem:[%s3 + $0x4] sm:$0x1]
        %v812 = vld [vmem:[%s3 + $0x5] sm:$0x1]
        %v813 = vld [vmem:[#allocation7] sm:$0xf]
        %v814 = vld [vmem:[#allocation7 + $0x4] sm:$0xf]
        %v815 = vld [vmem:[#allocation7 + $0x8] sm:$0xf]
        %v816 = vld [vmem:[#allocation7 + $0xc] sm:$0xf]
        %v817 = vld [vmem:[#allocation7 + $0x10] sm:$0xf]
        %v818 = vld [vmem:[#allocation7 + $0x14] sm:$0xf]
        %v819 = vld [vmem:[#allocation7 + $0x18] sm:$0xf]
        %v820 = vld [vmem:[#allocation7 + $0x1c] sm:$0xf]
        %v821 = vld [vmem:[#allocation7 + $0x20] sm:$0xf]
        %v822 = vld [vmem:[#allocation7 + $0x24] sm:$0xf]
        %v823 = vld [vmem:[#allocation7 + $0x28] sm:$0xf]
        %v824 = vld [vmem:[#allocation7 + $0x2c] sm:$0xf]
        %v825 = vld [vmem:[#allocation7 + $0x30] sm:$0xf]
        %v826 = vld [vmem:[#allocation7 + $0x34] sm:$0xf]
        %v827 = vld [vmem:[#allocation7 + $0x38] sm:$0xf]
        %v828 = vld [vmem:[#allocation7 + $0x3c] sm:$0xf]
        %v829 = vlaneseq
        %v830 = vshrl.u32 %v829, 7
        %v831 = vsub.s32 0, %v830
        %v832 = vrot.slane %v810, %v831
        %v849 = vunpack.c.l.b16 %v813
        %v850 = vunpack.c.l.b16 %v814
        %v851 = vunpack.c.l.b16 %v815
        %v852 = vunpack.c.l.b16 %v816
        %v853 = vunpack.c.l.b16 %v817
        %v854 = vunpack.c.l.b16 %v818
        %v855 = vunpack.c.l.b16 %v819
        %v856 = vunpack.c.l.b16 %v820
        %v857 = vunpack.c.l.b16 %v821
        %v858 = vunpack.c.l.b16 %v822
        %v859 = vunpack.c.l.b16 %v823
        %v860 = vunpack.c.l.b16 %v824
        %v861 = vunpack.c.l.b16 %v825
        %v862 = vunpack.c.l.b16 %v826
        %v863 = vunpack.c.l.b16 %v827
        %v864 = vunpack.c.l.b16 %v828
        %v865 = vpack.c.b16 %v850, %v849
        %v866 = vpack.c.b16 %v852, %v851
        %v867 = vpack.c.b16 %v854, %v853
        %v868 = vpack.c.b16 %v856, %v855
        %v869 = vpack.c.b16 %v858, %v857
        %v870 = vpack.c.b16 %v860, %v859
        %v871 = vpack.c.b16 %v862, %v861
        %v872 = vpack.c.b16 %v864, %v863
        %881 = vmatprep.subr.bf16.mxu0 0
        %882 = vmatpush1.bf16.msra.mxu0 %v865
        %883 = vmatprep.subr.bf16.mxu0 0
        %884 = vmatpush1.bf16.msra.mxu0 %v866
        %885 = vmatprep.subr.bf16.mxu0 0
        %886 = vmatpush1.bf16.msra.mxu0 %v867
        %887 = vmatprep.subr.bf16.mxu0 0
        %888 = vmatpush1.bf16.msra.mxu0 %v868
        %889 = vmatprep.subr.bf16.mxu0 0
        %890 = vmatpush1.bf16.msra.mxu0 %v869
        %891 = vmatprep.subr.bf16.mxu0 0
        %892 = vmatpush1.bf16.msra.mxu0 %v870
        %893 = vmatprep.subr.bf16.mxu0 0
        %894 = vmatpush1.bf16.msra.mxu0 %v871
        %895 = vmatprep.subr.bf16.mxu0 0
        %896 = vmatpush1.bf16.msra.mxu0 %v872
        %897 = vmatprep.subr.bf16.mxu0 0
        %898 = vmatpush1.bf16.msra.mxu0 0
        %899 = vmatprep.subr.bf16.mxu0 0
        %900 = vmatpush1.bf16.msra.mxu0 0
        %901 = vmatprep.subr.bf16.mxu0 0
        %902 = vmatpush1.bf16.msra.mxu0 0
        %903 = vmatprep.subr.bf16.mxu0 0
        %904 = vmatpush1.bf16.msra.mxu0 0
        %905 = vmatprep.subr.bf16.mxu0 0
        %906 = vmatpush1.bf16.msra.mxu0 0
        %907 = vmatprep.subr.bf16.mxu0 0
        %908 = vmatpush1.bf16.msra.mxu0 0
        %909 = vmatprep.subr.bf16.mxu0 0
        %910 = vmatpush1.bf16.msra.mxu0 0
        %911 = vmatprep.subr.bf16.mxu0 0
        %912 = vmatpush1.bf16.msra.mxu0 0
        %913 = vmatprep.mubr.bf16.mxu0 0
        %914 = vmatmul.mubr.bf16.gmra.mrb[0].mxu0 %v802
        %v915 = vpop.f32.mrb[0].mxu0
        %v916 = vadd.f32 %v832, %v915
        %v917 = vpop.f32.mrb[0].mxu0
        %v918 = vpop.f32.mrb[0].mxu0
        %v919 = vadd.f32 %v832, %v918
        %v920 = vpop.f32.mrb[0].mxu0
        %921 = vmatprep.mubr.bf16.mxu0 0
        %922 = vmatmul.mubr.bf16.gmra.mrb[0].mxu0 %v803
        %v923 = vpop.f32.mrb[0].mxu0
        %v924 = vadd.f32 %v832, %v923
        %v925 = vpop.f32.mrb[0].mxu0
        %v926 = vpop.f32.mrb[0].mxu0
        %v927 = vadd.f32 %v832, %v926
        %v928 = vpop.f32.mrb[0].mxu0
        %929 = vmatprep.mubr.bf16.mxu0 0
        %930 = vmatmul.mubr.bf16.gmra.mrb[0].mxu0 %v804
        %v931 = vpop.f32.mrb[0].mxu0
        %v932 = vadd.f32 %v832, %v931
        %v933 = vpop.f32.mrb[0].mxu0
        %v934 = vpop.f32.mrb[0].mxu0
        %v935 = vadd.f32 %v832, %v934
        %v936 = vpop.f32.mrb[0].mxu0
        %937 = vmatprep.mubr.bf16.mxu0 0
        %938 = vmatmul.mubr.bf16.gmra.mrb[0].mxu0 %v805
        %v939 = vpop.f32.mrb[0].mxu0
        %v940 = vadd.f32 %v832, %v939
        %v941 = vpop.f32.mrb[0].mxu0
        %v942 = vpop.f32.mrb[0].mxu0
        %v943 = vadd.f32 %v832, %v942
        %v944 = vpop.f32.mrb[0].mxu0
        %945 = vmatprep.mubr.bf16.mxu0 0
        %946 = vmatmul.mubr.bf16.gmra.mrb[0].mxu0 %v806
        %v947 = vpop.f32.mrb[0].mxu0
        %v948 = vadd.f32 %v832, %v947
        %v949 = vpop.f32.mrb[0].mxu0
        %v950 = vpop.f32.mrb[0].mxu0
        %v951 = vadd.f32 %v832, %v950
        %v952 = vpop.f32.mrb[0].mxu0
        %953 = vmatprep.mubr.bf16.mxu0 0
        %954 = vmatmul.mubr.bf16.gmra.mrb[0].mxu0 %v807
        %v955 = vpop.f32.mrb[0].mxu0
        %v956 = vadd.f32 %v832, %v955
        %v957 = vpop.f32.mrb[0].mxu0
        %v958 = vpop.f32.mrb[0].mxu0
        %v959 = vadd.f32 %v832, %v958
        %v960 = vpop.f32.mrb[0].mxu0
        %961 = vmatprep.mubr.bf16.mxu0 0
        %962 = vmatmul.mubr.bf16.gmra.mrb[0].mxu0 %v808
        %v963 = vpop.f32.mrb[0].mxu0
        %v964 = vadd.f32 %v832, %v963
        %v965 = vpop.f32.mrb[0].mxu0
        %v966 = vpop.f32.mrb[0].mxu0
        %v967 = vadd.f32 %v832, %v966
        %v968 = vpop.f32.mrb[0].mxu0
        %969 = vmatprep.mubr.bf16.mxu0 0
        %970 = vmatmul.mubr.bf16.gmra.mrb[0].mxu0 %v809
        %v971 = vpop.f32.mrb[0].mxu0
        %v972 = vadd.f32 %v832, %v971
        %v973 = vpop.f32.mrb[0].mxu0
        %v974 = vpop.f32.mrb[0].mxu0
        %v975 = vadd.f32 %v832, %v974
        %v976 = vpop.f32.mrb[0].mxu0
        %977 = vdwg.mxu0
        %978 = vadd.xlane.f32.xlu0 %v916
        %v979 = vpop.xlane.xlu0 %978
        %980 = vadd.xlane.f32.xlu0 %v919
        %v981 = vpop.xlane.xlu0 %980
        %982 = vadd.xlane.f32.xlu0 %v924
        %v983 = vpop.xlane.xlu0 %982
        %984 = vadd.xlane.f32.xlu0 %v927
        %v985 = vpop.xlane.xlu0 %984
        %986 = vadd.xlane.f32.xlu0 %v932
        %v987 = vpop.xlane.xlu0 %986
        %988 = vadd.xlane.f32.xlu0 %v935
        %v989 = vpop.xlane.xlu0 %988
        %990 = vadd.xlane.f32.xlu0 %v940
        %v991 = vpop.xlane.xlu0 %990
        %992 = vadd.xlane.f32.xlu0 %v943
        %v993 = vpop.xlane.xlu0 %992
        %994 = vadd.xlane.f32.xlu0 %v948
        %v995 = vpop.xlane.xlu0 %994
        %996 = vadd.xlane.f32.xlu0 %v951
        %v997 = vpop.xlane.xlu0 %996
        %998 = vadd.xlane.f32.xlu0 %v956
        %v999 = vpop.xlane.xlu0 %998
        %1000 = vadd.xlane.f32.xlu0 %v959
        %v1001 = vpop.xlane.xlu0 %1000
        %1002 = vadd.xlane.f32.xlu0 %v964
        %v1003 = vpop.xlane.xlu0 %1002
        %1004 = vadd.xlane.f32.xlu0 %v967
        %v1005 = vpop.xlane.xlu0 %1004
        %1006 = vadd.xlane.f32.xlu0 %v972
        %v1007 = vpop.xlane.xlu0 %1006
        %1008 = vadd.xlane.f32.xlu0 %v975
        %v1009 = vpop.xlane.xlu0 %1008
        %v1010 = vmul.f32 %v979, 0.015625
        %v1011 = vmul.f32 %v981, 0.015625
        %v1012 = vmul.f32 %v983, 0.015625
        %v1013 = vmul.f32 %v985, 0.015625
        %v1014 = vmul.f32 %v987, 0.015625
        %v1015 = vmul.f32 %v989, 0.015625
        %v1016 = vmul.f32 %v991, 0.015625
        %v1017 = vmul.f32 %v993, 0.015625
        %v1018 = vmul.f32 %v995, 0.015625
        %v1019 = vmul.f32 %v997, 0.015625
        %v1020 = vmul.f32 %v999, 0.015625
        %v1021 = vmul.f32 %v1001, 0.015625
        %v1022 = vmul.f32 %v1003, 0.015625
        %v1023 = vmul.f32 %v1005, 0.015625
        %v1024 = vmul.f32 %v1007, 0.015625
        %v1025 = vmul.f32 %v1009, 0.015625
        %v1026 = vsub.f32 %v916, %v1010
        %v1027 = vsub.f32 %v919, %v1011
        %v1028 = vsub.f32 %v924, %v1012
        %v1029 = vsub.f32 %v927, %v1013
        %v1030 = vsub.f32 %v932, %v1014
        %v1031 = vsub.f32 %v935, %v1015
        %v1032 = vsub.f32 %v940, %v1016
        %v1033 = vsub.f32 %v943, %v1017
        %v1034 = vsub.f32 %v948, %v1018
        %v1035 = vsub.f32 %v951, %v1019
        %v1036 = vsub.f32 %v956, %v1020
        %v1037 = vsub.f32 %v959, %v1021
        %v1038 = vsub.f32 %v964, %v1022
        %v1039 = vsub.f32 %v967, %v1023
        %v1040 = vsub.f32 %v972, %v1024
        %v1041 = vsub.f32 %v975, %v1025
        %v1042 = vmul.f32 %v1026, %v321
        %v1043 = vmul.f32 %v1027, %v321
        %v1044 = vmul.f32 %v1028, %v321
        %v1045 = vmul.f32 %v1029, %v321
        %v1046 = vmul.f32 %v1030, %v321
        %v1047 = vmul.f32 %v1031, %v321
        %v1048 = vmul.f32 %v1032, %v321
        %v1049 = vmul.f32 %v1033, %v321
        %v1050 = vmul.f32 %v1034, %v321
        %v1051 = vmul.f32 %v1035, %v321
        %v1052 = vmul.f32 %v1036, %v321
        %v1053 = vmul.f32 %v1037, %v321
        %v1054 = vmul.f32 %v1038, %v321
        %v1055 = vmul.f32 %v1039, %v321
        %v1056 = vmul.f32 %v1040, %v321
        %v1057 = vmul.f32 %v1041, %v321
        %v1058 = vmul.f32 %v1042, %v1026
        %v1059 = vmul.f32 %v1043, %v1027
        %v1060 = vmul.f32 %v1044, %v1028
        %v1061 = vmul.f32 %v1045, %v1029
        %v1062 = vmul.f32 %v1046, %v1030
        %v1063 = vmul.f32 %v1047, %v1031
        %v1064 = vmul.f32 %v1048, %v1032
        %v1065 = vmul.f32 %v1049, %v1033
        %v1066 = vmul.f32 %v1050, %v1034
        %v1067 = vmul.f32 %v1051, %v1035
        %v1068 = vmul.f32 %v1052, %v1036
        %v1069 = vmul.f32 %v1053, %v1037
        %v1070 = vmul.f32 %v1054, %v1038
        %v1071 = vmul.f32 %v1055, %v1039
        %v1072 = vmul.f32 %v1056, %v1040
        %v1073 = vmul.f32 %v1057, %v1041
        %1074 = vadd.xlane.f32.xlu0 %v1058
        %v1075 = vpop.xlane.xlu0 %1074
        %1076 = vadd.xlane.f32.xlu0 %v1059
        %v1077 = vpop.xlane.xlu0 %1076
        %1078 = vadd.xlane.f32.xlu0 %v1060
        %v1079 = vpop.xlane.xlu0 %1078
        %1080 = vadd.xlane.f32.xlu0 %v1061
        %v1081 = vpop.xlane.xlu0 %1080
        %1082 = vadd.xlane.f32.xlu0 %v1062
        %v1083 = vpop.xlane.xlu0 %1082
        %1084 = vadd.xlane.f32.xlu0 %v1063
        %v1085 = vpop.xlane.xlu0 %1084
        %1086 = vadd.xlane.f32.xlu0 %v1064
        %v1087 = vpop.xlane.xlu0 %1086
        %1088 = vadd.xlane.f32.xlu0 %v1065
        %v1089 = vpop.xlane.xlu0 %1088
        %1090 = vadd.xlane.f32.xlu0 %v1066
        %v1091 = vpop.xlane.xlu0 %1090
        %1092 = vadd.xlane.f32.xlu0 %v1067
        %v1093 = vpop.xlane.xlu0 %1092
        %1094 = vadd.xlane.f32.xlu0 %v1068
        %v1095 = vpop.xlane.xlu0 %1094
        %1096 = vadd.xlane.f32.xlu0 %v1069
        %v1097 = vpop.xlane.xlu0 %1096
        %1098 = vadd.xlane.f32.xlu0 %v1070
        %v1099 = vpop.xlane.xlu0 %1098
        %1100 = vadd.xlane.f32.xlu0 %v1071
        %v1101 = vpop.xlane.xlu0 %1100
        %1102 = vadd.xlane.f32.xlu0 %v1072
        %v1103 = vpop.xlane.xlu0 %1102
        %1104 = vadd.xlane.f32.xlu0 %v1073
        %v1105 = vpop.xlane.xlu0 %1104
        %v1106 = vmul.f32 %v1075, 0.015625
        %v1107 = vmul.f32 %v1077, 0.015625
        %v1108 = vmul.f32 %v1079, 0.015625
        %v1109 = vmul.f32 %v1081, 0.015625
        %v1110 = vmul.f32 %v1083, 0.015625
        %v1111 = vmul.f32 %v1085, 0.015625
        %v1112 = vmul.f32 %v1087, 0.015625
        %v1113 = vmul.f32 %v1089, 0.015625
        %v1114 = vmul.f32 %v1091, 0.015625
        %v1115 = vmul.f32 %v1093, 0.015625
        %v1116 = vmul.f32 %v1095, 0.015625
        %v1117 = vmul.f32 %v1097, 0.015625
        %v1118 = vmul.f32 %v1099, 0.015625
        %v1119 = vmul.f32 %v1101, 0.015625
        %v1120 = vmul.f32 %v1103, 0.015625
        %v1121 = vmul.f32 %v1105, 0.015625
        %v1122 = vadd.f32 %v1106, 1e-05
        %v1123 = vadd.f32 %v1107, 1e-05
        %v1124 = vadd.f32 %v1108, 1e-05
        %v1125 = vadd.f32 %v1109, 1e-05
        %v1126 = vadd.f32 %v1110, 1e-05
        %v1127 = vadd.f32 %v1111, 1e-05
        %v1128 = vadd.f32 %v1112, 1e-05
        %v1129 = vadd.f32 %v1113, 1e-05
        %v1130 = vadd.f32 %v1114, 1e-05
        %v1131 = vadd.f32 %v1115, 1e-05
        %v1132 = vadd.f32 %v1116, 1e-05
        %v1133 = vadd.f32 %v1117, 1e-05
        %v1134 = vadd.f32 %v1118, 1e-05
        %v1135 = vadd.f32 %v1119, 1e-05
        %v1136 = vadd.f32 %v1120, 1e-05
        %v1137 = vadd.f32 %v1121, 1e-05
        %v1138 = vrsqrt.pop %v1122
        %v1139 = vrsqrt.pop %v1123
        %v1140 = vrsqrt.pop %v1124
        %v1141 = vrsqrt.pop %v1125
        %v1142 = vrsqrt.pop %v1126
        %v1143 = vrsqrt.pop %v1127
        %v1144 = vrsqrt.pop %v1128
        %v1145 = vrsqrt.pop %v1129
        %v1146 = vrsqrt.pop %v1130
        %v1147 = vrsqrt.pop %v1131
        %v1148 = vrsqrt.pop %v1132
        %v1149 = vrsqrt.pop %v1133
        %v1150 = vrsqrt.pop %v1134
        %v1151 = vrsqrt.pop %v1135
        %v1152 = vrsqrt.pop %v1136
        %v1153 = vrsqrt.pop %v1137
        %v1154 = vmul.f32 %v1026, %v1138
        %v1155 = vmul.f32 %v1027, %v1139
        %v1156 = vmul.f32 %v1028, %v1140
        %v1157 = vmul.f32 %v1029, %v1141
        %v1158 = vmul.f32 %v1030, %v1142
        %v1159 = vmul.f32 %v1031, %v1143
        %v1160 = vmul.f32 %v1032, %v1144
        %v1161 = vmul.f32 %v1033, %v1145
        %v1162 = vmul.f32 %v1034, %v1146
        %v1163 = vmul.f32 %v1035, %v1147
        %v1164 = vmul.f32 %v1036, %v1148
        %v1165 = vmul.f32 %v1037, %v1149
        %v1166 = vmul.f32 %v1038, %v1150
        %v1167 = vmul.f32 %v1039, %v1151
        %v1168 = vmul.f32 %v1040, %v1152
        %v1169 = vmul.f32 %v1041, %v1153
        %v1170 = vlaneseq
        %v1171 = vshrl.u32 %v1170, 7
        %v1172 = vsub.s32 0, %v1171
        %v1173 = vrot.slane %v811, %v1172
        %v1174 = vmul.f32 %v1154, %v1173
        %v1175 = vmul.f32 %v1155, %v1173
        %v1176 = vmul.f32 %v1156, %v1173
        %v1177 = vmul.f32 %v1157, %v1173
        %v1178 = vmul.f32 %v1158, %v1173
        %v1179 = vmul.f32 %v1159, %v1173
        %v1180 = vmul.f32 %v1160, %v1173
        %v1181 = vmul.f32 %v1161, %v1173
        %v1182 = vmul.f32 %v1162, %v1173
        %v1183 = vmul.f32 %v1163, %v1173
        %v1184 = vmul.f32 %v1164, %v1173
        %v1185 = vmul.f32 %v1165, %v1173
        %v1186 = vmul.f32 %v1166, %v1173
        %v1187 = vmul.f32 %v1167, %v1173
        %v1188 = vmul.f32 %v1168, %v1173
        %v1189 = vmul.f32 %v1169, %v1173
        %v1190 = vlaneseq
        %v1191 = vshrl.u32 %v1190, 7
        %v1192 = vsub.s32 0, %v1191
        %v1193 = vrot.slane %v812, %v1192
        %v1194 = vadd.f32 %v1174, %v1193
        %v1195 = vadd.f32 %v1175, %v1193
        %v1196 = vadd.f32 %v1176, %v1193
        %v1197 = vadd.f32 %v1177, %v1193
        %v1198 = vadd.f32 %v1178, %v1193
        %v1199 = vadd.f32 %v1179, %v1193
        %v1200 = vadd.f32 %v1180, %v1193
        %v1201 = vadd.f32 %v1181, %v1193
        %v1202 = vadd.f32 %v1182, %v1193
        %v1203 = vadd.f32 %v1183, %v1193
        %v1204 = vadd.f32 %v1184, %v1193
        %v1205 = vadd.f32 %v1185, %v1193
        %v1206 = vadd.f32 %v1186, %v1193
        %v1207 = vadd.f32 %v1187, %v1193
        %v1208 = vadd.f32 %v1188, %v1193
        %v1209 = vadd.f32 %v1189, %v1193
        %v1210 = vmax.f32 %v1194, 0.0
        %v1211 = vmax.f32 %v1195, 0.0
        %v1212 = vmax.f32 %v1196, 0.0
        %v1213 = vmax.f32 %v1197, 0.0
        %v1214 = vmax.f32 %v1198, 0.0
        %v1215 = vmax.f32 %v1199, 0.0
        %v1216 = vmax.f32 %v1200, 0.0
        %v1217 = vmax.f32 %v1201, 0.0
        %v1218 = vmax.f32 %v1202, 0.0
        %v1219 = vmax.f32 %v1203, 0.0
        %v1220 = vmax.f32 %v1204, 0.0
        %v1221 = vmax.f32 %v1205, 0.0
        %v1222 = vmax.f32 %v1206, 0.0
        %v1223 = vmax.f32 %v1207, 0.0
        %v1224 = vmax.f32 %v1208, 0.0
        %v1225 = vmax.f32 %v1209, 0.0
        %v1226 = vpack.c.bf16 %v1211, %v1210
        %v1227 = vpack.c.bf16 %v1213, %v1212
        %v1228 = vpack.c.bf16 %v1215, %v1214
        %v1229 = vpack.c.bf16 %v1217, %v1216
        %v1230 = vpack.c.bf16 %v1219, %v1218
        %v1231 = vpack.c.bf16 %v1221, %v1220
        %v1232 = vpack.c.bf16 %v1223, %v1222
        %v1233 = vpack.c.bf16 %v1225, %v1224
        %v1234 = vld [vmem:[#allocation8] sm:$0xf]
        %v1235 = vld [vmem:[#allocation8 + $0x4] sm:$0xf]
        %v1236 = vld [vmem:[#allocation8 + $0x8] sm:$0xf]
        %v1237 = vld [vmem:[#allocation8 + $0xc] sm:$0xf]
        %v1238 = vld [vmem:[#allocation8 + $0x10] sm:$0xf]
        %v1239 = vld [vmem:[#allocation8 + $0x14] sm:$0xf]
        %v1240 = vld [vmem:[#allocation8 + $0x18] sm:$0xf]
        %v1241 = vld [vmem:[#allocation8 + $0x1c] sm:$0xf]
        %v1242 = vld [vmem:[#allocation8 + $0x20] sm:$0xf]
        %v1243 = vld [vmem:[#allocation8 + $0x24] sm:$0xf]
        %v1244 = vld [vmem:[#allocation8 + $0x28] sm:$0xf]
        %v1245 = vld [vmem:[#allocation8 + $0x2c] sm:$0xf]
        %v1246 = vld [vmem:[#allocation8 + $0x30] sm:$0xf]
        %v1247 = vld [vmem:[#allocation8 + $0x34] sm:$0xf]
        %v1248 = vld [vmem:[#allocation8 + $0x38] sm:$0xf]
        %v1249 = vld [vmem:[#allocation8 + $0x3c] sm:$0xf]
        %v1250 = vld [vmem:[%s5] sm:$0x1]
        %v1252 = vlaneseq
        %v1253 = vshrl.u32 %v1252, 7
        %v1254 = vsub.s32 0, %v1253
        %v1255 = vrot.slane %v1250, %v1254
        %v1273 = vunpack.c.l.b16 %v1234
        %v1274 = vunpack.c.l.b16 %v1235
        %v1275 = vunpack.c.l.b16 %v1236
        %v1276 = vunpack.c.l.b16 %v1237
        %v1277 = vunpack.c.l.b16 %v1238
        %v1278 = vunpack.c.l.b16 %v1239
        %v1279 = vunpack.c.l.b16 %v1240
        %v1280 = vunpack.c.l.b16 %v1241
        %v1281 = vunpack.c.l.b16 %v1242
        %v1282 = vunpack.c.l.b16 %v1243
        %v1283 = vunpack.c.l.b16 %v1244
        %v1284 = vunpack.c.l.b16 %v1245
        %v1285 = vunpack.c.l.b16 %v1246
        %v1286 = vunpack.c.l.b16 %v1247
        %v1287 = vunpack.c.l.b16 %v1248
        %v1288 = vunpack.c.l.b16 %v1249
        %v1289 = vpack.c.b16 %v1274, %v1273
        %v1290 = vpack.c.b16 %v1276, %v1275
        %v1291 = vpack.c.b16 %v1278, %v1277
        %v1292 = vpack.c.b16 %v1280, %v1279
        %v1293 = vpack.c.b16 %v1282, %v1281
        %v1294 = vpack.c.b16 %v1284, %v1283
        %v1295 = vpack.c.b16 %v1286, %v1285
        %v1296 = vpack.c.b16 %v1288, %v1287
        %1305 = vmatprep.subr.bf16.mxu0 0
        %1306 = vmatpush1.bf16.msra.mxu0 %v1289
        %1307 = vmatprep.subr.bf16.mxu0 0
        %1308 = vmatpush1.bf16.msra.mxu0 %v1290
        %1309 = vmatprep.subr.bf16.mxu0 0
        %1310 = vmatpush1.bf16.msra.mxu0 %v1291
        %1311 = vmatprep.subr.bf16.mxu0 0
        %1312 = vmatpush1.bf16.msra.mxu0 %v1292
        %1313 = vmatprep.subr.bf16.mxu0 0
        %1314 = vmatpush1.bf16.msra.mxu0 %v1293
        %1315 = vmatprep.subr.bf16.mxu0 0
        %1316 = vmatpush1.bf16.msra.mxu0 %v1294
        %1317 = vmatprep.subr.bf16.mxu0 0
        %1318 = vmatpush1.bf16.msra.mxu0 %v1295
        %1319 = vmatprep.subr.bf16.mxu0 0
        %1320 = vmatpush1.bf16.msra.mxu0 %v1296
        %1321 = vmatprep.subr.bf16.mxu0 0
        %1322 = vmatpush1.bf16.msra.mxu0 0
        %1323 = vmatprep.subr.bf16.mxu0 0
        %1324 = vmatpush1.bf16.msra.mxu0 0
        %1325 = vmatprep.subr.bf16.mxu0 0
        %1326 = vmatpush1.bf16.msra.mxu0 0
        %1327 = vmatprep.subr.bf16.mxu0 0
        %1328 = vmatpush1.bf16.msra.mxu0 0
        %1329 = vmatprep.subr.bf16.mxu0 0
        %1330 = vmatpush1.bf16.msra.mxu0 0
        %1331 = vmatprep.subr.bf16.mxu0 0
        %1332 = vmatpush1.bf16.msra.mxu0 0
        %1333 = vmatprep.subr.bf16.mxu0 0
        %1334 = vmatpush1.bf16.msra.mxu0 0
        %1335 = vmatprep.subr.bf16.mxu0 0
        %1336 = vmatpush1.bf16.msra.mxu0 0
        %1337 = vmatprep.mubr.bf16.mxu0 0
        %1338 = vmatmul.mubr.bf16.gmra.mrb[0].mxu0 %v1226
        %v1339 = vpop.f32.mrb[0].mxu0
        %v1340 = vadd.f32 %v1255, %v1339
        %v1341 = vpop.f32.mrb[0].mxu0
        %v1342 = vpop.f32.mrb[0].mxu0
        %v1343 = vadd.f32 %v1255, %v1342
        %v1344 = vpop.f32.mrb[0].mxu0
        %1345 = vmatprep.mubr.bf16.mxu0 0
        %1346 = vmatmul.mubr.bf16.gmra.mrb[0].mxu0 %v1227
        %v1347 = vpop.f32.mrb[0].mxu0
        %v1348 = vadd.f32 %v1255, %v1347
        %v1349 = vpop.f32.mrb[0].mxu0
        %v1350 = vpop.f32.mrb[0].mxu0
        %v1351 = vadd.f32 %v1255, %v1350
        %v1352 = vpop.f32.mrb[0].mxu0
        %1353 = vmatprep.mubr.bf16.mxu0 0
        %1354 = vmatmul.mubr.bf16.gmra.mrb[0].mxu0 %v1228
        %v1355 = vpop.f32.mrb[0].mxu0
        %v1356 = vadd.f32 %v1255, %v1355
        %v1357 = vpop.f32.mrb[0].mxu0
        %v1358 = vpop.f32.mrb[0].mxu0
        %v1359 = vadd.f32 %v1255, %v1358
        %v1360 = vpop.f32.mrb[0].mxu0
        %1361 = vmatprep.mubr.bf16.mxu0 0
        %1362 = vmatmul.mubr.bf16.gmra.mrb[0].mxu0 %v1229
        %v1363 = vpop.f32.mrb[0].mxu0
        %v1364 = vadd.f32 %v1255, %v1363
        %v1365 = vpop.f32.mrb[0].mxu0
        %v1366 = vpop.f32.mrb[0].mxu0
        %v1367 = vadd.f32 %v1255, %v1366
        %v1368 = vpop.f32.mrb[0].mxu0
        %1369 = vmatprep.mubr.bf16.mxu0 0
        %1370 = vmatmul.mubr.bf16.gmra.mrb[0].mxu0 %v1230
        %v1371 = vpop.f32.mrb[0].mxu0
        %v1372 = vadd.f32 %v1255, %v1371
        %v1373 = vpop.f32.mrb[0].mxu0
        %v1374 = vpop.f32.mrb[0].mxu0
        %v1375 = vadd.f32 %v1255, %v1374
        %v1376 = vpop.f32.mrb[0].mxu0
        %1377 = vmatprep.mubr.bf16.mxu0 0
        %1378 = vmatmul.mubr.bf16.gmra.mrb[0].mxu0 %v1231
        %v1379 = vpop.f32.mrb[0].mxu0
        %v1380 = vadd.f32 %v1255, %v1379
        %v1381 = vpop.f32.mrb[0].mxu0
        %v1382 = vpop.f32.mrb[0].mxu0
        %v1383 = vadd.f32 %v1255, %v1382
        %v1384 = vpop.f32.mrb[0].mxu0
        %1385 = vmatprep.mubr.bf16.mxu0 0
        %1386 = vmatmul.mubr.bf16.gmra.mrb[0].mxu0 %v1232
        %v1387 = vpop.f32.mrb[0].mxu0
        %v1388 = vadd.f32 %v1255, %v1387
        %v1389 = vpop.f32.mrb[0].mxu0
        %v1390 = vpop.f32.mrb[0].mxu0
        %v1391 = vadd.f32 %v1255, %v1390
        %v1392 = vpop.f32.mrb[0].mxu0
        %1393 = vmatprep.mubr.bf16.mxu0 0
        %1394 = vmatmul.mubr.bf16.gmra.mrb[0].mxu0 %v1233
        %v1395 = vpop.f32.mrb[0].mxu0
        %v1396 = vadd.f32 %v1255, %v1395
        %v1397 = vpop.f32.mrb[0].mxu0
        %v1398 = vpop.f32.mrb[0].mxu0
        %v1399 = vadd.f32 %v1255, %v1398
        %v1400 = vpop.f32.mrb[0].mxu0
        %1401 = vdwg.mxu0
        %1402 = vst [vmem:[%s313] sm:$0xff] %v1340
        %1403 = vst [vmem:[%s313 + $0x8] sm:$0xff] %v1343
        %1404 = vst [vmem:[%s313 + $0x10] sm:$0xff] %v1348
        %1405 = vst [vmem:[%s313 + $0x18] sm:$0xff] %v1351
        %1406 = vst [vmem:[%s313 + $0x20] sm:$0xff] %v1356
        %1407 = vst [vmem:[%s313 + $0x28] sm:$0xff] %v1359
        %1408 = vst [vmem:[%s313 + $0x30] sm:$0xff] %v1364
        %1409 = vst [vmem:[%s313 + $0x38] sm:$0xff] %v1367
        %1410 = vst [vmem:[%s313 + $0x40] sm:$0xff] %v1372
        %1411 = vst [vmem:[%s313 + $0x48] sm:$0xff] %v1375
        %1412 = vst [vmem:[%s313 + $0x50] sm:$0xff] %v1380
        %1413 = vst [vmem:[%s313 + $0x58] sm:$0xff] %v1383
        %1414 = vst [vmem:[%s313 + $0x60] sm:$0xff] %v1388
        %1415 = vst [vmem:[%s313 + $0x68] sm:$0xff] %v1391
        %1416 = vst [vmem:[%s313 + $0x70] sm:$0xff] %v1396
        %1417 = vst [vmem:[%s313 + $0x78] sm:$0xff] %v1399
        %s1418 = sand.u32 %s164, 1
        %s1419 = scalar_lea.sflag [#allocation4], %s1418
        %s1420 = sand.u32 %s164, 1
        %s1421 = smul.addr %s1420, 128
        %s1422 = scalar_lea.vmem [#allocation10], %s1421
        // Predicated region
        $region61: #{tpu_custom_call.1} parent=43 // pred_check
          %p1423 = pneg %p174
        $region62: #{tpu_custom_call.1} parent=43 // pred_check_branch
          %1425 = sbr.rel (%p1423) target = $region64
        $region63: #{tpu_custom_call.1} parent=43 // pred_region
          %s1426 = smul.u32 16, %s25
          %s1428 = ssub.s32 2048, 2048
          %1429 = vsyncadd %s1419, %s1428
          %s1430 = smul.addr %s1426, 128
          %s1431 = scalar_lea.hbm %s6, %s1430
          %s1432 = sshll.u32 %s1422, 4
          %s1433 = int_to_ptr.vmem [resolvable:$true] %s1432
          %1438 = dma.vmem_to_hbm [thread:$0]  %s1433, 2048, %s1431, %s1419, 128, 128, 8
        $region64: #{tpu_custom_call.1} parent=43 // pred_fallthru
          _
      $region44: #{tpu_custom_call.1} parent=5 // pred_fallthru
        _
      %p1439 = scmp.le.s32.totalorder 2, %s20
      // Predicated region
      $region65: #{tpu_custom_call.1} parent=5 // pred_check
        %p1440 = pneg %p1439
      $region66: #{tpu_custom_call.1} parent=5 // pred_check_branch
        %1442 = sbr.rel (%p1440) target = $region68
      $region67: #{tpu_custom_call.1} parent=5 // pred_region
        %s1443 = ssub.s32 %s20, 2
        // Predicated region
        $region69: #{tpu_custom_call.1} parent=67 // pred_check
          %p1444 = pneg %p180
        $region70: #{tpu_custom_call.1} parent=67 // pred_check_branch
          %1446 = sbr.rel (%p1444) target = $region72
        $region71: #{tpu_custom_call.1} parent=67 // pred_region
          %s1447 = sand.u32 %s165, 1
          %s1448 = scalar_lea.sflag [#allocation4], %s1447
          %s1449 = sand.u32 %s165, 1
          %s1450 = smul.addr %s1449, 128
          %s1451 = scalar_lea.vmem [#allocation10], %s1450
          %1452 = dma.done %s1448, 2048
        $region72: #{tpu_custom_call.1} parent=67 // pred_fallthru
          _
      $region68: #{tpu_custom_call.1} parent=5 // pred_fallthru
        _
    $region6: #{tpu_custom_call.1} parent=1 // loop_footer
      %s24 = sadd.s32 1, %s20
    $region7: #{tpu_custom_call.1} parent=1 // loop_footer_branch
      %19 = sbr.rel target = $region3
    $region8: #{tpu_custom_call.1} parent=1 // loop_exit
      _
    %1453 = vsyncpa [#allocation3], 1
    %s1454 = scalar_lea.sflag [#allocation3], 1
    %1455 = vsyncpa %s1454, 1
    %1456 = vsyncpa [#allocation6], 1
    %1457 = vsyncpa [#allocation9], 1
    %1458 = vsyncpa [#allocation4], 1
    %s1459 = scalar_lea.sflag [#allocation4], 1
    %1460 = vsyncpa %s1459, 1

// kernel: tpu_custom_call.1
$region0: #{tpu_custom_call.1}
  #allocation0 [shape = 'u32[]', space=smem, size = 0x4, offset = 0x4, fixed_abs, tag = 'smem constant byte address 0x4 - core index']
  #allocation1 [shape = 'u32[144,128]{1,0:T(1,128)}', space=vmem, size = 0x12000, scoped, tag = 'internal scratch']
  %s0 = inlined_call_operand.hbm [shape: bf16[256,128], index: 0, kind: input, shape index: {}]
  %s1 = inlined_call_operand.hbm [shape: bf16[128,128], index: 1, kind: input, shape index: {}]
  %s2 = inlined_call_operand.hbm [shape: bf16[128,128], index: 2, kind: input, shape index: {}]
  %s3 = inlined_call_operand.vmem [shape: f32[8,128], index: 3, kind: input, shape index: {}]
  %s4 = inlined_call_operand.hbm [shape: bf16[128,128], index: 4, kind: input, shape index: {}]
  %s5 = inlined_call_operand.vmem [shape: f32[1,128], index: 5, kind: input, shape index: {}]
  %s6 = inlined_call_operand.hbm [shape: f32[256,128], index: 6, kind: output, shape index: {}]
  %s7 = sld [smem:[#allocation0]]
  $region73: #{tpu_custom_call.1} parent=0
    _
  %s9 = ssub.s32 1, %s7
  %s10 = scalar_select 0, %s9, %s7
  $region1: #{tpu_custom_call.1} parent=0
    #allocation2 [shape = 'u8[65536]{0}', space=vmem, size = 0x10000, scoped, tag = 'input window, operand 0']
    #allocation3 [shape = 's32[2]{0}', space=sflag, size = 0x8, scoped, tag = 'scoped memory for tpu_custom_call.1']
    #allocation4 [shape = 's32[2]{0}', space=sflag, size = 0x8, scoped, tag = 'scoped memory for tpu_custom_call.1']
    #allocation5 [shape = 'u8[32768]{0}', space=vmem, size = 0x8000, scoped, tag = 'input window, operand 1, single buffered']
    #allocation6 [shape = 's32[1]{0}', space=sflag, size = 0x4, scoped, tag = 'scoped memory for tpu_custom_call.1']
    #allocation7 [shape = 'u8[32768]{0}', space=vmem, size = 0x8000, scoped, tag = 'input window, operand 2, single buffered']
    #allocation8 [shape = 'u8[32768]{0}', space=vmem, size = 0x8000, scoped, tag = 'input window, operand 4, single buffered']
    #allocation9 [shape = 's32[1]{0}', space=sflag, size = 0x4, scoped, tag = 'scoped memory for tpu_custom_call.1']
    #allocation10 [shape = 'u8[131072]{0}', space=vmem, size = 0x20000, scoped, tag = 'output window, operand 0']
    %11 = vsyncpa [#allocation3], 0
    %s12 = scalar_lea.sflag [#allocation3], 1
    %13 = vsyncpa %s12, 0
    %14 = vsyncpa [#allocation6], 0
    %15 = vsyncpa [#allocation9], 0
    %16 = vsyncpa [#allocation4], 0
    %s17 = scalar_lea.sflag [#allocation4], 1
    %18 = vsyncpa %s17, 0
    loop: start=0, step=1, limit=4
    $region2: #{tpu_custom_call.1} parent=1 // loop_pre_header
      _
    $region3: #{tpu_custom_call.1} parent=1 // loop_header
      %s20 = sphi 0, %s24
      %p21 = scmp.ge.s32.totalorder %s20, 4
      %s30 = sphi 0, %s32
      %s33 = sphi 0, %s30
      %s34 = sphi 0, %s33
      %s50 = sphi 0, %s34
      %s54 = sphi 0, %s54
      %s56 = sphi 0, %s54
      %s57 = sphi 0, %s56
      %s71 = sphi 0, %s57
      %s75 = sphi 0, %s75
      %s77 = sphi 0, %s75
      %s78 = sphi 0, %s77
      %s92 = sphi 0, %s78
      %s96 = sphi 0, %s96
      %s98 = sphi 0, %s96
      %s99 = sphi 0, %s98
      %s113 = sphi 0, %s99
      %s117 = sphi 0, %s117
      %s119 = sphi 0, %s117
      %s120 = sphi 0, %s119
      %s134 = sphi 0, %s120
      %s138 = sphi 0, %s138
      %s140 = sphi 0, %s138
      %s141 = sphi 0, %s140
      %s155 = sphi 0, %s141
      %s161 = sphi 0, %s163
      %s164 = sphi 0, %s161
      %s165 = sphi 0, %s164
      %s181 = sphi 0, %s165
    $region4: #{tpu_custom_call.1} parent=1 // loop_header_branch
      %23 = sbr.rel (%p21) target = $region8
    $region5: #{tpu_custom_call.1} parent=1 // loop_body
      %s25 = ssub.s32 %s20, 1
      %s26 = ssub.s32 %s20, 2
      %s27 = sadd.s32 %s20, 1
      %s28 = ssub.s32 %s20, %s27
      %p29 = scmp.eq.s32.totalorder %s28, 0
      %s31 = sadd.s32 %s30, 1
      %s32 = scalar_select %p29, %s30, %s31
      %p35 = pneg %p29
      %p36 = scmp.eq.s32.totalorder %s20, 1
      %p37 = por %p35, %p36
      %p38 = scmp.ne.s32.totalorder %s30, %s33
      %p39 = scmp.eq.s32.totalorder %s20, 0
      %p40 = por %p38, %p39
      %p41 = scmp.ne.s32.totalorder %s30, %s33
      %p42 = scmp.eq.s32.totalorder %s25, 1
      %p43 = por %p41, %p42
      %p44 = scmp.ne.s32.totalorder %s33, %s34
      %p45 = scmp.eq.s32.totalorder %s25, 0
      %p46 = por %p44, %p45
      %p47 = scmp.ne.s32.totalorder %s33, %s34
      %p48 = scmp.eq.s32.totalorder %s26, 1
      %p49 = por %p47, %p48
      %p51 = scmp.ne.s32.totalorder %s34, %s50
      %p52 = scmp.eq.s32.totalorder %s26, 0
      %p53 = por %p51, %p52
      %s55 = sadd.s32 %s54, 1
      %p58 = scmp.eq.s32.totalorder %s20, 1
      %p59 = scmp.ne.s32.totalorder %s54, %s56
      %p60 = scmp.eq.s32.totalorder %s20, 0
      %p61 = por %p59, %p60
      %p62 = scmp.ne.s32.totalorder %s54, %s56
      %p63 = scmp.eq.s32.totalorder %s25, 1
      %p64 = por %p62, %p63
      %p65 = scmp.ne.s32.totalorder %s56, %s57
      %p66 = scmp.eq.s32.totalorder %s25, 0
      %p67 = por %p65, %p66
      %p68 = scmp.ne.s32.totalorder %s56, %s57
      %p69 = scmp.eq.s32.totalorder %s26, 1
      %p70 = por %p68, %p69
      %p72 = scmp.ne.s32.totalorder %s57, %s71
      %p73 = scmp.eq.s32.totalorder %s26, 0
      %p74 = por %p72, %p73
      %s76 = sadd.s32 %s75, 1
      %p79 = scmp.eq.s32.totalorder %s20, 1
      %p80 = scmp.ne.s32.totalorder %s75, %s77
      %p81 = scmp.eq.s32.totalorder %s20, 0
      %p82 = por %p80, %p81
      %p83 = scmp.ne.s32.totalorder %s75, %s77
      %p84 = scmp.eq.s32.totalorder %s25, 1
      %p85 = por %p83, %p84
      %p86 = scmp.ne.s32.totalorder %s77, %s78
      %p87 = scmp.eq.s32.totalorder %s25, 0
      %p88 = por %p86, %p87
      %p89 = scmp.ne.s32.totalorder %s77, %s78
      %p90 = scmp.eq.s32.totalorder %s26, 1
      %p91 = por %p89, %p90
      %p93 = scmp.ne.s32.totalorder %s78, %s92
      %p94 = scmp.eq.s32.totalorder %s26, 0
      %p95 = por %p93, %p94
      %s97 = sadd.s32 %s96, 1
      %p100 = scmp.eq.s32.totalorder %s20, 1
      %p101 = scmp.ne.s32.totalorder %s96, %s98
      %p102 = scmp.eq.s32.totalorder %s20, 0
      %p103 = por %p101, %p102
      %p104 = scmp.ne.s32.totalorder %s96, %s98
      %p105 = scmp.eq.s32.totalorder %s25, 1
      %p106 = por %p104, %p105
      %p107 = scmp.ne.s32.totalorder %s98, %s99
      %p108 = scmp.eq.s32.totalorder %s25, 0
      %p109 = por %p107, %p108
      %p110 = scmp.ne.s32.totalorder %s98, %s99
      %p111 = scmp.eq.s32.totalorder %s26, 1
      %p112 = por %p110, %p111
      %p114 = scmp.ne.s32.totalorder %s99, %s113
      %p115 = scmp.eq.s32.totalorder %s26, 0
      %p116 = por %p114, %p115
      %s118 = sadd.s32 %s117, 1
      %p121 = scmp.eq.s32.totalorder %s20, 1
      %p122 = scmp.ne.s32.totalorder %s117, %s119
      %p123 = scmp.eq.s32.totalorder %s20, 0
      %p124 = por %p122, %p123
      %p125 = scmp.ne.s32.totalorder %s117, %s119
      %p126 = scmp.eq.s32.totalorder %s25, 1
      %p127 = por %p125, %p126
      %p128 = scmp.ne.s32.totalorder %s119, %s120
      %p129 = scmp.eq.s32.totalorder %s25, 0
      %p130 = por %p128, %p129
      %p131 = scmp.ne.s32.totalorder %s119, %s120
      %p132 = scmp.eq.s32.totalorder %s26, 1
      %p133 = por %p131, %p132
      %p135 = scmp.ne.s32.totalorder %s120, %s134
      %p136 = scmp.eq.s32.totalorder %s26, 0
      %p137 = por %p135, %p136
      %s139 = sadd.s32 %s138, 1
      %p142 = scmp.eq.s32.totalorder %s20, 1
      %p143 = scmp.ne.s32.totalorder %s138, %s140
      %p144 = scmp.eq.s32.totalorder %s20, 0
      %p145 = por %p143, %p144
      %p146 = scmp.ne.s32.totalorder %s138, %s140
      %p147 = scmp.eq.s32.totalorder %s25, 1
      %p148 = por %p146, %p147
      %p149 = scmp.ne.s32.totalorder %s140, %s141
      %p150 = scmp.eq.s32.totalorder %s25, 0
      %p151 = por %p149, %p150
      %p152 = scmp.ne.s32.totalorder %s140, %s141
      %p153 = scmp.eq.s32.totalorder %s26, 1
      %p154 = por %p152, %p153
      %p156 = scmp.ne.s32.totalorder %s141, %s155
      %p157 = scmp.eq.s32.totalorder %s26, 0
      %p158 = por %p156, %p157
      %s159 = ssub.s32 %s20, %s27
      %p160 = scmp.eq.s32.totalorder %s159, 0
      %s162 = sadd.s32 %s161, 1
      %s163 = scalar_select %p160, %s161, %s162
      %p166 = pneg %p160
      %p167 = scmp.eq.s32.totalorder %s20, 1
      %p168 = por %p166, %p167
      %p169 = scmp.ne.s32.totalorder %s161, %s164
      %p170 = scmp.eq.s32.totalorder %s20, 0
      %p171 = por %p169, %p170
      %p172 = scmp.ne.s32.totalorder %s161, %s164
      %p173 = scmp.eq.s32.totalorder %s25, 1
      %p174 = por %p172, %p173
      %p175 = scmp.ne.s32.totalorder %s164, %s165
      %p176 = scmp.eq.s32.totalorder %s25, 0
      %p177 = por %p175, %p176
      %p178 = scmp.ne.s32.totalorder %s164, %s165
      %p179 = scmp.eq.s32.totalorder %s26, 1
      %p180 = por %p178, %p179
      %p182 = scmp.ne.s32.totalorder %s165, %s181
      %p183 = scmp.eq.s32.totalorder %s26, 0
      %p184 = por %p182, %p183
      %p185 = scmp.le.s32.totalorder 1, %s20
      %p186 = scmp.lt.s32.totalorder %s20, 3
      %p187 = pnand %p185, %p186
      %p188 = pneg %p187
      // Predicated region
      $region9: #{tpu_custom_call.1} parent=5 // pred_check
        _
      $region10: #{tpu_custom_call.1} parent=5 // pred_check_branch
        %190 = sbr.rel (%p187) target = $region12
      $region11: #{tpu_custom_call.1} parent=5 // pred_region
        %s191 = ssub.s32 %s20, 1
        // Predicated region
        $region13: #{tpu_custom_call.1} parent=11 // pred_check
          %p192 = pneg %p67
        $region14: #{tpu_custom_call.1} parent=11 // pred_check_branch
          %194 = sbr.rel (%p192) target = $region16
        $region15: #{tpu_custom_call.1} parent=11 // pred_region
          %s196 = ssub.s32 1024, 1024
          %197 = vsyncadd [#allocation6], %s196
          %s198 = sshll.u32 [#allocation5], 4
          %s199 = int_to_ptr.vmem [resolvable:$true] %s198
          %204 = dma.hbm_to_vmem [thread:$0]  %s1, 1024, %s199, [#allocation6], 64, 64, 4
        $region16: #{tpu_custom_call.1} parent=11 // pred_fallthru
          _
        // Predicated region
        $region17: #{tpu_custom_call.1} parent=11 // pred_check
          %p205 = pneg %p88
        $region18: #{tpu_custom_call.1} parent=11 // pred_check_branch
          %207 = sbr.rel (%p205) target = $region20
        $region19: #{tpu_custom_call.1} parent=11 // pred_region
          %s209 = ssub.s32 1024, 1024
          %210 = vsyncadd [#allocation6], %s209
          %s211 = sshll.u32 [#allocation7], 4
          %s212 = int_to_ptr.vmem [resolvable:$true] %s211
          %217 = dma.hbm_to_vmem [thread:$0]  %s2, 1024, %s212, [#allocation6], 64, 64, 4
        $region20: #{tpu_custom_call.1} parent=11 // pred_fallthru
          _
        // Predicated region
        $region21: #{tpu_custom_call.1} parent=11 // pred_check
          %p218 = pneg %p109
        $region22: #{tpu_custom_call.1} parent=11 // pred_check_branch
          %220 = sbr.rel (%p218) target = $region24
        $region23: #{tpu_custom_call.1} parent=11 // pred_region
          _
        $region24: #{tpu_custom_call.1} parent=11 // pred_fallthru
          _
        // Predicated region
        $region25: #{tpu_custom_call.1} parent=11 // pred_check
          %p221 = pneg %p130
        $region26: #{tpu_custom_call.1} parent=11 // pred_check_branch
          %223 = sbr.rel (%p221) target = $region28
        $region27: #{tpu_custom_call.1} parent=11 // pred_region
          %s225 = ssub.s32 1024, 1024
          %226 = vsyncadd [#allocation9], %s225
          %s227 = sshll.u32 [#allocation8], 4
          %s228 = int_to_ptr.vmem [resolvable:$true] %s227
          %233 = dma.hbm_to_vmem [thread:$0]  %s4, 1024, %s228, [#allocation9], 64, 64, 4
        $region28: #{tpu_custom_call.1} parent=11 // pred_fallthru
          _
        // Predicated region
        $region29: #{tpu_custom_call.1} parent=11 // pred_check
          %p234 = pneg %p151
        $region30: #{tpu_custom_call.1} parent=11 // pred_check_branch
          %236 = sbr.rel (%p234) target = $region32
        $region31: #{tpu_custom_call.1} parent=11 // pred_region
          _
        $region32: #{tpu_custom_call.1} parent=11 // pred_fallthru
          _
      $region12: #{tpu_custom_call.1} parent=5 // pred_fallthru
        _
      %p237 = scmp.lt.s32.totalorder %s20, 2
      // Predicated region
      $region33: #{tpu_custom_call.1} parent=5 // pred_check
        %p238 = pneg %p237
      $region34: #{tpu_custom_call.1} parent=5 // pred_check_branch
        %240 = sbr.rel (%p238) target = $region36
      $region35: #{tpu_custom_call.1} parent=5 // pred_region
        // Predicated region
        $region37: #{tpu_custom_call.1} parent=35 // pred_check
          %p241 = pneg %p40
        $region38: #{tpu_custom_call.1} parent=35 // pred_check_branch
          %243 = sbr.rel (%p241) target = $region40
        $region39: #{tpu_custom_call.1} parent=35 // pred_region
          %s244 = sand.u32 %s30, 1
          %s245 = scalar_lea.sflag [#allocation3], %s244
          %s246 = sand.u32 %s30, 1
          %s247 = smul.addr %s246, 64
          %s248 = scalar_lea.vmem [#allocation2], %s247
          %s249 = smul.u32 16, %s20
          %s251 = ssub.s32 1024, 1024
          %252 = vsyncadd %s245, %s251
          %s253 = smul.addr %s249, 64
          %s254 = scalar_lea.hbm %s0, %s253
          %s255 = sshll.u32 %s248, 4
          %s256 = int_to_ptr.vmem [resolvable:$true] %s255
          %261 = dma.hbm_to_vmem [thread:$0]  %s254, 1024, %s256, %s245, 64, 64, 4
        $region40: #{tpu_custom_call.1} parent=35 // pred_fallthru
          _
      $region36: #{tpu_custom_call.1} parent=5 // pred_fallthru
        _
      %p262 = scmp.le.s32.totalorder 1, %s20
      %p263 = scmp.lt.s32.totalorder %s20, 3
      %p264 = pnand %p262, %p263
      %p265 = pneg %p264
      // Predicated region
      $region41: #{tpu_custom_call.1} parent=5 // pred_check
        _
      $region42: #{tpu_custom_call.1} parent=5 // pred_check_branch
        %267 = sbr.rel (%p264) target = $region44
      $region43: #{tpu_custom_call.1} parent=5 // pred_region
        %s268 = ssub.s32 %s20, 1
        %s269 = sand.u32 %s33, 1
        %s270 = scalar_lea.sflag [#allocation3], %s269
        %s271 = sand.u32 %s33, 1
        %s272 = smul.addr %s271, 64
        %s273 = scalar_lea.vmem [#allocation2], %s272
        // Predicated region
        $region45: #{tpu_custom_call.1} parent=43 // pred_check
          %p274 = pneg %p46
        $region46: #{tpu_custom_call.1} parent=43 // pred_check_branch
          %276 = sbr.rel (%p274) target = $region48
        $region47: #{tpu_custom_call.1} parent=43 // pred_region
          %277 = dma.done %s270, 1024
        $region48: #{tpu_custom_call.1} parent=43 // pred_fallthru
          _
        // Predicated region
        $region49: #{tpu_custom_call.1} parent=43 // pred_check
          %p278 = pneg %p67
        $region50: #{tpu_custom_call.1} parent=43 // pred_check_branch
          %280 = sbr.rel (%p278) target = $region52
        $region51: #{tpu_custom_call.1} parent=43 // pred_region
          %281 = dma.done [#allocation6], 1024
        $region52: #{tpu_custom_call.1} parent=43 // pred_fallthru
          _
        // Predicated region
        $region53: #{tpu_custom_call.1} parent=43 // pred_check
          %p282 = pneg %p88
        $region54: #{tpu_custom_call.1} parent=43 // pred_check_branch
          %284 = sbr.rel (%p282) target = $region56
        $region55: #{tpu_custom_call.1} parent=43 // pred_region
          %285 = dma.done [#allocation6], 1024
        $region56: #{tpu_custom_call.1} parent=43 // pred_fallthru
          _
        // Predicated region
        $region57: #{tpu_custom_call.1} parent=43 // pred_check
          %p286 = pneg %p130
        $region58: #{tpu_custom_call.1} parent=43 // pred_check_branch
          %288 = sbr.rel (%p286) target = $region60
        $region59: #{tpu_custom_call.1} parent=43 // pred_region
          %289 = dma.done [#allocation9], 1024
        $region60: #{tpu_custom_call.1} parent=43 // pred_fallthru
          _
        %s290 = sand.u32 %s33, 1
        %s291 = scalar_lea.sflag [#allocation3], %s290
        %s292 = sand.u32 %s33, 1
        %s293 = smul.addr %s292, 64
        %s294 = scalar_lea.vmem [#allocation2], %s293
        %p295 = pneg %p46
        %p296 = pneg %p43
        %p297 = pneg %p67
        %p298 = pneg %p64
        %p299 = pneg %p88
        %p300 = pneg %p85
        %p301 = pneg %p109
        %p302 = pneg %p106
        %p303 = pneg %p130
        %p304 = pneg %p127
        %p305 = pneg %p151
        %p306 = pneg %p148
        %p307 = pneg %p177
        %p308 = pneg %p174
        %s309 = sand.u32 %s164, 1
        %s310 = scalar_lea.sflag [#allocation4], %s309
        %s311 = sand.u32 %s164, 1
        %s312 = smul.addr %s311, 128
        %s313 = scalar_lea.vmem [#allocation10], %s312
        %s314 = smul.u32 16, %s25
        %s315 = smul.u32 16, %s25
        %v317 = vlaneseq
        %v318 = vand.u32 %v317, 127
        %vm319 = vcmp.lt.s32.totalorder %v318, 64
        %v320 = vsel %vm319, 1, 0
        %v321 = vcvt.s32.f32 %v320
        %v322 = vld [vmem:[%s273] sm:$0xf]
        %v323 = vld [vmem:[%s273 + $0x4] sm:$0xf]
        %v324 = vld [vmem:[%s273 + $0x8] sm:$0xf]
        %v325 = vld [vmem:[%s273 + $0xc] sm:$0xf]
        %v326 = vld [vmem:[%s273 + $0x10] sm:$0xf]
        %v327 = vld [vmem:[%s273 + $0x14] sm:$0xf]
        %v328 = vld [vmem:[%s273 + $0x18] sm:$0xf]
        %v329 = vld [vmem:[%s273 + $0x1c] sm:$0xf]
        %v330 = vld [vmem:[%s273 + $0x20] sm:$0xf]
        %v331 = vld [vmem:[%s273 + $0x24] sm:$0xf]
        %v332 = vld [vmem:[%s273 + $0x28] sm:$0xf]
        %v333 = vld [vmem:[%s273 + $0x2c] sm:$0xf]
        %v334 = vld [vmem:[%s273 + $0x30] sm:$0xf]
        %v335 = vld [vmem:[%s273 + $0x34] sm:$0xf]
        %v336 = vld [vmem:[%s273 + $0x38] sm:$0xf]
        %v337 = vld [vmem:[%s273 + $0x3c] sm:$0xf]
        %v338 = vld [vmem:[%s3] sm:$0x1]
        %v339 = vld [vmem:[%s3 + $0x1] sm:$0x1]
        %v340 = vld [vmem:[%s3 + $0x2] sm:$0x1]
        %v341 = vld [vmem:[#allocation5] sm:$0xf]
        %v342 = vld [vmem:[#allocation5 + $0x4] sm:$0xf]
        %v343 = vld [vmem:[#allocation5 + $0x8] sm:$0xf]
        %v344 = vld [vmem:[#allocation5 + $0xc] sm:$0xf]
        %v345 = vld [vmem:[#allocation5 + $0x10] sm:$0xf]
        %v346 = vld [vmem:[#allocation5 + $0x14] sm:$0xf]
        %v347 = vld [vmem:[#allocation5 + $0x18] sm:$0xf]
        %v348 = vld [vmem:[#allocation5 + $0x1c] sm:$0xf]
        %v349 = vld [vmem:[#allocation5 + $0x20] sm:$0xf]
        %v350 = vld [vmem:[#allocation5 + $0x24] sm:$0xf]
        %v351 = vld [vmem:[#allocation5 + $0x28] sm:$0xf]
        %v352 = vld [vmem:[#allocation5 + $0x2c] sm:$0xf]
        %v353 = vld [vmem:[#allocation5 + $0x30] sm:$0xf]
        %v354 = vld [vmem:[#allocation5 + $0x34] sm:$0xf]
        %v355 = vld [vmem:[#allocation5 + $0x38] sm:$0xf]
        %v356 = vld [vmem:[#allocation5 + $0x3c] sm:$0xf]
        %v357 = vlaneseq
        %v358 = vshrl.u32 %v357, 7
        %v359 = vsub.s32 0, %v358
        %v360 = vrot.slane %v338, %v359
        %v377 = vunpack.c.l.b16 %v322
        %v378 = vunpack.c.l.b16 %v323
        %v379 = vunpack.c.l.b16 %v324
        %v380 = vunpack.c.l.b16 %v325
        %v381 = vunpack.c.l.b16 %v326
        %v382 = vunpack.c.l.b16 %v327
        %v383 = vunpack.c.l.b16 %v328
        %v384 = vunpack.c.l.b16 %v329
        %v385 = vunpack.c.l.b16 %v330
        %v386 = vunpack.c.l.b16 %v331
        %v387 = vunpack.c.l.b16 %v332
        %v388 = vunpack.c.l.b16 %v333
        %v389 = vunpack.c.l.b16 %v334
        %v390 = vunpack.c.l.b16 %v335
        %v391 = vunpack.c.l.b16 %v336
        %v392 = vunpack.c.l.b16 %v337
        %v393 = vpack.c.b16 %v378, %v377
        %v394 = vpack.c.b16 %v380, %v379
        %v395 = vpack.c.b16 %v382, %v381
        %v396 = vpack.c.b16 %v384, %v383
        %v397 = vpack.c.b16 %v386, %v385
        %v398 = vpack.c.b16 %v388, %v387
        %v399 = vpack.c.b16 %v390, %v389
        %v400 = vpack.c.b16 %v392, %v391
        %v425 = vunpack.c.l.b16 %v341
        %v426 = vunpack.c.l.b16 %v342
        %v427 = vunpack.c.l.b16 %v343
        %v428 = vunpack.c.l.b16 %v344
        %v429 = vunpack.c.l.b16 %v345
        %v430 = vunpack.c.l.b16 %v346
        %v431 = vunpack.c.l.b16 %v347
        %v432 = vunpack.c.l.b16 %v348
        %v433 = vunpack.c.l.b16 %v349
        %v434 = vunpack.c.l.b16 %v350
        %v435 = vunpack.c.l.b16 %v351
        %v436 = vunpack.c.l.b16 %v352
        %v437 = vunpack.c.l.b16 %v353
        %v438 = vunpack.c.l.b16 %v354
        %v439 = vunpack.c.l.b16 %v355
        %v440 = vunpack.c.l.b16 %v356
        %v441 = vpack.c.b16 %v426, %v425
        %v442 = vpack.c.b16 %v428, %v427
        %v443 = vpack.c.b16 %v430, %v429
        %v444 = vpack.c.b16 %v432, %v431
        %v445 = vpack.c.b16 %v434, %v433
        %v446 = vpack.c.b16 %v436, %v435
        %v447 = vpack.c.b16 %v438, %v437
        %v448 = vpack.c.b16 %v440, %v439
        %457 = vmatprep.subr.bf16.mxu0 0
        %458 = vmatpush1.bf16.msra.mxu0 %v441
        %459 = vmatprep.subr.bf16.mxu0 0
        %460 = vmatpush1.bf16.msra.mxu0 %v442
        %461 = vmatprep.subr.bf16.mxu0 0
        %462 = vmatpush1.bf16.msra.mxu0 %v443
        %463 = vmatprep.subr.bf16.mxu0 0
        %464 = vmatpush1.bf16.msra.mxu0 %v444
        %465 = vmatprep.subr.bf16.mxu0 0
        %466 = vmatpush1.bf16.msra.mxu0 %v445
        %467 = vmatprep.subr.bf16.mxu0 0
        %468 = vmatpush1.bf16.msra.mxu0 %v446
        %469 = vmatprep.subr.bf16.mxu0 0
        %470 = vmatpush1.bf16.msra.mxu0 %v447
        %471 = vmatprep.subr.bf16.mxu0 0
        %472 = vmatpush1.bf16.msra.mxu0 %v448
        %473 = vmatprep.subr.bf16.mxu0 0
        %474 = vmatpush1.bf16.msra.mxu0 0
        %475 = vmatprep.subr.bf16.mxu0 0
        %476 = vmatpush1.bf16.msra.mxu0 0
        %477 = vmatprep.subr.bf16.mxu0 0
        %478 = vmatpush1.bf16.msra.mxu0 0
        %479 = vmatprep.subr.bf16.mxu0 0
        %480 = vmatpush1.bf16.msra.mxu0 0
        %481 = vmatprep.subr.bf16.mxu0 0
        %482 = vmatpush1.bf16.msra.mxu0 0
        %483 = vmatprep.subr.bf16.mxu0 0
        %484 = vmatpush1.bf16.msra.mxu0 0
        %485 = vmatprep.subr.bf16.mxu0 0
        %486 = vmatpush1.bf16.msra.mxu0 0
        %487 = vmatprep.subr.bf16.mxu0 0
        %488 = vmatpush1.bf16.msra.mxu0 0
        %489 = vmatprep.mubr.bf16.mxu0 0
        %490 = vmatmul.mubr.bf16.gmra.mrb[0].mxu0 %v393
        %v491 = vpop.f32.mrb[0].mxu0
        %v492 = vadd.f32 %v360, %v491
        %v493 = vpop.f32.mrb[0].mxu0
        %v494 = vpop.f32.mrb[0].mxu0
        %v495 = vadd.f32 %v360, %v494
        %v496 = vpop.f32.mrb[0].mxu0
        %497 = vmatprep.mubr.bf16.mxu0 0
        %498 = vmatmul.mubr.bf16.gmra.mrb[0].mxu0 %v394
        %v499 = vpop.f32.mrb[0].mxu0
        %v500 = vadd.f32 %v360, %v499
        %v501 = vpop.f32.mrb[0].mxu0
        %v502 = vpop.f32.mrb[0].mxu0
        %v503 = vadd.f32 %v360, %v502
        %v504 = vpop.f32.mrb[0].mxu0
        %505 = vmatprep.mubr.bf16.mxu0 0
        %506 = vmatmul.mubr.bf16.gmra.mrb[0].mxu0 %v395
        %v507 = vpop.f32.mrb[0].mxu0
        %v508 = vadd.f32 %v360, %v507
        %v509 = vpop.f32.mrb[0].mxu0
        %v510 = vpop.f32.mrb[0].mxu0
        %v511 = vadd.f32 %v360, %v510
        %v512 = vpop.f32.mrb[0].mxu0
        %513 = vmatprep.mubr.bf16.mxu0 0
        %514 = vmatmul.mubr.bf16.gmra.mrb[0].mxu0 %v396
        %v515 = vpop.f32.mrb[0].mxu0
        %v516 = vadd.f32 %v360, %v515
        %v517 = vpop.f32.mrb[0].mxu0
        %v518 = vpop.f32.mrb[0].mxu0
        %v519 = vadd.f32 %v360, %v518
        %v520 = vpop.f32.mrb[0].mxu0
        %521 = vmatprep.mubr.bf16.mxu0 0
        %522 = vmatmul.mubr.bf16.gmra.mrb[0].mxu0 %v397
        %v523 = vpop.f32.mrb[0].mxu0
        %v524 = vadd.f32 %v360, %v523
        %v525 = vpop.f32.mrb[0].mxu0
        %v526 = vpop.f32.mrb[0].mxu0
        %v527 = vadd.f32 %v360, %v526
        %v528 = vpop.f32.mrb[0].mxu0
        %529 = vmatprep.mubr.bf16.mxu0 0
        %530 = vmatmul.mubr.bf16.gmra.mrb[0].mxu0 %v398
        %v531 = vpop.f32.mrb[0].mxu0
        %v532 = vadd.f32 %v360, %v531
        %v533 = vpop.f32.mrb[0].mxu0
        %v534 = vpop.f32.mrb[0].mxu0
        %v535 = vadd.f32 %v360, %v534
        %v536 = vpop.f32.mrb[0].mxu0
        %537 = vmatprep.mubr.bf16.mxu0 0
        %538 = vmatmul.mubr.bf16.gmra.mrb[0].mxu0 %v399
        %v539 = vpop.f32.mrb[0].mxu0
        %v540 = vadd.f32 %v360, %v539
        %v541 = vpop.f32.mrb[0].mxu0
        %v542 = vpop.f32.mrb[0].mxu0
        %v543 = vadd.f32 %v360, %v542
        %v544 = vpop.f32.mrb[0].mxu0
        %545 = vmatprep.mubr.bf16.mxu0 0
        %546 = vmatmul.mubr.bf16.gmra.mrb[0].mxu0 %v400
        %v547 = vpop.f32.mrb[0].mxu0
        %v548 = vadd.f32 %v360, %v547
        %v549 = vpop.f32.mrb[0].mxu0
        %v550 = vpop.f32.mrb[0].mxu0
        %v551 = vadd.f32 %v360, %v550
        %v552 = vpop.f32.mrb[0].mxu0
        %553 = vdwg.mxu0
        %554 = vadd.xlane.f32.xlu0 %v492
        %v555 = vpop.xlane.xlu0 %554
        %556 = vadd.xlane.f32.xlu0 %v495
        %v557 = vpop.xlane.xlu0 %556
        %558 = vadd.xlane.f32.xlu0 %v500
        %v559 = vpop.xlane.xlu0 %558
        %560 = vadd.xlane.f32.xlu0 %v503
        %v561 = vpop.xlane.xlu0 %560
        %562 = vadd.xlane.f32.xlu0 %v508
        %v563 = vpop.xlane.xlu0 %562
        %564 = vadd.xlane.f32.xlu0 %v511
        %v565 = vpop.xlane.xlu0 %564
        %566 = vadd.xlane.f32.xlu0 %v516
        %v567 = vpop.xlane.xlu0 %566
        %568 = vadd.xlane.f32.xlu0 %v519
        %v569 = vpop.xlane.xlu0 %568
        %570 = vadd.xlane.f32.xlu0 %v524
        %v571 = vpop.xlane.xlu0 %570
        %572 = vadd.xlane.f32.xlu0 %v527
        %v573 = vpop.xlane.xlu0 %572
        %574 = vadd.xlane.f32.xlu0 %v532
        %v575 = vpop.xlane.xlu0 %574
        %576 = vadd.xlane.f32.xlu0 %v535
        %v577 = vpop.xlane.xlu0 %576
        %578 = vadd.xlane.f32.xlu0 %v540
        %v579 = vpop.xlane.xlu0 %578
        %580 = vadd.xlane.f32.xlu0 %v543
        %v581 = vpop.xlane.xlu0 %580
        %582 = vadd.xlane.f32.xlu0 %v548
        %v583 = vpop.xlane.xlu0 %582
        %584 = vadd.xlane.f32.xlu0 %v551
        %v585 = vpop.xlane.xlu0 %584
        %v586 = vmul.f32 %v555, 0.015625
        %v587 = vmul.f32 %v557, 0.015625
        %v588 = vmul.f32 %v559, 0.015625
        %v589 = vmul.f32 %v561, 0.015625
        %v590 = vmul.f32 %v563, 0.015625
        %v591 = vmul.f32 %v565, 0.015625
        %v592 = vmul.f32 %v567, 0.015625
        %v593 = vmul.f32 %v569, 0.015625
        %v594 = vmul.f32 %v571, 0.015625
        %v595 = vmul.f32 %v573, 0.015625
        %v596 = vmul.f32 %v575, 0.015625
        %v597 = vmul.f32 %v577, 0.015625
        %v598 = vmul.f32 %v579, 0.015625
        %v599 = vmul.f32 %v581, 0.015625
        %v600 = vmul.f32 %v583, 0.015625
        %v601 = vmul.f32 %v585, 0.015625
        %v602 = vsub.f32 %v492, %v586
        %v603 = vsub.f32 %v495, %v587
        %v604 = vsub.f32 %v500, %v588
        %v605 = vsub.f32 %v503, %v589
        %v606 = vsub.f32 %v508, %v590
        %v607 = vsub.f32 %v511, %v591
        %v608 = vsub.f32 %v516, %v592
        %v609 = vsub.f32 %v519, %v593
        %v610 = vsub.f32 %v524, %v594
        %v611 = vsub.f32 %v527, %v595
        %v612 = vsub.f32 %v532, %v596
        %v613 = vsub.f32 %v535, %v597
        %v614 = vsub.f32 %v540, %v598
        %v615 = vsub.f32 %v543, %v599
        %v616 = vsub.f32 %v548, %v600
        %v617 = vsub.f32 %v551, %v601
        %v618 = vmul.f32 %v602, %v321
        %v619 = vmul.f32 %v603, %v321
        %v620 = vmul.f32 %v604, %v321
        %v621 = vmul.f32 %v605, %v321
        %v622 = vmul.f32 %v606, %v321
        %v623 = vmul.f32 %v607, %v321
        %v624 = vmul.f32 %v608, %v321
        %v625 = vmul.f32 %v609, %v321
        %v626 = vmul.f32 %v610, %v321
        %v627 = vmul.f32 %v611, %v321
        %v628 = vmul.f32 %v612, %v321
        %v629 = vmul.f32 %v613, %v321
        %v630 = vmul.f32 %v614, %v321
        %v631 = vmul.f32 %v615, %v321
        %v632 = vmul.f32 %v616, %v321
        %v633 = vmul.f32 %v617, %v321
        %v634 = vmul.f32 %v618, %v602
        %v635 = vmul.f32 %v619, %v603
        %v636 = vmul.f32 %v620, %v604
        %v637 = vmul.f32 %v621, %v605
        %v638 = vmul.f32 %v622, %v606
        %v639 = vmul.f32 %v623, %v607
        %v640 = vmul.f32 %v624, %v608
        %v641 = vmul.f32 %v625, %v609
        %v642 = vmul.f32 %v626, %v610
        %v643 = vmul.f32 %v627, %v611
        %v644 = vmul.f32 %v628, %v612
        %v645 = vmul.f32 %v629, %v613
        %v646 = vmul.f32 %v630, %v614
        %v647 = vmul.f32 %v631, %v615
        %v648 = vmul.f32 %v632, %v616
        %v649 = vmul.f32 %v633, %v617
        %650 = vadd.xlane.f32.xlu0 %v634
        %v651 = vpop.xlane.xlu0 %650
        %652 = vadd.xlane.f32.xlu0 %v635
        %v653 = vpop.xlane.xlu0 %652
        %654 = vadd.xlane.f32.xlu0 %v636
        %v655 = vpop.xlane.xlu0 %654
        %656 = vadd.xlane.f32.xlu0 %v637
        %v657 = vpop.xlane.xlu0 %656
        %658 = vadd.xlane.f32.xlu0 %v638
        %v659 = vpop.xlane.xlu0 %658
        %660 = vadd.xlane.f32.xlu0 %v639
        %v661 = vpop.xlane.xlu0 %660
        %662 = vadd.xlane.f32.xlu0 %v640
        %v663 = vpop.xlane.xlu0 %662
        %664 = vadd.xlane.f32.xlu0 %v641
        %v665 = vpop.xlane.xlu0 %664
        %666 = vadd.xlane.f32.xlu0 %v642
        %v667 = vpop.xlane.xlu0 %666
        %668 = vadd.xlane.f32.xlu0 %v643
        %v669 = vpop.xlane.xlu0 %668
        %670 = vadd.xlane.f32.xlu0 %v644
        %v671 = vpop.xlane.xlu0 %670
        %672 = vadd.xlane.f32.xlu0 %v645
        %v673 = vpop.xlane.xlu0 %672
        %674 = vadd.xlane.f32.xlu0 %v646
        %v675 = vpop.xlane.xlu0 %674
        %676 = vadd.xlane.f32.xlu0 %v647
        %v677 = vpop.xlane.xlu0 %676
        %678 = vadd.xlane.f32.xlu0 %v648
        %v679 = vpop.xlane.xlu0 %678
        %680 = vadd.xlane.f32.xlu0 %v649
        %v681 = vpop.xlane.xlu0 %680
        %v682 = vmul.f32 %v651, 0.015625
        %v683 = vmul.f32 %v653, 0.015625
        %v684 = vmul.f32 %v655, 0.015625
        %v685 = vmul.f32 %v657, 0.015625
        %v686 = vmul.f32 %v659, 0.015625
        %v687 = vmul.f32 %v661, 0.015625
        %v688 = vmul.f32 %v663, 0.015625
        %v689 = vmul.f32 %v665, 0.015625
        %v690 = vmul.f32 %v667, 0.015625
        %v691 = vmul.f32 %v669, 0.015625
        %v692 = vmul.f32 %v671, 0.015625
        %v693 = vmul.f32 %v673, 0.015625
        %v694 = vmul.f32 %v675, 0.015625
        %v695 = vmul.f32 %v677, 0.015625
        %v696 = vmul.f32 %v679, 0.015625
        %v697 = vmul.f32 %v681, 0.015625
        %v698 = vadd.f32 %v682, 1e-05
        %v699 = vadd.f32 %v683, 1e-05
        %v700 = vadd.f32 %v684, 1e-05
        %v701 = vadd.f32 %v685, 1e-05
        %v702 = vadd.f32 %v686, 1e-05
        %v703 = vadd.f32 %v687, 1e-05
        %v704 = vadd.f32 %v688, 1e-05
        %v705 = vadd.f32 %v689, 1e-05
        %v706 = vadd.f32 %v690, 1e-05
        %v707 = vadd.f32 %v691, 1e-05
        %v708 = vadd.f32 %v692, 1e-05
        %v709 = vadd.f32 %v693, 1e-05
        %v710 = vadd.f32 %v694, 1e-05
        %v711 = vadd.f32 %v695, 1e-05
        %v712 = vadd.f32 %v696, 1e-05
        %v713 = vadd.f32 %v697, 1e-05
        %v714 = vrsqrt.pop %v698
        %v715 = vrsqrt.pop %v699
        %v716 = vrsqrt.pop %v700
        %v717 = vrsqrt.pop %v701
        %v718 = vrsqrt.pop %v702
        %v719 = vrsqrt.pop %v703
        %v720 = vrsqrt.pop %v704
        %v721 = vrsqrt.pop %v705
        %v722 = vrsqrt.pop %v706
        %v723 = vrsqrt.pop %v707
        %v724 = vrsqrt.pop %v708
        %v725 = vrsqrt.pop %v709
        %v726 = vrsqrt.pop %v710
        %v727 = vrsqrt.pop %v711
        %v728 = vrsqrt.pop %v712
        %v729 = vrsqrt.pop %v713
        %v730 = vmul.f32 %v602, %v714
        %v731 = vmul.f32 %v603, %v715
        %v732 = vmul.f32 %v604, %v716
        %v733 = vmul.f32 %v605, %v717
        %v734 = vmul.f32 %v606, %v718
        %v735 = vmul.f32 %v607, %v719
        %v736 = vmul.f32 %v608, %v720
        %v737 = vmul.f32 %v609, %v721
        %v738 = vmul.f32 %v610, %v722
        %v739 = vmul.f32 %v611, %v723
        %v740 = vmul.f32 %v612, %v724
        %v741 = vmul.f32 %v613, %v725
        %v742 = vmul.f32 %v614, %v726
        %v743 = vmul.f32 %v615, %v727
        %v744 = vmul.f32 %v616, %v728
        %v745 = vmul.f32 %v617, %v729
        %v746 = vlaneseq
        %v747 = vshrl.u32 %v746, 7
        %v748 = vsub.s32 0, %v747
        %v749 = vrot.slane %v339, %v748
        %v750 = vmul.f32 %v730, %v749
        %v751 = vmul.f32 %v731, %v749
        %v752 = vmul.f32 %v732, %v749
        %v753 = vmul.f32 %v733, %v749
        %v754 = vmul.f32 %v734, %v749
        %v755 = vmul.f32 %v735, %v749
        %v756 = vmul.f32 %v736, %v749
        %v757 = vmul.f32 %v737, %v749
        %v758 = vmul.f32 %v738, %v749
        %v759 = vmul.f32 %v739, %v749
        %v760 = vmul.f32 %v740, %v749
        %v761 = vmul.f32 %v741, %v749
        %v762 = vmul.f32 %v742, %v749
        %v763 = vmul.f32 %v743, %v749
        %v764 = vmul.f32 %v744, %v749
        %v765 = vmul.f32 %v745, %v749
        %v766 = vlaneseq
        %v767 = vshrl.u32 %v766, 7
        %v768 = vsub.s32 0, %v767
        %v769 = vrot.slane %v340, %v768
        %v770 = vadd.f32 %v750, %v769
        %v771 = vadd.f32 %v751, %v769
        %v772 = vadd.f32 %v752, %v769
        %v773 = vadd.f32 %v753, %v769
        %v774 = vadd.f32 %v754, %v769
        %v775 = vadd.f32 %v755, %v769
        %v776 = vadd.f32 %v756, %v769
        %v777 = vadd.f32 %v757, %v769
        %v778 = vadd.f32 %v758, %v769
        %v779 = vadd.f32 %v759, %v769
        %v780 = vadd.f32 %v760, %v769
        %v781 = vadd.f32 %v761, %v769
        %v782 = vadd.f32 %v762, %v769
        %v783 = vadd.f32 %v763, %v769
        %v784 = vadd.f32 %v764, %v769
        %v785 = vadd.f32 %v765, %v769
        %v786 = vmax.f32 %v770, 0.0
        %v787 = vmax.f32 %v771, 0.0
        %v788 = vmax.f32 %v772, 0.0
        %v789 = vmax.f32 %v773, 0.0
        %v790 = vmax.f32 %v774, 0.0
        %v791 = vmax.f32 %v775, 0.0
        %v792 = vmax.f32 %v776, 0.0
        %v793 = vmax.f32 %v777, 0.0
        %v794 = vmax.f32 %v778, 0.0
        %v795 = vmax.f32 %v779, 0.0
        %v796 = vmax.f32 %v780, 0.0
        %v797 = vmax.f32 %v781, 0.0
        %v798 = vmax.f32 %v782, 0.0
        %v799 = vmax.f32 %v783, 0.0
        %v800 = vmax.f32 %v784, 0.0
        %v801 = vmax.f32 %v785, 0.0
        %v802 = vpack.c.bf16 %v787, %v786
        %v803 = vpack.c.bf16 %v789, %v788
        %v804 = vpack.c.bf16 %v791, %v790
        %v805 = vpack.c.bf16 %v793, %v792
        %v806 = vpack.c.bf16 %v795, %v794
        %v807 = vpack.c.bf16 %v797, %v796
        %v808 = vpack.c.bf16 %v799, %v798
        %v809 = vpack.c.bf16 %v801, %v800
        %v810 = vld [vmem:[%s3 + $0x3] sm:$0x1]
        %v811 = vld [vmem:[%s3 + $0x4] sm:$0x1]
        %v812 = vld [vmem:[%s3 + $0x5] sm:$0x1]
        %v813 = vld [vmem:[#allocation7] sm:$0xf]
        %v814 = vld [vmem:[#allocation7 + $0x4] sm:$0xf]
        %v815 = vld [vmem:[#allocation7 + $0x8] sm:$0xf]
        %v816 = vld [vmem:[#allocation7 + $0xc] sm:$0xf]
        %v817 = vld [vmem:[#allocation7 + $0x10] sm:$0xf]
        %v818 = vld [vmem:[#allocation7 + $0x14] sm:$0xf]
        %v819 = vld [vmem:[#allocation7 + $0x18] sm:$0xf]
        %v820 = vld [vmem:[#allocation7 + $0x1c] sm:$0xf]
        %v821 = vld [vmem:[#allocation7 + $0x20] sm:$0xf]
        %v822 = vld [vmem:[#allocation7 + $0x24] sm:$0xf]
        %v823 = vld [vmem:[#allocation7 + $0x28] sm:$0xf]
        %v824 = vld [vmem:[#allocation7 + $0x2c] sm:$0xf]
        %v825 = vld [vmem:[#allocation7 + $0x30] sm:$0xf]
        %v826 = vld [vmem:[#allocation7 + $0x34] sm:$0xf]
        %v827 = vld [vmem:[#allocation7 + $0x38] sm:$0xf]
        %v828 = vld [vmem:[#allocation7 + $0x3c] sm:$0xf]
        %v829 = vlaneseq
        %v830 = vshrl.u32 %v829, 7
        %v831 = vsub.s32 0, %v830
        %v832 = vrot.slane %v810, %v831
        %v849 = vunpack.c.l.b16 %v813
        %v850 = vunpack.c.l.b16 %v814
        %v851 = vunpack.c.l.b16 %v815
        %v852 = vunpack.c.l.b16 %v816
        %v853 = vunpack.c.l.b16 %v817
        %v854 = vunpack.c.l.b16 %v818
        %v855 = vunpack.c.l.b16 %v819
        %v856 = vunpack.c.l.b16 %v820
        %v857 = vunpack.c.l.b16 %v821
        %v858 = vunpack.c.l.b16 %v822
        %v859 = vunpack.c.l.b16 %v823
        %v860 = vunpack.c.l.b16 %v824
        %v861 = vunpack.c.l.b16 %v825
        %v862 = vunpack.c.l.b16 %v826
        %v863 = vunpack.c.l.b16 %v827
        %v864 = vunpack.c.l.b16 %v828
        %v865 = vpack.c.b16 %v850, %v849
        %v866 = vpack.c.b16 %v852, %v851
        %v867 = vpack.c.b16 %v854, %v853
        %v868 = vpack.c.b16 %v856, %v855
        %v869 = vpack.c.b16 %v858, %v857
        %v870 = vpack.c.b16 %v860, %v859
        %v871 = vpack.c.b16 %v862, %v861
        %v872 = vpack.c.b16 %v864, %v863
        %881 = vmatprep.subr.bf16.mxu0 0
        %882 = vmatpush1.bf16.msra.mxu0 %v865
        %883 = vmatprep.subr.bf16.mxu0 0
        %884 = vmatpush1.bf16.msra.mxu0 %v866
        %885 = vmatprep.subr.bf16.mxu0 0
        %886 = vmatpush1.bf16.msra.mxu0 %v867
        %887 = vmatprep.subr.bf16.mxu0 0
        %888 = vmatpush1.bf16.msra.mxu0 %v868
        %889 = vmatprep.subr.bf16.mxu0 0
        %890 = vmatpush1.bf16.msra.mxu0 %v869
        %891 = vmatprep.subr.bf16.mxu0 0
        %892 = vmatpush1.bf16.msra.mxu0 %v870
        %893 = vmatprep.subr.bf16.mxu0 0
        %894 = vmatpush1.bf16.msra.mxu0 %v871
        %895 = vmatprep.subr.bf16.mxu0 0
        %896 = vmatpush1.bf16.msra.mxu0 %v872
        %897 = vmatprep.subr.bf16.mxu0 0
        %898 = vmatpush1.bf16.msra.mxu0 0
        %899 = vmatprep.subr.bf16.mxu0 0
        %900 = vmatpush1.bf16.msra.mxu0 0
        %901 = vmatprep.subr.bf16.mxu0 0
        %902 = vmatpush1.bf16.msra.mxu0 0
        %903 = vmatprep.subr.bf16.mxu0 0
        %904 = vmatpush1.bf16.msra.mxu0 0
        %905 = vmatprep.subr.bf16.mxu0 0
        %906 = vmatpush1.bf16.msra.mxu0 0
        %907 = vmatprep.subr.bf16.mxu0 0
        %908 = vmatpush1.bf16.msra.mxu0 0
        %909 = vmatprep.subr.bf16.mxu0 0
        %910 = vmatpush1.bf16.msra.mxu0 0
        %911 = vmatprep.subr.bf16.mxu0 0
        %912 = vmatpush1.bf16.msra.mxu0 0
        %913 = vmatprep.mubr.bf16.mxu0 0
        %914 = vmatmul.mubr.bf16.gmra.mrb[0].mxu0 %v802
        %v915 = vpop.f32.mrb[0].mxu0
        %v916 = vadd.f32 %v832, %v915
        %v917 = vpop.f32.mrb[0].mxu0
        %v918 = vpop.f32.mrb[0].mxu0
        %v919 = vadd.f32 %v832, %v918
        %v920 = vpop.f32.mrb[0].mxu0
        %921 = vmatprep.mubr.bf16.mxu0 0
        %922 = vmatmul.mubr.bf16.gmra.mrb[0].mxu0 %v803
        %v923 = vpop.f32.mrb[0].mxu0
        %v924 = vadd.f32 %v832, %v923
        %v925 = vpop.f32.mrb[0].mxu0
        %v926 = vpop.f32.mrb[0].mxu0
        %v927 = vadd.f32 %v832, %v926
        %v928 = vpop.f32.mrb[0].mxu0
        %929 = vmatprep.mubr.bf16.mxu0 0
        %930 = vmatmul.mubr.bf16.gmra.mrb[0].mxu0 %v804
        %v931 = vpop.f32.mrb[0].mxu0
        %v932 = vadd.f32 %v832, %v931
        %v933 = vpop.f32.mrb[0].mxu0
        %v934 = vpop.f32.mrb[0].mxu0
        %v935 = vadd.f32 %v832, %v934
        %v936 = vpop.f32.mrb[0].mxu0
        %937 = vmatprep.mubr.bf16.mxu0 0
        %938 = vmatmul.mubr.bf16.gmra.mrb[0].mxu0 %v805
        %v939 = vpop.f32.mrb[0].mxu0
        %v940 = vadd.f32 %v832, %v939
        %v941 = vpop.f32.mrb[0].mxu0
        %v942 = vpop.f32.mrb[0].mxu0
        %v943 = vadd.f32 %v832, %v942
        %v944 = vpop.f32.mrb[0].mxu0
        %945 = vmatprep.mubr.bf16.mxu0 0
        %946 = vmatmul.mubr.bf16.gmra.mrb[0].mxu0 %v806
        %v947 = vpop.f32.mrb[0].mxu0
        %v948 = vadd.f32 %v832, %v947
        %v949 = vpop.f32.mrb[0].mxu0
        %v950 = vpop.f32.mrb[0].mxu0
        %v951 = vadd.f32 %v832, %v950
        %v952 = vpop.f32.mrb[0].mxu0
        %953 = vmatprep.mubr.bf16.mxu0 0
        %954 = vmatmul.mubr.bf16.gmra.mrb[0].mxu0 %v807
        %v955 = vpop.f32.mrb[0].mxu0
        %v956 = vadd.f32 %v832, %v955
        %v957 = vpop.f32.mrb[0].mxu0
        %v958 = vpop.f32.mrb[0].mxu0
        %v959 = vadd.f32 %v832, %v958
        %v960 = vpop.f32.mrb[0].mxu0
        %961 = vmatprep.mubr.bf16.mxu0 0
        %962 = vmatmul.mubr.bf16.gmra.mrb[0].mxu0 %v808
        %v963 = vpop.f32.mrb[0].mxu0
        %v964 = vadd.f32 %v832, %v963
        %v965 = vpop.f32.mrb[0].mxu0
        %v966 = vpop.f32.mrb[0].mxu0
        %v967 = vadd.f32 %v832, %v966
        %v968 = vpop.f32.mrb[0].mxu0
        %969 = vmatprep.mubr.bf16.mxu0 0
        %970 = vmatmul.mubr.bf16.gmra.mrb[0].mxu0 %v809
        %v971 = vpop.f32.mrb[0].mxu0
        %v972 = vadd.f32 %v832, %v971
        %v973 = vpop.f32.mrb[0].mxu0
        %v974 = vpop.f32.mrb[0].mxu0
        %v975 = vadd.f32 %v832, %v974
        %v976 = vpop.f32.mrb[0].mxu0
        %977 = vdwg.mxu0
        %978 = vadd.xlane.f32.xlu0 %v916
        %v979 = vpop.xlane.xlu0 %978
        %980 = vadd.xlane.f32.xlu0 %v919
        %v981 = vpop.xlane.xlu0 %980
        %982 = vadd.xlane.f32.xlu0 %v924
        %v983 = vpop.xlane.xlu0 %982
        %984 = vadd.xlane.f32.xlu0 %v927
        %v985 = vpop.xlane.xlu0 %984
        %986 = vadd.xlane.f32.xlu0 %v932
        %v987 = vpop.xlane.xlu0 %986
        %988 = vadd.xlane.f32.xlu0 %v935
        %v989 = vpop.xlane.xlu0 %988
        %990 = vadd.xlane.f32.xlu0 %v940
        %v991 = vpop.xlane.xlu0 %990
        %992 = vadd.xlane.f32.xlu0 %v943
        %v993 = vpop.xlane.xlu0 %992
        %994 = vadd.xlane.f32.xlu0 %v948
        %v995 = vpop.xlane.xlu0 %994
        %996 = vadd.xlane.f32.xlu0 %v951
        %v997 = vpop.xlane.xlu0 %996
        %998 = vadd.xlane.f32.xlu0 %v956
        %v999 = vpop.xlane.xlu0 %998
        %1000 = vadd.xlane.f32.xlu0 %v959
        %v1001 = vpop.xlane.xlu0 %1000
        %1002 = vadd.xlane.f32.xlu0 %v964
        %v1003 = vpop.xlane.xlu0 %1002
        %1004 = vadd.xlane.f32.xlu0 %v967
        %v1005 = vpop.xlane.xlu0 %1004
        %1006 = vadd.xlane.f32.xlu0 %v972
        %v1007 = vpop.xlane.xlu0 %1006
        %1008 = vadd.xlane.f32.xlu0 %v975
        %v1009 = vpop.xlane.xlu0 %1008
        %v1010 = vmul.f32 %v979, 0.015625
        %v1011 = vmul.f32 %v981, 0.015625
        %v1012 = vmul.f32 %v983, 0.015625
        %v1013 = vmul.f32 %v985, 0.015625
        %v1014 = vmul.f32 %v987, 0.015625
        %v1015 = vmul.f32 %v989, 0.015625
        %v1016 = vmul.f32 %v991, 0.015625
        %v1017 = vmul.f32 %v993, 0.015625
        %v1018 = vmul.f32 %v995, 0.015625
        %v1019 = vmul.f32 %v997, 0.015625
        %v1020 = vmul.f32 %v999, 0.015625
        %v1021 = vmul.f32 %v1001, 0.015625
        %v1022 = vmul.f32 %v1003, 0.015625
        %v1023 = vmul.f32 %v1005, 0.015625
        %v1024 = vmul.f32 %v1007, 0.015625
        %v1025 = vmul.f32 %v1009, 0.015625
        %v1026 = vsub.f32 %v916, %v1010
        %v1027 = vsub.f32 %v919, %v1011
        %v1028 = vsub.f32 %v924, %v1012
        %v1029 = vsub.f32 %v927, %v1013
        %v1030 = vsub.f32 %v932, %v1014
        %v1031 = vsub.f32 %v935, %v1015
        %v1032 = vsub.f32 %v940, %v1016
        %v1033 = vsub.f32 %v943, %v1017
        %v1034 = vsub.f32 %v948, %v1018
        %v1035 = vsub.f32 %v951, %v1019
        %v1036 = vsub.f32 %v956, %v1020
        %v1037 = vsub.f32 %v959, %v1021
        %v1038 = vsub.f32 %v964, %v1022
        %v1039 = vsub.f32 %v967, %v1023
        %v1040 = vsub.f32 %v972, %v1024
        %v1041 = vsub.f32 %v975, %v1025
        %v1042 = vmul.f32 %v1026, %v321
        %v1043 = vmul.f32 %v1027, %v321
        %v1044 = vmul.f32 %v1028, %v321
        %v1045 = vmul.f32 %v1029, %v321
        %v1046 = vmul.f32 %v1030, %v321
        %v1047 = vmul.f32 %v1031, %v321
        %v1048 = vmul.f32 %v1032, %v321
        %v1049 = vmul.f32 %v1033, %v321
        %v1050 = vmul.f32 %v1034, %v321
        %v1051 = vmul.f32 %v1035, %v321
        %v1052 = vmul.f32 %v1036, %v321
        %v1053 = vmul.f32 %v1037, %v321
        %v1054 = vmul.f32 %v1038, %v321
        %v1055 = vmul.f32 %v1039, %v321
        %v1056 = vmul.f32 %v1040, %v321
        %v1057 = vmul.f32 %v1041, %v321
        %v1058 = vmul.f32 %v1042, %v1026
        %v1059 = vmul.f32 %v1043, %v1027
        %v1060 = vmul.f32 %v1044, %v1028
        %v1061 = vmul.f32 %v1045, %v1029
        %v1062 = vmul.f32 %v1046, %v1030
        %v1063 = vmul.f32 %v1047, %v1031
        %v1064 = vmul.f32 %v1048, %v1032
        %v1065 = vmul.f32 %v1049, %v1033
        %v1066 = vmul.f32 %v1050, %v1034
        %v1067 = vmul.f32 %v1051, %v1035
        %v1068 = vmul.f32 %v1052, %v1036
        %v1069 = vmul.f32 %v1053, %v1037
        %v1070 = vmul.f32 %v1054, %v1038
        %v1071 = vmul.f32 %v1055, %v1039
        %v1072 = vmul.f32 %v1056, %v1040
        %v1073 = vmul.f32 %v1057, %v1041
        %1074 = vadd.xlane.f32.xlu0 %v1058
        %v1075 = vpop.xlane.xlu0 %1074
        %1076 = vadd.xlane.f32.xlu0 %v1059
        %v1077 = vpop.xlane.xlu0 %1076
        %1078 = vadd.xlane.f32.xlu0 %v1060
        %v1079 = vpop.xlane.xlu0 %1078
        %1080 = vadd.xlane.f32.xlu0 %v1061
        %v1081 = vpop.xlane.xlu0 %1080
        %1082 = vadd.xlane.f32.xlu0 %v1062
        %v1083 = vpop.xlane.xlu0 %1082
        %1084 = vadd.xlane.f32.xlu0 %v1063
        %v1085 = vpop.xlane.xlu0 %1084
        %1086 = vadd.xlane.f32.xlu0 %v1064
        %v1087 = vpop.xlane.xlu0 %1086
        %1088 = vadd.xlane.f32.xlu0 %v1065
        %v1089 = vpop.xlane.xlu0 %1088
        %1090 = vadd.xlane.f32.xlu0 %v1066
        %v1091 = vpop.xlane.xlu0 %1090
        %1092 = vadd.xlane.f32.xlu0 %v1067
        %v1093 = vpop.xlane.xlu0 %1092
        %1094 = vadd.xlane.f32.xlu0 %v1068
        %v1095 = vpop.xlane.xlu0 %1094
        %1096 = vadd.xlane.f32.xlu0 %v1069
        %v1097 = vpop.xlane.xlu0 %1096
        %1098 = vadd.xlane.f32.xlu0 %v1070
        %v1099 = vpop.xlane.xlu0 %1098
        %1100 = vadd.xlane.f32.xlu0 %v1071
        %v1101 = vpop.xlane.xlu0 %1100
        %1102 = vadd.xlane.f32.xlu0 %v1072
        %v1103 = vpop.xlane.xlu0 %1102
        %1104 = vadd.xlane.f32.xlu0 %v1073
        %v1105 = vpop.xlane.xlu0 %1104
        %v1106 = vmul.f32 %v1075, 0.015625
        %v1107 = vmul.f32 %v1077, 0.015625
        %v1108 = vmul.f32 %v1079, 0.015625
        %v1109 = vmul.f32 %v1081, 0.015625
        %v1110 = vmul.f32 %v1083, 0.015625
        %v1111 = vmul.f32 %v1085, 0.015625
        %v1112 = vmul.f32 %v1087, 0.015625
        %v1113 = vmul.f32 %v1089, 0.015625
        %v1114 = vmul.f32 %v1091, 0.015625
        %v1115 = vmul.f32 %v1093, 0.015625
        %v1116 = vmul.f32 %v1095, 0.015625
        %v1117 = vmul.f32 %v1097, 0.015625
        %v1118 = vmul.f32 %v1099, 0.015625
        %v1119 = vmul.f32 %v1101, 0.015625
        %v1120 = vmul.f32 %v1103, 0.015625
        %v1121 = vmul.f32 %v1105, 0.015625
        %v1122 = vadd.f32 %v1106, 1e-05
        %v1123 = vadd.f32 %v1107, 1e-05
        %v1124 = vadd.f32 %v1108, 1e-05
        %v1125 = vadd.f32 %v1109, 1e-05
        %v1126 = vadd.f32 %v1110, 1e-05
        %v1127 = vadd.f32 %v1111, 1e-05
        %v1128 = vadd.f32 %v1112, 1e-05
        %v1129 = vadd.f32 %v1113, 1e-05
        %v1130 = vadd.f32 %v1114, 1e-05
        %v1131 = vadd.f32 %v1115, 1e-05
        %v1132 = vadd.f32 %v1116, 1e-05
        %v1133 = vadd.f32 %v1117, 1e-05
        %v1134 = vadd.f32 %v1118, 1e-05
        %v1135 = vadd.f32 %v1119, 1e-05
        %v1136 = vadd.f32 %v1120, 1e-05
        %v1137 = vadd.f32 %v1121, 1e-05
        %v1138 = vrsqrt.pop %v1122
        %v1139 = vrsqrt.pop %v1123
        %v1140 = vrsqrt.pop %v1124
        %v1141 = vrsqrt.pop %v1125
        %v1142 = vrsqrt.pop %v1126
        %v1143 = vrsqrt.pop %v1127
        %v1144 = vrsqrt.pop %v1128
        %v1145 = vrsqrt.pop %v1129
        %v1146 = vrsqrt.pop %v1130
        %v1147 = vrsqrt.pop %v1131
        %v1148 = vrsqrt.pop %v1132
        %v1149 = vrsqrt.pop %v1133
        %v1150 = vrsqrt.pop %v1134
        %v1151 = vrsqrt.pop %v1135
        %v1152 = vrsqrt.pop %v1136
        %v1153 = vrsqrt.pop %v1137
        %v1154 = vmul.f32 %v1026, %v1138
        %v1155 = vmul.f32 %v1027, %v1139
        %v1156 = vmul.f32 %v1028, %v1140
        %v1157 = vmul.f32 %v1029, %v1141
        %v1158 = vmul.f32 %v1030, %v1142
        %v1159 = vmul.f32 %v1031, %v1143
        %v1160 = vmul.f32 %v1032, %v1144
        %v1161 = vmul.f32 %v1033, %v1145
        %v1162 = vmul.f32 %v1034, %v1146
        %v1163 = vmul.f32 %v1035, %v1147
        %v1164 = vmul.f32 %v1036, %v1148
        %v1165 = vmul.f32 %v1037, %v1149
        %v1166 = vmul.f32 %v1038, %v1150
        %v1167 = vmul.f32 %v1039, %v1151
        %v1168 = vmul.f32 %v1040, %v1152
        %v1169 = vmul.f32 %v1041, %v1153
        %v1170 = vlaneseq
        %v1171 = vshrl.u32 %v1170, 7
        %v1172 = vsub.s32 0, %v1171
        %v1173 = vrot.slane %v811, %v1172
        %v1174 = vmul.f32 %v1154, %v1173
        %v1175 = vmul.f32 %v1155, %v1173
        %v1176 = vmul.f32 %v1156, %v1173
        %v1177 = vmul.f32 %v1157, %v1173
        %v1178 = vmul.f32 %v1158, %v1173
        %v1179 = vmul.f32 %v1159, %v1173
        %v1180 = vmul.f32 %v1160, %v1173
        %v1181 = vmul.f32 %v1161, %v1173
        %v1182 = vmul.f32 %v1162, %v1173
        %v1183 = vmul.f32 %v1163, %v1173
        %v1184 = vmul.f32 %v1164, %v1173
        %v1185 = vmul.f32 %v1165, %v1173
        %v1186 = vmul.f32 %v1166, %v1173
        %v1187 = vmul.f32 %v1167, %v1173
        %v1188 = vmul.f32 %v1168, %v1173
        %v1189 = vmul.f32 %v1169, %v1173
        %v1190 = vlaneseq
        %v1191 = vshrl.u32 %v1190, 7
        %v1192 = vsub.s32 0, %v1191
        %v1193 = vrot.slane %v812, %v1192
        %v1194 = vadd.f32 %v1174, %v1193
        %v1195 = vadd.f32 %v1175, %v1193
        %v1196 = vadd.f32 %v1176, %v1193
        %v1197 = vadd.f32 %v1177, %v1193
        %v1198 = vadd.f32 %v1178, %v1193
        %v1199 = vadd.f32 %v1179, %v1193
        %v1200 = vadd.f32 %v1180, %v1193
        %v1201 = vadd.f32 %v1181, %v1193
        %v1202 = vadd.f32 %v1182, %v1193
        %v1203 = vadd.f32 %v1183, %v1193
        %v1204 = vadd.f32 %v1184, %v1193
        %v1205 = vadd.f32 %v1185, %v1193
        %v1206 = vadd.f32 %v1186, %v1193
        %v1207 = vadd.f32 %v1187, %v1193
        %v1208 = vadd.f32 %v1188, %v1193
        %v1209 = vadd.f32 %v1189, %v1193
        %v1210 = vmax.f32 %v1194, 0.0
        %v1211 = vmax.f32 %v1195, 0.0
        %v1212 = vmax.f32 %v1196, 0.0
        %v1213 = vmax.f32 %v1197, 0.0
        %v1214 = vmax.f32 %v1198, 0.0
        %v1215 = vmax.f32 %v1199, 0.0
        %v1216 = vmax.f32 %v1200, 0.0
        %v1217 = vmax.f32 %v1201, 0.0
        %v1218 = vmax.f32 %v1202, 0.0
        %v1219 = vmax.f32 %v1203, 0.0
        %v1220 = vmax.f32 %v1204, 0.0
        %v1221 = vmax.f32 %v1205, 0.0
        %v1222 = vmax.f32 %v1206, 0.0
        %v1223 = vmax.f32 %v1207, 0.0
        %v1224 = vmax.f32 %v1208, 0.0
        %v1225 = vmax.f32 %v1209, 0.0
        %v1226 = vpack.c.bf16 %v1211, %v1210
        %v1227 = vpack.c.bf16 %v1213, %v1212
        %v1228 = vpack.c.bf16 %v1215, %v1214
        %v1229 = vpack.c.bf16 %v1217, %v1216
        %v1230 = vpack.c.bf16 %v1219, %v1218
        %v1231 = vpack.c.bf16 %v1221, %v1220
        %v1232 = vpack.c.bf16 %v1223, %v1222
        %v1233 = vpack.c.bf16 %v1225, %v1224
        %v1234 = vld [vmem:[#allocation8] sm:$0xf]
        %v1235 = vld [vmem:[#allocation8 + $0x4] sm:$0xf]
        %v1236 = vld [vmem:[#allocation8 + $0x8] sm:$0xf]
        %v1237 = vld [vmem:[#allocation8 + $0xc] sm:$0xf]
        %v1238 = vld [vmem:[#allocation8 + $0x10] sm:$0xf]
        %v1239 = vld [vmem:[#allocation8 + $0x14] sm:$0xf]
        %v1240 = vld [vmem:[#allocation8 + $0x18] sm:$0xf]
        %v1241 = vld [vmem:[#allocation8 + $0x1c] sm:$0xf]
        %v1242 = vld [vmem:[#allocation8 + $0x20] sm:$0xf]
        %v1243 = vld [vmem:[#allocation8 + $0x24] sm:$0xf]
        %v1244 = vld [vmem:[#allocation8 + $0x28] sm:$0xf]
        %v1245 = vld [vmem:[#allocation8 + $0x2c] sm:$0xf]
        %v1246 = vld [vmem:[#allocation8 + $0x30] sm:$0xf]
        %v1247 = vld [vmem:[#allocation8 + $0x34] sm:$0xf]
        %v1248 = vld [vmem:[#allocation8 + $0x38] sm:$0xf]
        %v1249 = vld [vmem:[#allocation8 + $0x3c] sm:$0xf]
        %v1250 = vld [vmem:[%s5] sm:$0x1]
        %v1252 = vlaneseq
        %v1253 = vshrl.u32 %v1252, 7
        %v1254 = vsub.s32 0, %v1253
        %v1255 = vrot.slane %v1250, %v1254
        %v1273 = vunpack.c.l.b16 %v1234
        %v1274 = vunpack.c.l.b16 %v1235
        %v1275 = vunpack.c.l.b16 %v1236
        %v1276 = vunpack.c.l.b16 %v1237
        %v1277 = vunpack.c.l.b16 %v1238
        %v1278 = vunpack.c.l.b16 %v1239
        %v1279 = vunpack.c.l.b16 %v1240
        %v1280 = vunpack.c.l.b16 %v1241
        %v1281 = vunpack.c.l.b16 %v1242
        %v1282 = vunpack.c.l.b16 %v1243
        %v1283 = vunpack.c.l.b16 %v1244
        %v1284 = vunpack.c.l.b16 %v1245
        %v1285 = vunpack.c.l.b16 %v1246
        %v1286 = vunpack.c.l.b16 %v1247
        %v1287 = vunpack.c.l.b16 %v1248
        %v1288 = vunpack.c.l.b16 %v1249
        %v1289 = vpack.c.b16 %v1274, %v1273
        %v1290 = vpack.c.b16 %v1276, %v1275
        %v1291 = vpack.c.b16 %v1278, %v1277
        %v1292 = vpack.c.b16 %v1280, %v1279
        %v1293 = vpack.c.b16 %v1282, %v1281
        %v1294 = vpack.c.b16 %v1284, %v1283
        %v1295 = vpack.c.b16 %v1286, %v1285
        %v1296 = vpack.c.b16 %v1288, %v1287
        %1305 = vmatprep.subr.bf16.mxu0 0
        %1306 = vmatpush1.bf16.msra.mxu0 %v1289
        %1307 = vmatprep.subr.bf16.mxu0 0
        %1308 = vmatpush1.bf16.msra.mxu0 %v1290
        %1309 = vmatprep.subr.bf16.mxu0 0
        %1310 = vmatpush1.bf16.msra.mxu0 %v1291
        %1311 = vmatprep.subr.bf16.mxu0 0
        %1312 = vmatpush1.bf16.msra.mxu0 %v1292
        %1313 = vmatprep.subr.bf16.mxu0 0
        %1314 = vmatpush1.bf16.msra.mxu0 %v1293
        %1315 = vmatprep.subr.bf16.mxu0 0
        %1316 = vmatpush1.bf16.msra.mxu0 %v1294
        %1317 = vmatprep.subr.bf16.mxu0 0
        %1318 = vmatpush1.bf16.msra.mxu0 %v1295
        %1319 = vmatprep.subr.bf16.mxu0 0
        %1320 = vmatpush1.bf16.msra.mxu0 %v1296
        %1321 = vmatprep.subr.bf16.mxu0 0
        %1322 = vmatpush1.bf16.msra.mxu0 0
        %1323 = vmatprep.subr.bf16.mxu0 0
        %1324 = vmatpush1.bf16.msra.mxu0 0
        %1325 = vmatprep.subr.bf16.mxu0 0
        %1326 = vmatpush1.bf16.msra.mxu0 0
        %1327 = vmatprep.subr.bf16.mxu0 0
        %1328 = vmatpush1.bf16.msra.mxu0 0
        %1329 = vmatprep.subr.bf16.mxu0 0
        %1330 = vmatpush1.bf16.msra.mxu0 0
        %1331 = vmatprep.subr.bf16.mxu0 0
        %1332 = vmatpush1.bf16.msra.mxu0 0
        %1333 = vmatprep.subr.bf16.mxu0 0
        %1334 = vmatpush1.bf16.msra.mxu0 0
        %1335 = vmatprep.subr.bf16.mxu0 0
        %1336 = vmatpush1.bf16.msra.mxu0 0
        %1337 = vmatprep.mubr.bf16.mxu0 0
        %1338 = vmatmul.mubr.bf16.gmra.mrb[0].mxu0 %v1226
        %v1339 = vpop.f32.mrb[0].mxu0
        %v1340 = vadd.f32 %v1255, %v1339
        %v1341 = vpop.f32.mrb[0].mxu0
        %v1342 = vpop.f32.mrb[0].mxu0
        %v1343 = vadd.f32 %v1255, %v1342
        %v1344 = vpop.f32.mrb[0].mxu0
        %1345 = vmatprep.mubr.bf16.mxu0 0
        %1346 = vmatmul.mubr.bf16.gmra.mrb[0].mxu0 %v1227
        %v1347 = vpop.f32.mrb[0].mxu0
        %v1348 = vadd.f32 %v1255, %v1347
        %v1349 = vpop.f32.mrb[0].mxu0
        %v1350 = vpop.f32.mrb[0].mxu0
        %v1351 = vadd.f32 %v1255, %v1350
        %v1352 = vpop.f32.mrb[0].mxu0
        %1353 = vmatprep.mubr.bf16.mxu0 0
        %1354 = vmatmul.mubr.bf16.gmra.mrb[0].mxu0 %v1228
        %v1355 = vpop.f32.mrb[0].mxu0
        %v1356 = vadd.f32 %v1255, %v1355
        %v1357 = vpop.f32.mrb[0].mxu0
        %v1358 = vpop.f32.mrb[0].mxu0
        %v1359 = vadd.f32 %v1255, %v1358
        %v1360 = vpop.f32.mrb[0].mxu0
        %1361 = vmatprep.mubr.bf16.mxu0 0
        %1362 = vmatmul.mubr.bf16.gmra.mrb[0].mxu0 %v1229
        %v1363 = vpop.f32.mrb[0].mxu0
        %v1364 = vadd.f32 %v1255, %v1363
        %v1365 = vpop.f32.mrb[0].mxu0
        %v1366 = vpop.f32.mrb[0].mxu0
        %v1367 = vadd.f32 %v1255, %v1366
        %v1368 = vpop.f32.mrb[0].mxu0
        %1369 = vmatprep.mubr.bf16.mxu0 0
        %1370 = vmatmul.mubr.bf16.gmra.mrb[0].mxu0 %v1230
        %v1371 = vpop.f32.mrb[0].mxu0
        %v1372 = vadd.f32 %v1255, %v1371
        %v1373 = vpop.f32.mrb[0].mxu0
        %v1374 = vpop.f32.mrb[0].mxu0
        %v1375 = vadd.f32 %v1255, %v1374
        %v1376 = vpop.f32.mrb[0].mxu0
        %1377 = vmatprep.mubr.bf16.mxu0 0
        %1378 = vmatmul.mubr.bf16.gmra.mrb[0].mxu0 %v1231
        %v1379 = vpop.f32.mrb[0].mxu0
        %v1380 = vadd.f32 %v1255, %v1379
        %v1381 = vpop.f32.mrb[0].mxu0
        %v1382 = vpop.f32.mrb[0].mxu0
        %v1383 = vadd.f32 %v1255, %v1382
        %v1384 = vpop.f32.mrb[0].mxu0
        %1385 = vmatprep.mubr.bf16.mxu0 0
        %1386 = vmatmul.mubr.bf16.gmra.mrb[0].mxu0 %v1232
        %v1387 = vpop.f32.mrb[0].mxu0
        %v1388 = vadd.f32 %v1255, %v1387
        %v1389 = vpop.f32.mrb[0].mxu0
        %v1390 = vpop.f32.mrb[0].mxu0
        %v1391 = vadd.f32 %v1255, %v1390
        %v1392 = vpop.f32.mrb[0].mxu0
        %1393 = vmatprep.mubr.bf16.mxu0 0
        %1394 = vmatmul.mubr.bf16.gmra.mrb[0].mxu0 %v1233
        %v1395 = vpop.f32.mrb[0].mxu0
        %v1396 = vadd.f32 %v1255, %v1395
        %v1397 = vpop.f32.mrb[0].mxu0
        %v1398 = vpop.f32.mrb[0].mxu0
        %v1399 = vadd.f32 %v1255, %v1398
        %v1400 = vpop.f32.mrb[0].mxu0
        %1401 = vdwg.mxu0
        %1402 = vst [vmem:[%s313] sm:$0xff] %v1340
        %1403 = vst [vmem:[%s313 + $0x8] sm:$0xff] %v1343
        %1404 = vst [vmem:[%s313 + $0x10] sm:$0xff] %v1348
        %1405 = vst [vmem:[%s313 + $0x18] sm:$0xff] %v1351
        %1406 = vst [vmem:[%s313 + $0x20] sm:$0xff] %v1356
        %1407 = vst [vmem:[%s313 + $0x28] sm:$0xff] %v1359
        %1408 = vst [vmem:[%s313 + $0x30] sm:$0xff] %v1364
        %1409 = vst [vmem:[%s313 + $0x38] sm:$0xff] %v1367
        %1410 = vst [vmem:[%s313 + $0x40] sm:$0xff] %v1372
        %1411 = vst [vmem:[%s313 + $0x48] sm:$0xff] %v1375
        %1412 = vst [vmem:[%s313 + $0x50] sm:$0xff] %v1380
        %1413 = vst [vmem:[%s313 + $0x58] sm:$0xff] %v1383
        %1414 = vst [vmem:[%s313 + $0x60] sm:$0xff] %v1388
        %1415 = vst [vmem:[%s313 + $0x68] sm:$0xff] %v1391
        %1416 = vst [vmem:[%s313 + $0x70] sm:$0xff] %v1396
        %1417 = vst [vmem:[%s313 + $0x78] sm:$0xff] %v1399
        %s1418 = sand.u32 %s164, 1
        %s1419 = scalar_lea.sflag [#allocation4], %s1418
        %s1420 = sand.u32 %s164, 1
        %s1421 = smul.addr %s1420, 128
        %s1422 = scalar_lea.vmem [#allocation10], %s1421
        // Predicated region
        $region61: #{tpu_custom_call.1} parent=43 // pred_check
          %p1423 = pneg %p174
        $region62: #{tpu_custom_call.1} parent=43 // pred_check_branch
          %1425 = sbr.rel (%p1423) target = $region64
        $region63: #{tpu_custom_call.1} parent=43 // pred_region
          %s1426 = smul.u32 16, %s25
          %s1428 = ssub.s32 2048, 2048
          %1429 = vsyncadd %s1419, %s1428
          %s1430 = smul.addr %s1426, 128
          %s1431 = scalar_lea.hbm %s6, %s1430
          %s1432 = sshll.u32 %s1422, 4
          %s1433 = int_to_ptr.vmem [resolvable:$true] %s1432
          %1438 = dma.vmem_to_hbm [thread:$0]  %s1433, 2048, %s1431, %s1419, 128, 128, 8
        $region64: #{tpu_custom_call.1} parent=43 // pred_fallthru
          _
      $region44: #{tpu_custom_call.1} parent=5 // pred_fallthru
        _
      %p1439 = scmp.le.s32.totalorder 2, %s20
      // Predicated region
      $region65: #{tpu_custom_call.1} parent=5 // pred_check
        %p1440 = pneg %p1439
      $region66: #{tpu_custom_call.1} parent=5 // pred_check_branch
        %1442 = sbr.rel (%p1440) target = $region68
      $region67: #{tpu_custom_call.1} parent=5 // pred_region
        %s1443 = ssub.s32 %s20, 2
        // Predicated region
        $region69: #{tpu_custom_call.1} parent=67 // pred_check
          %p1444 = pneg %p180
        $region70: #{tpu_custom_call.1} parent=67 // pred_check_branch
          %1446 = sbr.rel (%p1444) target = $region72
        $region71: #{tpu_custom_call.1} parent=67 // pred_region
          %s1447 = sand.u32 %s165, 1
          %s1448 = scalar_lea.sflag [#allocation4], %s1447
          %s1449 = sand.u32 %s165, 1
          %s1450 = smul.addr %s1449, 128
          %s1451 = scalar_lea.vmem [#allocation10], %s1450
          %1452 = dma.done %s1448, 2048
        $region72: #{tpu_custom_call.1} parent=67 // pred_fallthru
          _
      $region68: #{tpu_custom_call.1} parent=5 // pred_fallthru
        _
    $region6: #{tpu_custom_call.1} parent=1 // loop_footer
      %s24 = sadd.s32 1, %s20
    $region7: #{tpu_custom_call.1} parent=1 // loop_footer_branch
      %19 = sbr.rel target = $region3
    $region8: #{tpu_custom_call.1} parent=1 // loop_exit
      _
    %1453 = vsyncpa [#allocation3], 1
    %s1454 = scalar_lea.sflag [#allocation3], 1
    %1455 = vsyncpa %s1454, 1
    %1456 = vsyncpa [#allocation6], 1
    %1457 = vsyncpa [#allocation9], 1
    %1458 = vsyncpa [#allocation4], 1
    %s1459 = scalar_lea.sflag [#allocation4], 1
    %1460 = vsyncpa %s1459, 1

</llo_original>
